<compile_context>
chip_gen: v7x
topology: tpu7x:2x2x1
jax: 0.10.0
libtpu: 0.0.40
codegen_flags: <defaults>
</compile_context>

<pallas_src>
import functools

import jax
import jax.numpy as jnp
from jax.experimental import pallas as pl
from jax.experimental.pallas import tpu as pltpu

RATES = (3, 5, 7)          # dilated 3x3 branches (aspp2..aspp4); aspp1 is the 1x1 branch
R_HALO = max(RATES)        # spatial halo carried by every tile
BN_EPS = 1e-5


# ----------------------------------------------------------------------------
# Pallas kernel: branches 1-4 + BN + ReLU + fused 1x1 reduce for one halo tile.
# Branch 5 (global average pool) arrives as a precomputed per-batch bias row.
# ----------------------------------------------------------------------------
def _aspp_kernel(xt_ref, w1_ref, w33_ref, sc_ref, bi_ref, wr_ref, b5_ref,
                 o_ref, *, TH, W, Cin, Cout):
    R = R_HALO
    xp = xt_ref[0, 0]                                      # (TH+2R, W+2R, Cin) bf16

    def bn_relu(y, b):                                     # f32 in / f32 out
        return jnp.maximum(y * sc_ref[b] + bi_ref[b], 0.0)

    # --- branch 1: 1x1 conv on the un-padded centre pixels -------------------
    xc = xp[R:R + TH, R:R + W, :].reshape(TH * W, Cin)
    y1 = jnp.dot(xc, w1_ref[...], preferred_element_type=jnp.float32)
    ys = [bn_relu(y1, 0)]

    # --- branches 2-4: dilated 3x3 convs, one K = 9*Cin matmul per rate ------
    for b, rate in enumerate(RATES):
        taps = []
        for kh in range(3):
            for kw in range(3):
                h0 = R + (kh - 1) * rate
                w0 = R + (kw - 1) * rate
                taps.append(xp[h0:h0 + TH, w0:w0 + W, :].reshape(TH * W, Cin))
        tap_mat = jnp.concatenate(taps, axis=-1)           # (TH*W, 9*Cin) bf16
        yb = jnp.dot(tap_mat, w33_ref[b], preferred_element_type=jnp.float32)
        ys.append(bn_relu(yb, b + 1))

    # --- fused reduce: [y1..y4] @ wr[0:4]  (+ per-batch GAP bias = branch 5) --
    y_cat = jnp.concatenate(ys, axis=-1).astype(jnp.bfloat16)   # (TH*W, 4*Cout)
    acc = jnp.dot(y_cat, wr_ref[...], preferred_element_type=jnp.float32)
    acc = acc + b5_ref[0]                                  # (1, Cin) broadcast
    o_ref[0, 0] = acc.astype(o_ref.dtype)


# ----------------------------------------------------------------------------
# Wrapper: NCHW in / NCHW out; builds halo row-tiles and packed bf16 weights.
# ----------------------------------------------------------------------------
def _pick_tile_h(H, W, target_rows=2048):
    """Largest divisor of H with tile_h*W <= target_rows (prefer multiples of 8)."""
    divs = [d for d in range(1, H + 1) if H % d == 0]
    ok = [d for d in divs if d * W <= target_rows]
    if not ok:
        return 1
    mult8 = [d for d in ok if d % 8 == 0]
    return max(mult8) if mult8 else max(ok)


def aspp_forward(x_nchw, params, tile_h=None):
    """x_nchw: (N, Cin, H, W) float32 -> (N, Cin, H, W) float32."""
    w11, w33, sc, bi, wr = params
    N, Cin, H, W = x_nchw.shape
    Cout = w11.shape[-1]
    R = R_HALO

    if tile_h is None:
        tile_h = _pick_tile_h(H, W)
    assert H % tile_h == 0
    num_t = H // tile_h

    x = jnp.transpose(x_nchw, (0, 2, 3, 1)).astype(jnp.float32)        # NHWC

    # Branch 5 (global average pool -> 1x1 conv -> BN -> ReLU -> broadcast) is
    # hoisted here: with spatial tiling the full-image mean cannot be computed
    # in the kernel. Its contribution through the reduce conv is a per-batch row.
    xm = jnp.mean(x, axis=(1, 2))                                      # (N, Cin)
    y5 = jnp.maximum(xm @ w11[1] * sc[4] + bi[4], 0.0)                 # (N, Cout)
    bias5 = (y5 @ wr[4])[:, None, :].astype(jnp.float32)               # (N, 1, Cin)

    # Halo-padded row tiles: (N, num_t, tile_h + 2R, W + 2R, Cin), bf16.
    xp = jnp.pad(x, ((0, 0), (R, R), (R, R), (0, 0)))
    xt = jnp.stack(
        [xp[:, t * tile_h: t * tile_h + tile_h + 2 * R, :, :] for t in range(num_t)],
        axis=1).astype(jnp.bfloat16)

    # Weights repacked for the kernel (bf16 feeds the MXU; BN affine stays f32).
    w1b = w11[0].astype(jnp.bfloat16)                                  # (Cin, Cout)
    w33p = w33.reshape(len(RATES), 9 * Cin, Cout).astype(jnp.bfloat16) # (3, 9Cin, Cout)
    wr4 = wr[:4].reshape(4 * Cout, Cin).astype(jnp.bfloat16)           # (4Cout, Cin)
    sc4 = sc[:4].astype(jnp.float32)                                   # (4, 1, Cout)
    bi4 = bi[:4].astype(jnp.float32)

    THp, Wp = tile_h + 2 * R, W + 2 * R
    kernel = functools.partial(_aspp_kernel, TH=tile_h, W=W, Cin=Cin, Cout=Cout)

    out = pl.pallas_call(
        kernel,
        out_shape=jax.ShapeDtypeStruct((N, num_t, tile_h * W, Cin), jnp.float32),
        grid_spec=pltpu.PrefetchScalarGridSpec(
            num_scalar_prefetch=0,
            grid=(N, num_t),
            in_specs=[
                pl.BlockSpec((1, 1, THp, Wp, Cin), lambda n, t: (n, t, 0, 0, 0)),
                pl.BlockSpec((Cin, Cout), lambda n, t: (0, 0)),
                pl.BlockSpec((len(RATES), 9 * Cin, Cout), lambda n, t: (0, 0, 0)),
                pl.BlockSpec((4, 1, Cout), lambda n, t: (0, 0, 0)),
                pl.BlockSpec((4, 1, Cout), lambda n, t: (0, 0, 0)),
                pl.BlockSpec((4 * Cout, Cin), lambda n, t: (0, 0)),
                pl.BlockSpec((1, 1, Cin), lambda n, t: (n, 0, 0)),
            ],
            out_specs=pl.BlockSpec((1, 1, tile_h * W, Cin),
                                   lambda n, t: (n, t, 0, 0)),
        ),
        compiler_params=pltpu.CompilerParams(
            dimension_semantics=("parallel", "parallel"),
            vmem_limit_bytes=64 * 1024 * 1024),
    )(xt, w1b, w33p, sc4, bi4, wr4, bias5)

    out = out.reshape(N, H, W, Cin)
    return jnp.transpose(out, (0, 3, 1, 2))                            # back to NCHW


# ----------------------------------------------------------------------------
# Deterministic synthetic parameters (BN folded to per-channel scale/bias).
# ----------------------------------------------------------------------------
def init_params(key, inplane, outplane):
    ks = jax.random.split(key, 8)
    w1 = jax.random.normal(ks[0], (inplane, outplane), jnp.float32) * 0.1
    wg = jax.random.normal(ks[1], (inplane, outplane), jnp.float32) * 0.1
    w11 = jnp.stack([w1, wg])                             # (2, Cin, Cout): [aspp1, gap]
    w33 = jax.random.normal(ks[2], (len(RATES), 3, 3, inplane, outplane),
                            jnp.float32) * 0.05           # HWIO per rate
    gamma = jax.random.uniform(ks[3], (5, 1, outplane), jnp.float32, 0.5, 1.5)
    beta = jax.random.normal(ks[4], (5, 1, outplane), jnp.float32) * 0.1
    mean = jax.random.normal(ks[5], (5, 1, outplane), jnp.float32) * 0.1
    var = jax.random.uniform(ks[6], (5, 1, outplane), jnp.float32, 0.5, 1.5)
    sc = gamma / jnp.sqrt(var + BN_EPS)
    bi = beta - mean * sc
    wr = jax.random.normal(ks[7], (5, outplane, inplane), jnp.float32) * 0.05
    return w11, w33, sc, bi, wr


# ----------------------------------------------------------------------------
# Pure-JAX f32 reference (lax conv) for verification.
# ----------------------------------------------------------------------------
def _conv_nhwc(x, w, dilation, padding):
    return jax.lax.conv_general_dilated(
        x, w, (1, 1), [(padding, padding), (padding, padding)],
        rhs_dilation=(dilation, dilation),
        dimension_numbers=('NHWC', 'HWIO', 'NHWC'))


def aspp_reference(x_nchw, params):
    w11, w33, sc, bi, wr = params
    x = jnp.transpose(x_nchw, (0, 2, 3, 1))

    def bn_relu(y, b):
        return jnp.maximum(y * sc[b] + bi[b], 0.0)

    outs = [bn_relu(_conv_nhwc(x, w11[0][None, None], 1, 0), 0)]
    for b, rate in enumerate(RATES):
        outs.append(bn_relu(_conv_nhwc(x, w33[b], rate, rate), b + 1))
    xm = jnp.mean(x, axis=(1, 2), keepdims=True)
    y5 = bn_relu(_conv_nhwc(xm, w11[1][None, None], 1, 0), 4)
    outs.append(jnp.broadcast_to(y5, outs[0].shape[:3] + (y5.shape[-1],)))
    cat = jnp.concatenate(outs, axis=-1)                  # (N, H, W, 5*Cout)
    wr_full = wr.reshape(-1, wr.shape[-1])                # (5*Cout, Cin)
    out = _conv_nhwc(cat, wr_full[None, None], 1, 0)
    return jnp.transpose(out, (0, 3, 1, 2))


if __name__ == "__main__":
    key = jax.random.PRNGKey(0)
    kx, kp = jax.random.split(key)

    # reduce conv (inplane*5 -> inplane) requires outplane == inplane
    N, C, H, W = 2, 32, 16, 16
    x = jax.random.normal(kx, (N, C, H, W), jnp.float32)
    params = init_params(kp, C, C)

    out = jax.block_until_ready(aspp_forward(x, params))
    ref = jax.block_until_ready(aspp_reference(x, params))

    assert out.shape == (N, C, H, W), out.shape
    max_err = float(jnp.max(jnp.abs(out - ref)))
    # Kernel feeds the MXU in bf16 (f32 accumulation); reference is pure f32,
    # so the tolerance is loosened accordingly.
    assert jnp.allclose(out, ref, atol=5e-2, rtol=5e-2), max_err
    print("KERNEL_OK")
</pallas_src>

<mosaic_0001>
module attributes {stable_mosaic.version = 11 : i64} {
  func.func @_aspp_kernel(%arg0: i32, %arg1: i32, %arg2: memref<1x1x30x30x32xbf16, #tpu.memory_space<vmem>>, %arg3: memref<32x32xbf16, #tpu.memory_space<vmem>>, %arg4: memref<3x288x32xbf16, #tpu.memory_space<vmem>>, %arg5: memref<4x1x32xf32, #tpu.memory_space<vmem>>, %arg6: memref<4x1x32xf32, #tpu.memory_space<vmem>>, %arg7: memref<128x32xbf16, #tpu.memory_space<vmem>>, %arg8: memref<1x1x32xf32, #tpu.memory_space<vmem>>, %arg9: memref<1x1x256x32xf32, #tpu.memory_space<vmem>>) attributes {dimension_semantics = [#tpu.dimension_semantics<parallel>, #tpu.dimension_semantics<parallel>], iteration_bounds = array<i64: 2, 1>, scalar_prefetch = 0 : i64, scratch_operands = 0 : i64, tpu.core_type = #tpu.core_type<tc>, window_params = [{transform_indices = @transform_0, window_bounds = array<i64: 1, 1, 30, 30, 32>}, {pipeline_mode = #tpu.pipeline_mode<synchronous>, transform_indices = @transform_1, window_bounds = array<i64: 32, 32>}, {pipeline_mode = #tpu.pipeline_mode<synchronous>, transform_indices = @transform_2, window_bounds = array<i64: 3, 288, 32>}, {pipeline_mode = #tpu.pipeline_mode<synchronous>, transform_indices = @transform_3, window_bounds = array<i64: 4, 1, 32>}, {pipeline_mode = #tpu.pipeline_mode<synchronous>, transform_indices = @transform_4, window_bounds = array<i64: 4, 1, 32>}, {pipeline_mode = #tpu.pipeline_mode<synchronous>, transform_indices = @transform_5, window_bounds = array<i64: 128, 32>}, {transform_indices = @transform_6, window_bounds = array<i64: 1, 1, 32>}, {transform_indices = @transform_7, window_bounds = array<i64: 1, 1, 256, 32>}]} {
    %c0 = arith.constant 0 : index
    %c0_0 = arith.constant 0 : index
    %c0_1 = arith.constant 0 : index
    %c0_2 = arith.constant 0 : index
    %c0_3 = arith.constant 0 : index
    %0 = vector.load %arg2[%c0, %c0_0, %c0_1, %c0_2, %c0_3] : memref<1x1x30x30x32xbf16, #tpu.memory_space<vmem>>, vector<1x1x30x30x32xbf16>
    %1 = vector.shape_cast %0 : vector<1x1x30x30x32xbf16> to vector<30x30x32xbf16>
    %2 = vector.extract_strided_slice %1 {offsets = [7, 7, 0], sizes = [16, 16, 32], strides = [1, 1, 1]} : vector<30x30x32xbf16> to vector<16x16x32xbf16>
    %3 = vector.shape_cast %2 : vector<16x16x32xbf16> to vector<256x32xbf16>
    %c0_4 = arith.constant 0 : index
    %c0_5 = arith.constant 0 : index
    %4 = vector.load %arg3[%c0_4, %c0_5] : memref<32x32xbf16, #tpu.memory_space<vmem>>, vector<32x32xbf16>
    %cst = arith.constant dense<0.000000e+00> : vector<256x32xf32>
    %5 = tpu.matmul %3, %4, %cst {dimension_numbers = #tpu.dot_dimension_numbers<[1], [0], [0], [1], [0, 0, 1, 1], [], []>} : vector<256x32xbf16>, vector<32x32xbf16>, vector<256x32xf32> -> vector<256x32xf32>
    %c0_6 = arith.constant 0 : index
    %c0_7 = arith.constant 0 : index
    %c0_8 = arith.constant 0 : index
    %6 = vector.load %arg5[%c0_6, %c0_7, %c0_8] : memref<4x1x32xf32, #tpu.memory_space<vmem>>, vector<1x1x32xf32>
    %7 = vector.shape_cast %6 : vector<1x1x32xf32> to vector<1x32xf32>
    %8 = vector.broadcast %7 : vector<1x32xf32> to vector<256x32xf32>
    %9 = arith.mulf %5, %8 : vector<256x32xf32>
    %c0_9 = arith.constant 0 : index
    %c0_10 = arith.constant 0 : index
    %c0_11 = arith.constant 0 : index
    %10 = vector.load %arg6[%c0_9, %c0_10, %c0_11] : memref<4x1x32xf32, #tpu.memory_space<vmem>>, vector<1x1x32xf32>
    %11 = vector.shape_cast %10 : vector<1x1x32xf32> to vector<1x32xf32>
    %12 = vector.broadcast %11 : vector<1x32xf32> to vector<256x32xf32>
    %13 = arith.addf %9, %12 : vector<256x32xf32>
    %cst_12 = arith.constant 0.000000e+00 : f32
    %14 = vector.broadcast %cst_12 : f32 to vector<256x32xf32>
    %15 = arith.maximumf %13, %14 : vector<256x32xf32>
    %16 = vector.extract_strided_slice %1 {offsets = [4, 4, 0], sizes = [16, 16, 32], strides = [1, 1, 1]} : vector<30x30x32xbf16> to vector<16x16x32xbf16>
    %17 = vector.shape_cast %16 : vector<16x16x32xbf16> to vector<256x32xbf16>
    %18 = vector.extract_strided_slice %1 {offsets = [4, 7, 0], sizes = [16, 16, 32], strides = [1, 1, 1]} : vector<30x30x32xbf16> to vector<16x16x32xbf16>
    %19 = vector.shape_cast %18 : vector<16x16x32xbf16> to vector<256x32xbf16>
    %20 = vector.extract_strided_slice %1 {offsets = [4, 10, 0], sizes = [16, 16, 32], strides = [1, 1, 1]} : vector<30x30x32xbf16> to vector<16x16x32xbf16>
    %21 = vector.shape_cast %20 : vector<16x16x32xbf16> to vector<256x32xbf16>
    %22 = vector.extract_strided_slice %1 {offsets = [7, 4, 0], sizes = [16, 16, 32], strides = [1, 1, 1]} : vector<30x30x32xbf16> to vector<16x16x32xbf16>
    %23 = vector.shape_cast %22 : vector<16x16x32xbf16> to vector<256x32xbf16>
    %24 = vector.extract_strided_slice %1 {offsets = [7, 7, 0], sizes = [16, 16, 32], strides = [1, 1, 1]} : vector<30x30x32xbf16> to vector<16x16x32xbf16>
    %25 = vector.shape_cast %24 : vector<16x16x32xbf16> to vector<256x32xbf16>
    %26 = vector.extract_strided_slice %1 {offsets = [7, 10, 0], sizes = [16, 16, 32], strides = [1, 1, 1]} : vector<30x30x32xbf16> to vector<16x16x32xbf16>
    %27 = vector.shape_cast %26 : vector<16x16x32xbf16> to vector<256x32xbf16>
    %28 = vector.extract_strided_slice %1 {offsets = [10, 4, 0], sizes = [16, 16, 32], strides = [1, 1, 1]} : vector<30x30x32xbf16> to vector<16x16x32xbf16>
    %29 = vector.shape_cast %28 : vector<16x16x32xbf16> to vector<256x32xbf16>
    %30 = vector.extract_strided_slice %1 {offsets = [10, 7, 0], sizes = [16, 16, 32], strides = [1, 1, 1]} : vector<30x30x32xbf16> to vector<16x16x32xbf16>
    %31 = vector.shape_cast %30 : vector<16x16x32xbf16> to vector<256x32xbf16>
    %32 = vector.extract_strided_slice %1 {offsets = [10, 10, 0], sizes = [16, 16, 32], strides = [1, 1, 1]} : vector<30x30x32xbf16> to vector<16x16x32xbf16>
    %33 = vector.shape_cast %32 : vector<16x16x32xbf16> to vector<256x32xbf16>
    %34 = tpu.concatenate %17, %19, %21, %23, %25, %27, %29, %31, %33 in 1 : vector<256x32xbf16>, vector<256x32xbf16>, vector<256x32xbf16>, vector<256x32xbf16>, vector<256x32xbf16>, vector<256x32xbf16>, vector<256x32xbf16>, vector<256x32xbf16>, vector<256x32xbf16> -> vector<256x288xbf16>
    %c0_13 = arith.constant 0 : index
    %c0_14 = arith.constant 0 : index
    %c0_15 = arith.constant 0 : index
    %35 = vector.load %arg4[%c0_13, %c0_14, %c0_15] : memref<3x288x32xbf16, #tpu.memory_space<vmem>>, vector<1x288x32xbf16>
    %36 = vector.shape_cast %35 : vector<1x288x32xbf16> to vector<288x32xbf16>
    %cst_16 = arith.constant dense<0.000000e+00> : vector<256x32xf32>
    %37 = tpu.matmul %34, %36, %cst_16 {dimension_numbers = #tpu.dot_dimension_numbers<[1], [0], [0], [1], [0, 0, 1, 1], [], []>} : vector<256x288xbf16>, vector<288x32xbf16>, vector<256x32xf32> -> vector<256x32xf32>
    %c1 = arith.constant 1 : index
    %c0_17 = arith.constant 0 : index
    %c0_18 = arith.constant 0 : index
    %38 = vector.load %arg5[%c1, %c0_17, %c0_18] : memref<4x1x32xf32, #tpu.memory_space<vmem>>, vector<1x1x32xf32>
    %39 = vector.shape_cast %38 : vector<1x1x32xf32> to vector<1x32xf32>
    %40 = vector.broadcast %39 : vector<1x32xf32> to vector<256x32xf32>
    %41 = arith.mulf %37, %40 : vector<256x32xf32>
    %c1_19 = arith.constant 1 : index
    %c0_20 = arith.constant 0 : index
    %c0_21 = arith.constant 0 : index
    %42 = vector.load %arg6[%c1_19, %c0_20, %c0_21] : memref<4x1x32xf32, #tpu.memory_space<vmem>>, vector<1x1x32xf32>
    %43 = vector.shape_cast %42 : vector<1x1x32xf32> to vector<1x32xf32>
    %44 = vector.broadcast %43 : vector<1x32xf32> to vector<256x32xf32>
    %45 = arith.addf %41, %44 : vector<256x32xf32>
    %cst_22 = arith.constant 0.000000e+00 : f32
    %46 = vector.broadcast %cst_22 : f32 to vector<256x32xf32>
    %47 = arith.maximumf %45, %46 : vector<256x32xf32>
    %48 = vector.extract_strided_slice %1 {offsets = [2, 2, 0], sizes = [16, 16, 32], strides = [1, 1, 1]} : vector<30x30x32xbf16> to vector<16x16x32xbf16>
    %49 = vector.shape_cast %48 : vector<16x16x32xbf16> to vector<256x32xbf16>
    %50 = vector.extract_strided_slice %1 {offsets = [2, 7, 0], sizes = [16, 16, 32], strides = [1, 1, 1]} : vector<30x30x32xbf16> to vector<16x16x32xbf16>
    %51 = vector.shape_cast %50 : vector<16x16x32xbf16> to vector<256x32xbf16>
    %52 = vector.extract_strided_slice %1 {offsets = [2, 12, 0], sizes = [16, 16, 32], strides = [1, 1, 1]} : vector<30x30x32xbf16> to vector<16x16x32xbf16>
    %53 = vector.shape_cast %52 : vector<16x16x32xbf16> to vector<256x32xbf16>
    %54 = vector.extract_strided_slice %1 {offsets = [7, 2, 0], sizes = [16, 16, 32], strides = [1, 1, 1]} : vector<30x30x32xbf16> to vector<16x16x32xbf16>
    %55 = vector.shape_cast %54 : vector<16x16x32xbf16> to vector<256x32xbf16>
    %56 = vector.extract_strided_slice %1 {offsets = [7, 7, 0], sizes = [16, 16, 32], strides = [1, 1, 1]} : vector<30x30x32xbf16> to vector<16x16x32xbf16>
    %57 = vector.shape_cast %56 : vector<16x16x32xbf16> to vector<256x32xbf16>
    %58 = vector.extract_strided_slice %1 {offsets = [7, 12, 0], sizes = [16, 16, 32], strides = [1, 1, 1]} : vector<30x30x32xbf16> to vector<16x16x32xbf16>
    %59 = vector.shape_cast %58 : vector<16x16x32xbf16> to vector<256x32xbf16>
    %60 = vector.extract_strided_slice %1 {offsets = [12, 2, 0], sizes = [16, 16, 32], strides = [1, 1, 1]} : vector<30x30x32xbf16> to vector<16x16x32xbf16>
    %61 = vector.shape_cast %60 : vector<16x16x32xbf16> to vector<256x32xbf16>
    %62 = vector.extract_strided_slice %1 {offsets = [12, 7, 0], sizes = [16, 16, 32], strides = [1, 1, 1]} : vector<30x30x32xbf16> to vector<16x16x32xbf16>
    %63 = vector.shape_cast %62 : vector<16x16x32xbf16> to vector<256x32xbf16>
    %64 = vector.extract_strided_slice %1 {offsets = [12, 12, 0], sizes = [16, 16, 32], strides = [1, 1, 1]} : vector<30x30x32xbf16> to vector<16x16x32xbf16>
    %65 = vector.shape_cast %64 : vector<16x16x32xbf16> to vector<256x32xbf16>
    %66 = tpu.concatenate %49, %51, %53, %55, %57, %59, %61, %63, %65 in 1 : vector<256x32xbf16>, vector<256x32xbf16>, vector<256x32xbf16>, vector<256x32xbf16>, vector<256x32xbf16>, vector<256x32xbf16>, vector<256x32xbf16>, vector<256x32xbf16>, vector<256x32xbf16> -> vector<256x288xbf16>
    %c1_23 = arith.constant 1 : index
    %c0_24 = arith.constant 0 : index
    %c0_25 = arith.constant 0 : index
    %67 = vector.load %arg4[%c1_23, %c0_24, %c0_25] : memref<3x288x32xbf16, #tpu.memory_space<vmem>>, vector<1x288x32xbf16>
    %68 = vector.shape_cast %67 : vector<1x288x32xbf16> to vector<288x32xbf16>
    %cst_26 = arith.constant dense<0.000000e+00> : vector<256x32xf32>
    %69 = tpu.matmul %66, %68, %cst_26 {dimension_numbers = #tpu.dot_dimension_numbers<[1], [0], [0], [1], [0, 0, 1, 1], [], []>} : vector<256x288xbf16>, vector<288x32xbf16>, vector<256x32xf32> -> vector<256x32xf32>
    %c2 = arith.constant 2 : index
    %c0_27 = arith.constant 0 : index
    %c0_28 = arith.constant 0 : index
    %70 = vector.load %arg5[%c2, %c0_27, %c0_28] : memref<4x1x32xf32, #tpu.memory_space<vmem>>, vector<1x1x32xf32>
    %71 = vector.shape_cast %70 : vector<1x1x32xf32> to vector<1x32xf32>
    %72 = vector.broadcast %71 : vector<1x32xf32> to vector<256x32xf32>
    %73 = arith.mulf %69, %72 : vector<256x32xf32>
    %c2_29 = arith.constant 2 : index
    %c0_30 = arith.constant 0 : index
    %c0_31 = arith.constant 0 : index
    %74 = vector.load %arg6[%c2_29, %c0_30, %c0_31] : memref<4x1x32xf32, #tpu.memory_space<vmem>>, vector<1x1x32xf32>
    %75 = vector.shape_cast %74 : vector<1x1x32xf32> to vector<1x32xf32>
    %76 = vector.broadcast %75 : vector<1x32xf32> to vector<256x32xf32>
    %77 = arith.addf %73, %76 : vector<256x32xf32>
    %cst_32 = arith.constant 0.000000e+00 : f32
    %78 = vector.broadcast %cst_32 : f32 to vector<256x32xf32>
    %79 = arith.maximumf %77, %78 : vector<256x32xf32>
    %80 = vector.extract_strided_slice %1 {offsets = [0, 0, 0], sizes = [16, 16, 32], strides = [1, 1, 1]} : vector<30x30x32xbf16> to vector<16x16x32xbf16>
    %81 = vector.shape_cast %80 : vector<16x16x32xbf16> to vector<256x32xbf16>
    %82 = vector.extract_strided_slice %1 {offsets = [0, 7, 0], sizes = [16, 16, 32], strides = [1, 1, 1]} : vector<30x30x32xbf16> to vector<16x16x32xbf16>
    %83 = vector.shape_cast %82 : vector<16x16x32xbf16> to vector<256x32xbf16>
    %84 = vector.extract_strided_slice %1 {offsets = [0, 14, 0], sizes = [16, 16, 32], strides = [1, 1, 1]} : vector<30x30x32xbf16> to vector<16x16x32xbf16>
    %85 = vector.shape_cast %84 : vector<16x16x32xbf16> to vector<256x32xbf16>
    %86 = vector.extract_strided_slice %1 {offsets = [7, 0, 0], sizes = [16, 16, 32], strides = [1, 1, 1]} : vector<30x30x32xbf16> to vector<16x16x32xbf16>
    %87 = vector.shape_cast %86 : vector<16x16x32xbf16> to vector<256x32xbf16>
    %88 = vector.extract_strided_slice %1 {offsets = [7, 7, 0], sizes = [16, 16, 32], strides = [1, 1, 1]} : vector<30x30x32xbf16> to vector<16x16x32xbf16>
    %89 = vector.shape_cast %88 : vector<16x16x32xbf16> to vector<256x32xbf16>
    %90 = vector.extract_strided_slice %1 {offsets = [7, 14, 0], sizes = [16, 16, 32], strides = [1, 1, 1]} : vector<30x30x32xbf16> to vector<16x16x32xbf16>
    %91 = vector.shape_cast %90 : vector<16x16x32xbf16> to vector<256x32xbf16>
    %92 = vector.extract_strided_slice %1 {offsets = [14, 0, 0], sizes = [16, 16, 32], strides = [1, 1, 1]} : vector<30x30x32xbf16> to vector<16x16x32xbf16>
    %93 = vector.shape_cast %92 : vector<16x16x32xbf16> to vector<256x32xbf16>
    %94 = vector.extract_strided_slice %1 {offsets = [14, 7, 0], sizes = [16, 16, 32], strides = [1, 1, 1]} : vector<30x30x32xbf16> to vector<16x16x32xbf16>
    %95 = vector.shape_cast %94 : vector<16x16x32xbf16> to vector<256x32xbf16>
    %96 = vector.extract_strided_slice %1 {offsets = [14, 14, 0], sizes = [16, 16, 32], strides = [1, 1, 1]} : vector<30x30x32xbf16> to vector<16x16x32xbf16>
    %97 = vector.shape_cast %96 : vector<16x16x32xbf16> to vector<256x32xbf16>
    %98 = tpu.concatenate %81, %83, %85, %87, %89, %91, %93, %95, %97 in 1 : vector<256x32xbf16>, vector<256x32xbf16>, vector<256x32xbf16>, vector<256x32xbf16>, vector<256x32xbf16>, vector<256x32xbf16>, vector<256x32xbf16>, vector<256x32xbf16>, vector<256x32xbf16> -> vector<256x288xbf16>
    %c2_33 = arith.constant 2 : index
    %c0_34 = arith.constant 0 : index
    %c0_35 = arith.constant 0 : index
    %99 = vector.load %arg4[%c2_33, %c0_34, %c0_35] : memref<3x288x32xbf16, #tpu.memory_space<vmem>>, vector<1x288x32xbf16>
    %100 = vector.shape_cast %99 : vector<1x288x32xbf16> to vector<288x32xbf16>
    %cst_36 = arith.constant dense<0.000000e+00> : vector<256x32xf32>
    %101 = tpu.matmul %98, %100, %cst_36 {dimension_numbers = #tpu.dot_dimension_numbers<[1], [0], [0], [1], [0, 0, 1, 1], [], []>} : vector<256x288xbf16>, vector<288x32xbf16>, vector<256x32xf32> -> vector<256x32xf32>
    %c3 = arith.constant 3 : index
    %c0_37 = arith.constant 0 : index
    %c0_38 = arith.constant 0 : index
    %102 = vector.load %arg5[%c3, %c0_37, %c0_38] : memref<4x1x32xf32, #tpu.memory_space<vmem>>, vector<1x1x32xf32>
    %103 = vector.shape_cast %102 : vector<1x1x32xf32> to vector<1x32xf32>
    %104 = vector.broadcast %103 : vector<1x32xf32> to vector<256x32xf32>
    %105 = arith.mulf %101, %104 : vector<256x32xf32>
    %c3_39 = arith.constant 3 : index
    %c0_40 = arith.constant 0 : index
    %c0_41 = arith.constant 0 : index
    %106 = vector.load %arg6[%c3_39, %c0_40, %c0_41] : memref<4x1x32xf32, #tpu.memory_space<vmem>>, vector<1x1x32xf32>
    %107 = vector.shape_cast %106 : vector<1x1x32xf32> to vector<1x32xf32>
    %108 = vector.broadcast %107 : vector<1x32xf32> to vector<256x32xf32>
    %109 = arith.addf %105, %108 : vector<256x32xf32>
    %cst_42 = arith.constant 0.000000e+00 : f32
    %110 = vector.broadcast %cst_42 : f32 to vector<256x32xf32>
    %111 = arith.maximumf %109, %110 : vector<256x32xf32>
    %112 = tpu.concatenate %15, %47, %79, %111 in 1 : vector<256x32xf32>, vector<256x32xf32>, vector<256x32xf32>, vector<256x32xf32> -> vector<256x128xf32>
    %113 = arith.truncf %112 : vector<256x128xf32> to vector<256x128xbf16>
    %c0_43 = arith.constant 0 : index
    %c0_44 = arith.constant 0 : index
    %114 = vector.load %arg7[%c0_43, %c0_44] : memref<128x32xbf16, #tpu.memory_space<vmem>>, vector<128x32xbf16>
    %cst_45 = arith.constant dense<0.000000e+00> : vector<256x32xf32>
    %115 = tpu.matmul %113, %114, %cst_45 {dimension_numbers = #tpu.dot_dimension_numbers<[1], [0], [0], [1], [0, 0, 1, 1], [], []>} : vector<256x128xbf16>, vector<128x32xbf16>, vector<256x32xf32> -> vector<256x32xf32>
    %c0_46 = arith.constant 0 : index
    %c0_47 = arith.constant 0 : index
    %c0_48 = arith.constant 0 : index
    %116 = vector.load %arg8[%c0_46, %c0_47, %c0_48] : memref<1x1x32xf32, #tpu.memory_space<vmem>>, vector<1x1x32xf32>
    %117 = vector.shape_cast %116 : vector<1x1x32xf32> to vector<1x32xf32>
    %118 = vector.broadcast %117 : vector<1x32xf32> to vector<256x32xf32>
    %119 = arith.addf %115, %118 : vector<256x32xf32>
    %c0_49 = arith.constant 0 : index
    %c0_50 = arith.constant 0 : index
    %c0_51 = arith.constant 0 : index
    %c0_52 = arith.constant 0 : index
    %120 = vector.load %arg9[%c0_49, %c0_50, %c0_51, %c0_52] : memref<1x1x256x32xf32, #tpu.memory_space<vmem>>, vector<1x1x256x32xf32>
    %121 = vector.shape_cast %120 : vector<1x1x256x32xf32> to vector<256x32xf32>
    %122 = vector.shape_cast %119 : vector<256x32xf32> to vector<1x1x256x32xf32>
    tpu.vector_store %arg9[%c0_49, %c0_50, %c0_51, %c0_52], %122 {strides = array<i32>} : memref<1x1x256x32xf32, #tpu.memory_space<vmem>>, vector<1x1x256x32xf32>,
    return
  }
  func.func @transform_0(%arg0: i32, %arg1: i32) -> (i32, i32, i32, i32, i32) {
    %c0_i32 = arith.constant 0 : i32
    %c0_i32_0 = arith.constant 0 : i32
    %c0_i32_1 = arith.constant 0 : i32
    %c0_i32_2 = arith.constant 0 : i32
    return %arg0, %arg1, %c0_i32, %c0_i32_0, %c0_i32_1 : i32, i32, i32, i32, i32
  }
  func.func @transform_1(%arg0: i32, %arg1: i32) -> (i32, i32) {
    %c0_i32 = arith.constant 0 : i32
    %c0_i32_0 = arith.constant 0 : i32
    %c0_i32_1 = arith.constant 0 : i32
    return %c0_i32, %c0_i32_0 : i32, i32
  }
  func.func @transform_2(%arg0: i32, %arg1: i32) -> (i32, i32, i32) {
    %c0_i32 = arith.constant 0 : i32
    %c0_i32_0 = arith.constant 0 : i32
    %c0_i32_1 = arith.constant 0 : i32
    %c0_i32_2 = arith.constant 0 : i32
    return %c0_i32, %c0_i32_0, %c0_i32_1 : i32, i32, i32
  }
  func.func @transform_3(%arg0: i32, %arg1: i32) -> (i32, i32, i32) {
    %c0_i32 = arith.constant 0 : i32
    %c0_i32_0 = arith.constant 0 : i32
    %c0_i32_1 = arith.constant 0 : i32
    %c0_i32_2 = arith.constant 0 : i32
    return %c0_i32, %c0_i32_0, %c0_i32_1 : i32, i32, i32
  }
  func.func @transform_4(%arg0: i32, %arg1: i32) -> (i32, i32, i32) {
    %c0_i32 = arith.constant 0 : i32
    %c0_i32_0 = arith.constant 0 : i32
    %c0_i32_1 = arith.constant 0 : i32
    %c0_i32_2 = arith.constant 0 : i32
    return %c0_i32, %c0_i32_0, %c0_i32_1 : i32, i32, i32
  }
  func.func @transform_5(%arg0: i32, %arg1: i32) -> (i32, i32) {
    %c0_i32 = arith.constant 0 : i32
    %c0_i32_0 = arith.constant 0 : i32
    %c0_i32_1 = arith.constant 0 : i32
    return %c0_i32, %c0_i32_0 : i32, i32
  }
  func.func @transform_6(%arg0: i32, %arg1: i32) -> (i32, i32, i32) {
    %c0_i32 = arith.constant 0 : i32
    %c0_i32_0 = arith.constant 0 : i32
    %c0_i32_1 = arith.constant 0 : i32
    return %arg0, %c0_i32, %c0_i32_0 : i32, i32, i32
  }
  func.func @transform_7(%arg0: i32, %arg1: i32) -> (i32, i32, i32, i32) {
    %c0_i32 = arith.constant 0 : i32
    %c0_i32_0 = arith.constant 0 : i32
    %c0_i32_1 = arith.constant 0 : i32
    return %arg0, %arg1, %c0_i32, %c0_i32_0 : i32, i32, i32, i32
  }
}

</mosaic_0001>

<llo_original>
// kernel: tpu_custom_call.1
$region0: #{tpu_custom_call.1}
  #allocation0 [shape = 'u32[]', space=smem, size = 0x4, offset = 0x4, fixed_abs, tag = 'smem constant byte address 0x4 - core index']
  #allocation1 [shape = 'u32[144,128]{1,0:T(1,128)}', space=vmem, size = 0x12000, scoped, tag = 'internal scratch']
  %s0 = inlined_call_operand.hbm [shape: bf16[2,1,30,30,32], index: 0, kind: input, shape index: {}]
  %s1 = inlined_call_operand.hbm [shape: bf16[32,32], index: 1, kind: input, shape index: {}]
  %s2 = inlined_call_operand.hbm [shape: bf16[3,288,32], index: 2, kind: input, shape index: {}]
  %s3 = inlined_call_operand.hbm [shape: f32[4,1,32], index: 3, kind: input, shape index: {}]
  %s4 = inlined_call_operand.hbm [shape: f32[4,1,32], index: 4, kind: input, shape index: {}]
  %s5 = inlined_call_operand.hbm [shape: bf16[128,32], index: 5, kind: input, shape index: {}]
  %s6 = inlined_call_operand.hbm [shape: f32[2,1,32], index: 6, kind: input, shape index: {}]
  %s7 = inlined_call_operand.hbm [shape: f32[2,1,256,32], index: 7, kind: output, shape index: {}]
  %s8 = sld [smem:[#allocation0]]
  $region89: #{tpu_custom_call.1} parent=0
    _
  %s10 = ssub.s32 1, %s8
  %s11 = scalar_select 0, %s10, %s8
  $region1: #{tpu_custom_call.1} parent=0
    #allocation2 [shape = 'u8[491520]{0}', space=vmem, size = 0x78000, scoped, tag = 'input window, operand 0']
    #allocation3 [shape = 's32[2]{0}', space=sflag, size = 0x8, scoped, tag = 'scoped memory for tpu_custom_call.1']
    #allocation4 [shape = 's32[2]{0}', space=sflag, size = 0x8, scoped, tag = 'scoped memory for tpu_custom_call.1']
    #allocation5 [shape = 'u8[8192]{0}', space=vmem, size = 0x2000, scoped, tag = 'input window, operand 1, single buffered']
    #allocation6 [shape = 's32[1]{0}', space=sflag, size = 0x4, scoped, tag = 'scoped memory for tpu_custom_call.1']
    #allocation7 [shape = 'u8[221184]{0}', space=vmem, size = 0x36000, scoped, tag = 'input window, operand 2, single buffered']
    #allocation8 [shape = 'u8[2048]{0}', space=vmem, size = 0x800, scoped, tag = 'input window, operand 3, single buffered']
    #allocation9 [shape = 's32[1]{0}', space=sflag, size = 0x4, scoped, tag = 'scoped memory for tpu_custom_call.1']
    #allocation10 [shape = 'u8[2048]{0}', space=vmem, size = 0x800, scoped, tag = 'input window, operand 4, single buffered']
    #allocation11 [shape = 'u8[32768]{0}', space=vmem, size = 0x8000, scoped, tag = 'input window, operand 5, single buffered']
    #allocation12 [shape = 's32[1]{0}', space=sflag, size = 0x4, scoped, tag = 'scoped memory for tpu_custom_call.1']
    #allocation13 [shape = 'u8[1024]{0}', space=vmem, size = 0x400, scoped, tag = 'input window, operand 6']
    #allocation14 [shape = 'u8[262144]{0}', space=vmem, size = 0x40000, scoped, tag = 'output window, operand 0']
    %12 = vsyncpa [#allocation3], 0
    %s13 = scalar_lea.sflag [#allocation3], 1
    %14 = vsyncpa %s13, 0
    %15 = vsyncpa [#allocation6], 0
    %16 = vsyncpa [#allocation9], 0
    %17 = vsyncpa [#allocation12], 0
    %18 = vsyncpa [#allocation4], 0
    %s19 = scalar_lea.sflag [#allocation4], 1
    %20 = vsyncpa %s19, 0
    loop: start=0, step=1, limit=4
    $region2: #{tpu_custom_call.1} parent=1 // loop_pre_header
      _
    $region3: #{tpu_custom_call.1} parent=1 // loop_header
      %s22 = sphi 0, %s26
      %p23 = scmp.ge.s32.totalorder %s22, 4
      %s29 = sphi 0, %s41
      %s30 = sphi 0, %s37
      %s31 = sphi 0, %s29
      %s32 = sphi 0, %s30
      %s33 = sphi 0, %s31
      %s34 = sphi 0, %s32
      %s46 = sphi 0, %s48
      %s49 = sphi 0, %s46
      %s50 = sphi 0, %s49
      %s66 = sphi 0, %s50
      %s70 = sphi 0, %s70
      %s72 = sphi 0, %s70
      %s73 = sphi 0, %s72
      %s87 = sphi 0, %s73
      %s91 = sphi 0, %s91
      %s93 = sphi 0, %s91
      %s94 = sphi 0, %s93
      %s108 = sphi 0, %s94
      %s112 = sphi 0, %s112
      %s114 = sphi 0, %s112
      %s115 = sphi 0, %s114
      %s129 = sphi 0, %s115
      %s133 = sphi 0, %s133
      %s135 = sphi 0, %s133
      %s136 = sphi 0, %s135
      %s150 = sphi 0, %s136
      %s154 = sphi 0, %s154
      %s156 = sphi 0, %s154
      %s157 = sphi 0, %s156
      %s171 = sphi 0, %s157
      %s177 = sphi 0, %s179
      %s180 = sphi 0, %s177
      %s181 = sphi 0, %s180
      %s197 = sphi 0, %s181
      %s205 = sphi 0, %s207
      %s208 = sphi 0, %s205
      %s209 = sphi 0, %s208
      %s225 = sphi 0, %s209
    $region4: #{tpu_custom_call.1} parent=1 // loop_header_branch
      %25 = sbr.rel (%p23) target = $region8
    $region5: #{tpu_custom_call.1} parent=1 // loop_body
      %s27 = ssub.s32 %s22, 1
      %s28 = ssub.s32 %s22, 2
      %s35 = sadd.s32 1, %s30
      %p36 = scmp.ge.s32.totalorder %s35, 1
      %s37 = scalar_select %p36, 0, %s35
      %s38 = sadd.s32 1, %s29
      %s39 = scalar_select %p36, %s38, %s29
      %p40 = scmp.ge.s32.totalorder %s39, 2
      %s41 = scalar_select %p40, 0, %s39
      %s42 = ssub.s32 %s29, %s41
      %s43 = ssub.s32 %s30, %s37
      %s44 = sor.u32 %s42, %s43
      %p45 = scmp.eq.s32.totalorder %s44, 0
      %s47 = sadd.s32 %s46, 1
      %s48 = scalar_select %p45, %s46, %s47
      %p51 = pneg %p45
      %p52 = scmp.eq.s32.totalorder %s22, 1
      %p53 = por %p51, %p52
      %p54 = scmp.ne.s32.totalorder %s46, %s49
      %p55 = scmp.eq.s32.totalorder %s22, 0
      %p56 = por %p54, %p55
      %p57 = scmp.ne.s32.totalorder %s46, %s49
      %p58 = scmp.eq.s32.totalorder %s27, 1
      %p59 = por %p57, %p58
      %p60 = scmp.ne.s32.totalorder %s49, %s50
      %p61 = scmp.eq.s32.totalorder %s27, 0
      %p62 = por %p60, %p61
      %p63 = scmp.ne.s32.totalorder %s49, %s50
      %p64 = scmp.eq.s32.totalorder %s28, 1
      %p65 = por %p63, %p64
      %p67 = scmp.ne.s32.totalorder %s50, %s66
      %p68 = scmp.eq.s32.totalorder %s28, 0
      %p69 = por %p67, %p68
      %s71 = sadd.s32 %s70, 1
      %p74 = scmp.eq.s32.totalorder %s22, 1
      %p75 = scmp.ne.s32.totalorder %s70, %s72
      %p76 = scmp.eq.s32.totalorder %s22, 0
      %p77 = por %p75, %p76
      %p78 = scmp.ne.s32.totalorder %s70, %s72
      %p79 = scmp.eq.s32.totalorder %s27, 1
      %p80 = por %p78, %p79
      %p81 = scmp.ne.s32.totalorder %s72, %s73
      %p82 = scmp.eq.s32.totalorder %s27, 0
      %p83 = por %p81, %p82
      %p84 = scmp.ne.s32.totalorder %s72, %s73
      %p85 = scmp.eq.s32.totalorder %s28, 1
      %p86 = por %p84, %p85
      %p88 = scmp.ne.s32.totalorder %s73, %s87
      %p89 = scmp.eq.s32.totalorder %s28, 0
      %p90 = por %p88, %p89
      %s92 = sadd.s32 %s91, 1
      %p95 = scmp.eq.s32.totalorder %s22, 1
      %p96 = scmp.ne.s32.totalorder %s91, %s93
      %p97 = scmp.eq.s32.totalorder %s22, 0
      %p98 = por %p96, %p97
      %p99 = scmp.ne.s32.totalorder %s91, %s93
      %p100 = scmp.eq.s32.totalorder %s27, 1
      %p101 = por %p99, %p100
      %p102 = scmp.ne.s32.totalorder %s93, %s94
      %p103 = scmp.eq.s32.totalorder %s27, 0
      %p104 = por %p102, %p103
      %p105 = scmp.ne.s32.totalorder %s93, %s94
      %p106 = scmp.eq.s32.totalorder %s28, 1
      %p107 = por %p105, %p106
      %p109 = scmp.ne.s32.totalorder %s94, %s108
      %p110 = scmp.eq.s32.totalorder %s28, 0
      %p111 = por %p109, %p110
      %s113 = sadd.s32 %s112, 1
      %p116 = scmp.eq.s32.totalorder %s22, 1
      %p117 = scmp.ne.s32.totalorder %s112, %s114
      %p118 = scmp.eq.s32.totalorder %s22, 0
      %p119 = por %p117, %p118
      %p120 = scmp.ne.s32.totalorder %s112, %s114
      %p121 = scmp.eq.s32.totalorder %s27, 1
      %p122 = por %p120, %p121
      %p123 = scmp.ne.s32.totalorder %s114, %s115
      %p124 = scmp.eq.s32.totalorder %s27, 0
      %p125 = por %p123, %p124
      %p126 = scmp.ne.s32.totalorder %s114, %s115
      %p127 = scmp.eq.s32.totalorder %s28, 1
      %p128 = por %p126, %p127
      %p130 = scmp.ne.s32.totalorder %s115, %s129
      %p131 = scmp.eq.s32.totalorder %s28, 0
      %p132 = por %p130, %p131
      %s134 = sadd.s32 %s133, 1
      %p137 = scmp.eq.s32.totalorder %s22, 1
      %p138 = scmp.ne.s32.totalorder %s133, %s135
      %p139 = scmp.eq.s32.totalorder %s22, 0
      %p140 = por %p138, %p139
      %p141 = scmp.ne.s32.totalorder %s133, %s135
      %p142 = scmp.eq.s32.totalorder %s27, 1
      %p143 = por %p141, %p142
      %p144 = scmp.ne.s32.totalorder %s135, %s136
      %p145 = scmp.eq.s32.totalorder %s27, 0
      %p146 = por %p144, %p145
      %p147 = scmp.ne.s32.totalorder %s135, %s136
      %p148 = scmp.eq.s32.totalorder %s28, 1
      %p149 = por %p147, %p148
      %p151 = scmp.ne.s32.totalorder %s136, %s150
      %p152 = scmp.eq.s32.totalorder %s28, 0
      %p153 = por %p151, %p152
      %s155 = sadd.s32 %s154, 1
      %p158 = scmp.eq.s32.totalorder %s22, 1
      %p159 = scmp.ne.s32.totalorder %s154, %s156
      %p160 = scmp.eq.s32.totalorder %s22, 0
      %p161 = por %p159, %p160
      %p162 = scmp.ne.s32.totalorder %s154, %s156
      %p163 = scmp.eq.s32.totalorder %s27, 1
      %p164 = por %p162, %p163
      %p165 = scmp.ne.s32.totalorder %s156, %s157
      %p166 = scmp.eq.s32.totalorder %s27, 0
      %p167 = por %p165, %p166
      %p168 = scmp.ne.s32.totalorder %s156, %s157
      %p169 = scmp.eq.s32.totalorder %s28, 1
      %p170 = por %p168, %p169
      %p172 = scmp.ne.s32.totalorder %s157, %s171
      %p173 = scmp.eq.s32.totalorder %s28, 0
      %p174 = por %p172, %p173
      %s175 = ssub.s32 %s29, %s41
      %p176 = scmp.eq.s32.totalorder %s175, 0
      %s178 = sadd.s32 %s177, 1
      %s179 = scalar_select %p176, %s177, %s178
      %p182 = pneg %p176
      %p183 = scmp.eq.s32.totalorder %s22, 1
      %p184 = por %p182, %p183
      %p185 = scmp.ne.s32.totalorder %s177, %s180
      %p186 = scmp.eq.s32.totalorder %s22, 0
      %p187 = por %p185, %p186
      %p188 = scmp.ne.s32.totalorder %s177, %s180
      %p189 = scmp.eq.s32.totalorder %s27, 1
      %p190 = por %p188, %p189
      %p191 = scmp.ne.s32.totalorder %s180, %s181
      %p192 = scmp.eq.s32.totalorder %s27, 0
      %p193 = por %p191, %p192
      %p194 = scmp.ne.s32.totalorder %s180, %s181
      %p195 = scmp.eq.s32.totalorder %s28, 1
      %p196 = por %p194, %p195
      %p198 = scmp.ne.s32.totalorder %s181, %s197
      %p199 = scmp.eq.s32.totalorder %s28, 0
      %p200 = por %p198, %p199
      %s201 = ssub.s32 %s29, %s41
      %s202 = ssub.s32 %s30, %s37
      %s203 = sor.u32 %s201, %s202
      %p204 = scmp.eq.s32.totalorder %s203, 0
      %s206 = sadd.s32 %s205, 1
      %s207 = scalar_select %p204, %s205, %s206
      %p210 = pneg %p204
      %p211 = scmp.eq.s32.totalorder %s22, 1
      %p212 = por %p210, %p211
      %p213 = scmp.ne.s32.totalorder %s205, %s208
      %p214 = scmp.eq.s32.totalorder %s22, 0
      %p215 = por %p213, %p214
      %p216 = scmp.ne.s32.totalorder %s205, %s208
      %p217 = scmp.eq.s32.totalorder %s27, 1
      %p218 = por %p216, %p217
      %p219 = scmp.ne.s32.totalorder %s208, %s209
      %p220 = scmp.eq.s32.totalorder %s27, 0
      %p221 = por %p219, %p220
      %p222 = scmp.ne.s32.totalorder %s208, %s209
      %p223 = scmp.eq.s32.totalorder %s28, 1
      %p224 = por %p222, %p223
      %p226 = scmp.ne.s32.totalorder %s209, %s225
      %p227 = scmp.eq.s32.totalorder %s28, 0
      %p228 = por %p226, %p227
      %p229 = scmp.le.s32.totalorder 1, %s22
      %p230 = scmp.lt.s32.totalorder %s22, 3
      %p231 = pnand %p229, %p230
      %p232 = pneg %p231
      // Predicated region
      $region9: #{tpu_custom_call.1} parent=5 // pred_check
        _
      $region10: #{tpu_custom_call.1} parent=5 // pred_check_branch
        %234 = sbr.rel (%p231) target = $region12
      $region11: #{tpu_custom_call.1} parent=5 // pred_region
        %s235 = ssub.s32 %s22, 1
        // Predicated region
        $region13: #{tpu_custom_call.1} parent=11 // pred_check
          %p236 = pneg %p83
        $region14: #{tpu_custom_call.1} parent=11 // pred_check_branch
          %238 = sbr.rel (%p236) target = $region16
        $region15: #{tpu_custom_call.1} parent=11 // pred_region
          %s240 = ssub.s32 256, 256
          %241 = vsyncadd [#allocation6], %s240
          %s242 = sshll.u32 [#allocation5], 4
          %s243 = int_to_ptr.vmem [resolvable:$true] %s242
          %248 = dma.hbm_to_vmem [thread:$0]  %s1, 256, %s243, [#allocation6], 64, 64, 4
        $region16: #{tpu_custom_call.1} parent=11 // pred_fallthru
          _
        // Predicated region
        $region17: #{tpu_custom_call.1} parent=11 // pred_check
          %p249 = pneg %p104
        $region18: #{tpu_custom_call.1} parent=11 // pred_check_branch
          %251 = sbr.rel (%p249) target = $region20
        $region19: #{tpu_custom_call.1} parent=11 // pred_region
          %s253 = ssub.s32 6912, 6912
          %254 = vsyncadd [#allocation6], %s253
          %s255 = sshll.u32 [#allocation7], 4
          %s256 = int_to_ptr.vmem [resolvable:$true] %s255
          %261 = dma.hbm_to_vmem [thread:$0]  %s2, 6912, %s256, [#allocation6], 64, 64, 4
        $region20: #{tpu_custom_call.1} parent=11 // pred_fallthru
          _
        // Predicated region
        $region21: #{tpu_custom_call.1} parent=11 // pred_check
          %p262 = pneg %p125
        $region22: #{tpu_custom_call.1} parent=11 // pred_check_branch
          %264 = sbr.rel (%p262) target = $region24
        $region23: #{tpu_custom_call.1} parent=11 // pred_region
          %s266 = ssub.s32 64, 64
          %267 = vsyncadd [#allocation9], %s266
          %s268 = sshll.u32 [#allocation8], 4
          %s269 = int_to_ptr.vmem [resolvable:$true] %s268
          %274 = dma.hbm_to_vmem [thread:$0]  %s3, 64, %s269, [#allocation9], 16, 16, 1
        $region24: #{tpu_custom_call.1} parent=11 // pred_fallthru
          _
        // Predicated region
        $region25: #{tpu_custom_call.1} parent=11 // pred_check
          %p275 = pneg %p146
        $region26: #{tpu_custom_call.1} parent=11 // pred_check_branch
          %277 = sbr.rel (%p275) target = $region28
        $region27: #{tpu_custom_call.1} parent=11 // pred_region
          %s279 = ssub.s32 64, 64
          %280 = vsyncadd [#allocation9], %s279
          %s281 = sshll.u32 [#allocation10], 4
          %s282 = int_to_ptr.vmem [resolvable:$true] %s281
          %287 = dma.hbm_to_vmem [thread:$0]  %s4, 64, %s282, [#allocation9], 16, 16, 1
        $region28: #{tpu_custom_call.1} parent=11 // pred_fallthru
          _
        // Predicated region
        $region29: #{tpu_custom_call.1} parent=11 // pred_check
          %p288 = pneg %p167
        $region30: #{tpu_custom_call.1} parent=11 // pred_check_branch
          %290 = sbr.rel (%p288) target = $region32
        $region31: #{tpu_custom_call.1} parent=11 // pred_region
          %s292 = ssub.s32 1024, 1024
          %293 = vsyncadd [#allocation12], %s292
          %s294 = sshll.u32 [#allocation11], 4
          %s295 = int_to_ptr.vmem [resolvable:$true] %s294
          %300 = dma.hbm_to_vmem [thread:$0]  %s5, 1024, %s295, [#allocation12], 64, 64, 4
        $region32: #{tpu_custom_call.1} parent=11 // pred_fallthru
          _
      $region12: #{tpu_custom_call.1} parent=5 // pred_fallthru
        _
      %p301 = scmp.lt.s32.totalorder %s22, 2
      // Predicated region
      $region33: #{tpu_custom_call.1} parent=5 // pred_check
        %p302 = pneg %p301
      $region34: #{tpu_custom_call.1} parent=5 // pred_check_branch
        %304 = sbr.rel (%p302) target = $region36
      $region35: #{tpu_custom_call.1} parent=5 // pred_region
        // Predicated region
        $region37: #{tpu_custom_call.1} parent=35 // pred_check
          %p305 = pneg %p56
        $region38: #{tpu_custom_call.1} parent=35 // pred_check_branch
          %307 = sbr.rel (%p305) target = $region40
        $region39: #{tpu_custom_call.1} parent=35 // pred_region
          %s308 = sand.u32 %s22, 1
          %s309 = scalar_lea.sflag [#allocation3], %s308
          %s310 = sand.u32 %s46, 1
          %s311 = smul.addr %s310, 480
          %s312 = scalar_lea.vmem [#allocation2], %s311
          %s314 = ssub.s32 7680, 7680
          %315 = vsyncadd %s309, %s314
          %s316 = smul.addr %s30, 120
          %s317 = smul.addr %s29, 120
          %s318 = sadd.s32 %s316, %s317
          %s319 = smul.addr %s318, 64
          %s320 = scalar_lea.hbm %s0, %s319
          %s321 = sshll.u32 %s312, 4
          %s322 = int_to_ptr.vmem [resolvable:$true] %s321
          %327 = dma.hbm_to_vmem [thread:$0]  %s320, 7680, %s322, %s309, 64, 64, 4
        $region40: #{tpu_custom_call.1} parent=35 // pred_fallthru
          _
        // Predicated region
        $region41: #{tpu_custom_call.1} parent=35 // pred_check
          %p328 = pneg %p187
        $region42: #{tpu_custom_call.1} parent=35 // pred_check_branch
          %330 = sbr.rel (%p328) target = $region44
        $region43: #{tpu_custom_call.1} parent=35 // pred_region
          %s331 = sand.u32 %s22, 1
          %s332 = scalar_lea.sflag [#allocation3], %s331
          %s333 = sand.u32 %s177, 1
          %s334 = scalar_lea.vmem [#allocation13], %s333
          %s336 = ssub.s32 16, 16
          %337 = vsyncadd %s332, %s336
          %s338 = smul.addr %s29, 16
          %s339 = scalar_lea.hbm %s6, %s338
          %s341 = sshll.u32 %s334, 4
          %s342 = int_to_ptr.vmem [resolvable:$true] %s341
          %344 = dma.hbm_to_vmem [thread:$0]  %s339, 16, %s342, %s332
        $region44: #{tpu_custom_call.1} parent=35 // pred_fallthru
          _
      $region36: #{tpu_custom_call.1} parent=5 // pred_fallthru
        _
      %p345 = scmp.le.s32.totalorder 1, %s22
      %p346 = scmp.lt.s32.totalorder %s22, 3
      %p347 = pnand %p345, %p346
      %p348 = pneg %p347
      // Predicated region
      $region45: #{tpu_custom_call.1} parent=5 // pred_check
        _
      $region46: #{tpu_custom_call.1} parent=5 // pred_check_branch
        %350 = sbr.rel (%p347) target = $region48
      $region47: #{tpu_custom_call.1} parent=5 // pred_region
        %s351 = ssub.s32 %s22, 1
        %s352 = sand.u32 %s27, 1
        %s353 = scalar_lea.sflag [#allocation3], %s352
        %s354 = sand.u32 %s49, 1
        %s355 = smul.addr %s354, 480
        %s356 = scalar_lea.vmem [#allocation2], %s355
        // Predicated region
        $region49: #{tpu_custom_call.1} parent=47 // pred_check
          %p357 = pneg %p62
        $region50: #{tpu_custom_call.1} parent=47 // pred_check_branch
          %359 = sbr.rel (%p357) target = $region52
        $region51: #{tpu_custom_call.1} parent=47 // pred_region
          %360 = dma.done %s353, 7680
        $region52: #{tpu_custom_call.1} parent=47 // pred_fallthru
          _
        // Predicated region
        $region53: #{tpu_custom_call.1} parent=47 // pred_check
          %p361 = pneg %p83
        $region54: #{tpu_custom_call.1} parent=47 // pred_check_branch
          %363 = sbr.rel (%p361) target = $region56
        $region55: #{tpu_custom_call.1} parent=47 // pred_region
          %364 = dma.done [#allocation6], 256
        $region56: #{tpu_custom_call.1} parent=47 // pred_fallthru
          _
        // Predicated region
        $region57: #{tpu_custom_call.1} parent=47 // pred_check
          %p365 = pneg %p104
        $region58: #{tpu_custom_call.1} parent=47 // pred_check_branch
          %367 = sbr.rel (%p365) target = $region60
        $region59: #{tpu_custom_call.1} parent=47 // pred_region
          %368 = dma.done [#allocation6], 6912
        $region60: #{tpu_custom_call.1} parent=47 // pred_fallthru
          _
        // Predicated region
        $region61: #{tpu_custom_call.1} parent=47 // pred_check
          %p369 = pneg %p125
        $region62: #{tpu_custom_call.1} parent=47 // pred_check_branch
          %371 = sbr.rel (%p369) target = $region64
        $region63: #{tpu_custom_call.1} parent=47 // pred_region
          %372 = dma.done [#allocation9], 64
        $region64: #{tpu_custom_call.1} parent=47 // pred_fallthru
          _
        // Predicated region
        $region65: #{tpu_custom_call.1} parent=47 // pred_check
          %p373 = pneg %p146
        $region66: #{tpu_custom_call.1} parent=47 // pred_check_branch
          %375 = sbr.rel (%p373) target = $region68
        $region67: #{tpu_custom_call.1} parent=47 // pred_region
          %376 = dma.done [#allocation9], 64
        $region68: #{tpu_custom_call.1} parent=47 // pred_fallthru
          _
        // Predicated region
        $region69: #{tpu_custom_call.1} parent=47 // pred_check
          %p377 = pneg %p167
        $region70: #{tpu_custom_call.1} parent=47 // pred_check_branch
          %379 = sbr.rel (%p377) target = $region72
        $region71: #{tpu_custom_call.1} parent=47 // pred_region
          %380 = dma.done [#allocation12], 1024
        $region72: #{tpu_custom_call.1} parent=47 // pred_fallthru
          _
        %s381 = sand.u32 %s27, 1
        %s382 = scalar_lea.sflag [#allocation3], %s381
        %s383 = sand.u32 %s180, 1
        %s384 = scalar_lea.vmem [#allocation13], %s383
        // Predicated region
        $region73: #{tpu_custom_call.1} parent=47 // pred_check
          %p385 = pneg %p193
        $region74: #{tpu_custom_call.1} parent=47 // pred_check_branch
          %387 = sbr.rel (%p385) target = $region76
        $region75: #{tpu_custom_call.1} parent=47 // pred_region
          %388 = dma.done %s382, 16
        $region76: #{tpu_custom_call.1} parent=47 // pred_fallthru
          _
        %s389 = sand.u32 %s27, 1
        %s390 = scalar_lea.sflag [#allocation3], %s389
        %s391 = sand.u32 %s49, 1
        %s392 = smul.addr %s391, 480
        %s393 = scalar_lea.vmem [#allocation2], %s392
        %p394 = pneg %p62
        %p395 = pneg %p59
        %p396 = pneg %p83
        %p397 = pneg %p80
        %p398 = pneg %p104
        %p399 = pneg %p101
        %p400 = pneg %p125
        %p401 = pneg %p122
        %p402 = pneg %p146
        %p403 = pneg %p143
        %p404 = pneg %p167
        %p405 = pneg %p164
        %s406 = sand.u32 %s27, 1
        %s407 = scalar_lea.sflag [#allocation3], %s406
        %s408 = sand.u32 %s180, 1
        %s409 = scalar_lea.vmem [#allocation13], %s408
        %p410 = pneg %p193
        %p411 = pneg %p190
        %p412 = pneg %p221
        %p413 = pneg %p218
        %s414 = sand.u32 %s208, 1
        %s415 = scalar_lea.sflag [#allocation4], %s414
        %s416 = sand.u32 %s208, 1
        %s417 = smul.addr %s416, 256
        %s418 = scalar_lea.vmem [#allocation14], %s417
        %v420 = vld [vmem:[%s356] sm:$0xf]
        %v421 = vld [vmem:[%s356 + $0x4] sm:$0xf]
        %v422 = vld [vmem:[%s356 + $0x8] sm:$0xf]
        %v423 = vld [vmem:[%s356 + $0xc] sm:$0x7]
        %v424 = vld [vmem:[%s356 + $0x10] sm:$0xf]
        %v425 = vld [vmem:[%s356 + $0x14] sm:$0xf]
        %v426 = vld [vmem:[%s356 + $0x18] sm:$0xf]
        %v427 = vld [vmem:[%s356 + $0x1c] sm:$0x7]
        %v428 = vld [vmem:[%s356 + $0x20] sm:$0xf]
        %v429 = vld [vmem:[%s356 + $0x24] sm:$0xf]
        %v430 = vld [vmem:[%s356 + $0x28] sm:$0xf]
        %v431 = vld [vmem:[%s356 + $0x2c] sm:$0x7]
        %v432 = vld [vmem:[%s356 + $0x30] sm:$0xf]
        %v433 = vld [vmem:[%s356 + $0x34] sm:$0xf]
        %v434 = vld [vmem:[%s356 + $0x38] sm:$0xf]
        %v435 = vld [vmem:[%s356 + $0x3c] sm:$0x7]
        %v436 = vld [vmem:[%s356 + $0x40] sm:$0xf]
        %v437 = vld [vmem:[%s356 + $0x44] sm:$0xf]
        %v438 = vld [vmem:[%s356 + $0x48] sm:$0xf]
        %v439 = vld [vmem:[%s356 + $0x4c] sm:$0x7]
        %v440 = vld [vmem:[%s356 + $0x50] sm:$0xf]
        %v441 = vld [vmem:[%s356 + $0x54] sm:$0xf]
        %v442 = vld [vmem:[%s356 + $0x58] sm:$0xf]
        %v443 = vld [vmem:[%s356 + $0x5c] sm:$0x7]
        %v444 = vld [vmem:[%s356 + $0x60] sm:$0xf]
        %v445 = vld [vmem:[%s356 + $0x64] sm:$0xf]
        %v446 = vld [vmem:[%s356 + $0x68] sm:$0xf]
        %v447 = vld [vmem:[%s356 + $0x6c] sm:$0x7]
        %v448 = vld [vmem:[%s356 + $0x70] sm:$0xf]
        %v449 = vld [vmem:[%s356 + $0x74] sm:$0xf]
        %v450 = vld [vmem:[%s356 + $0x78] sm:$0xf]
        %v451 = vld [vmem:[%s356 + $0x7c] sm:$0x7]
        %v452 = vld [vmem:[%s356 + $0x80] sm:$0xf]
        %v453 = vld [vmem:[%s356 + $0x84] sm:$0xf]
        %v454 = vld [vmem:[%s356 + $0x88] sm:$0xf]
        %v455 = vld [vmem:[%s356 + $0x8c] sm:$0x7]
        %v456 = vld [vmem:[%s356 + $0x90] sm:$0xf]
        %v457 = vld [vmem:[%s356 + $0x94] sm:$0xf]
        %v458 = vld [vmem:[%s356 + $0x98] sm:$0xf]
        %v459 = vld [vmem:[%s356 + $0x9c] sm:$0x7]
        %v460 = vld [vmem:[%s356 + $0xa0] sm:$0xf]
        %v461 = vld [vmem:[%s356 + $0xa4] sm:$0xf]
        %v462 = vld [vmem:[%s356 + $0xa8] sm:$0xf]
        %v463 = vld [vmem:[%s356 + $0xac] sm:$0x7]
        %v464 = vld [vmem:[%s356 + $0xb0] sm:$0xf]
        %v465 = vld [vmem:[%s356 + $0xb4] sm:$0xf]
        %v466 = vld [vmem:[%s356 + $0xb8] sm:$0xf]
        %v467 = vld [vmem:[%s356 + $0xbc] sm:$0x7]
        %v468 = vld [vmem:[%s356 + $0xc0] sm:$0xf]
        %v469 = vld [vmem:[%s356 + $0xc4] sm:$0xf]
        %v470 = vld [vmem:[%s356 + $0xc8] sm:$0xf]
        %v471 = vld [vmem:[%s356 + $0xcc] sm:$0x7]
        %v472 = vld [vmem:[%s356 + $0xd0] sm:$0xf]
        %v473 = vld [vmem:[%s356 + $0xd4] sm:$0xf]
        %v474 = vld [vmem:[%s356 + $0xd8] sm:$0xf]
        %v475 = vld [vmem:[%s356 + $0xdc] sm:$0x7]
        %v476 = vld [vmem:[%s356 + $0xe0] sm:$0xf]
        %v477 = vld [vmem:[%s356 + $0xe4] sm:$0xf]
        %v478 = vld [vmem:[%s356 + $0xe8] sm:$0xf]
        %v479 = vld [vmem:[%s356 + $0xec] sm:$0x7]
        %v480 = vld [vmem:[%s356 + $0xf0] sm:$0xf]
        %v481 = vld [vmem:[%s356 + $0xf4] sm:$0xf]
        %v482 = vld [vmem:[%s356 + $0xf8] sm:$0xf]
        %v483 = vld [vmem:[%s356 + $0xfc] sm:$0x7]
        %v484 = vld [vmem:[%s356 + $0x100] sm:$0xf]
        %v485 = vld [vmem:[%s356 + $0x104] sm:$0xf]
        %v486 = vld [vmem:[%s356 + $0x108] sm:$0xf]
        %v487 = vld [vmem:[%s356 + $0x10c] sm:$0x7]
        %v488 = vld [vmem:[%s356 + $0x110] sm:$0xf]
        %v489 = vld [vmem:[%s356 + $0x114] sm:$0xf]
        %v490 = vld [vmem:[%s356 + $0x118] sm:$0xf]
        %v491 = vld [vmem:[%s356 + $0x11c] sm:$0x7]
        %v492 = vld [vmem:[%s356 + $0x120] sm:$0xf]
        %v493 = vld [vmem:[%s356 + $0x124] sm:$0xf]
        %v494 = vld [vmem:[%s356 + $0x128] sm:$0xf]
        %v495 = vld [vmem:[%s356 + $0x12c] sm:$0x7]
        %v496 = vld [vmem:[%s356 + $0x130] sm:$0xf]
        %v497 = vld [vmem:[%s356 + $0x134] sm:$0xf]
        %v498 = vld [vmem:[%s356 + $0x138] sm:$0xf]
        %v499 = vld [vmem:[%s356 + $0x13c] sm:$0x7]
        %v500 = vld [vmem:[%s356 + $0x140] sm:$0xf]
        %v501 = vld [vmem:[%s356 + $0x144] sm:$0xf]
        %v502 = vld [vmem:[%s356 + $0x148] sm:$0xf]
        %v503 = vld [vmem:[%s356 + $0x14c] sm:$0x7]
        %v504 = vld [vmem:[%s356 + $0x150] sm:$0xf]
        %v505 = vld [vmem:[%s356 + $0x154] sm:$0xf]
        %v506 = vld [vmem:[%s356 + $0x158] sm:$0xf]
        %v507 = vld [vmem:[%s356 + $0x15c] sm:$0x7]
        %v508 = vld [vmem:[%s356 + $0x160] sm:$0xf]
        %v509 = vld [vmem:[%s356 + $0x164] sm:$0xf]
        %v510 = vld [vmem:[%s356 + $0x168] sm:$0xf]
        %v511 = vld [vmem:[%s356 + $0x16c] sm:$0x7]
        %v512 = vld [vmem:[%s356 + $0x170] sm:$0xf]
        %v513 = vld [vmem:[%s356 + $0x174] sm:$0xf]
        %v514 = vld [vmem:[%s356 + $0x178] sm:$0xf]
        %v515 = vld [vmem:[%s356 + $0x17c] sm:$0x7]
        %v516 = vld [vmem:[%s356 + $0x180] sm:$0xf]
        %v517 = vld [vmem:[%s356 + $0x184] sm:$0xf]
        %v518 = vld [vmem:[%s356 + $0x188] sm:$0xf]
        %v519 = vld [vmem:[%s356 + $0x18c] sm:$0x7]
        %v520 = vld [vmem:[%s356 + $0x190] sm:$0xf]
        %v521 = vld [vmem:[%s356 + $0x194] sm:$0xf]
        %v522 = vld [vmem:[%s356 + $0x198] sm:$0xf]
        %v523 = vld [vmem:[%s356 + $0x19c] sm:$0x7]
        %v524 = vld [vmem:[%s356 + $0x1a0] sm:$0xf]
        %v525 = vld [vmem:[%s356 + $0x1a4] sm:$0xf]
        %v526 = vld [vmem:[%s356 + $0x1a8] sm:$0xf]
        %v527 = vld [vmem:[%s356 + $0x1ac] sm:$0x7]
        %v528 = vld [vmem:[%s356 + $0x1b0] sm:$0xf]
        %v529 = vld [vmem:[%s356 + $0x1b4] sm:$0xf]
        %v530 = vld [vmem:[%s356 + $0x1b8] sm:$0xf]
        %v531 = vld [vmem:[%s356 + $0x1bc] sm:$0x7]
        %v532 = vld [vmem:[%s356 + $0x1c0] sm:$0xf]
        %v533 = vld [vmem:[%s356 + $0x1c4] sm:$0xf]
        %v534 = vld [vmem:[%s356 + $0x1c8] sm:$0xf]
        %v535 = vld [vmem:[%s356 + $0x1cc] sm:$0x7]
        %v536 = vld [vmem:[%s356 + $0x1d0] sm:$0xf]
        %v537 = vld [vmem:[%s356 + $0x1d4] sm:$0xf]
        %v538 = vld [vmem:[%s356 + $0x1d8] sm:$0xf]
        %v539 = vld [vmem:[%s356 + $0x1dc] sm:$0x7]
        %vm540 = vsmask.f32 256
        %vm541 = vsmask.f32 4368
        %vm542 = vmor %vm540, %vm541
        %v544 = vshrl.u32 %v448, 16
        %v546 = vrot.slane %v544, 7
        %v547 = vrot.slane %v546, 4
        %v549 = vshrl.u32 %v449, 16
        %v551 = vrot.slane %v549, 7
        %v552 = vshll.u32 %v449, 16
        %v554 = vor.u32 %v551, %v552
        %v555 = vsel %vm542, %v547, %v554
        %v556 = vrot.slane %v551, 4
        %v558 = vshrl.u32 %v450, 16
        %v560 = vrot.slane %v558, 7
        %v561 = vshll.u32 %v450, 16
        %v563 = vor.u32 %v560, %v561
        %v564 = vsel %vm542, %v556, %v563
        %v566 = vshrl.u32 %v452, 16
        %v568 = vrot.slane %v566, 7
        %v569 = vrot.slane %v568, 4
        %v571 = vshrl.u32 %v453, 16
        %v573 = vrot.slane %v571, 7
        %v574 = vshll.u32 %v453, 16
        %v576 = vor.u32 %v573, %v574
        %v577 = vsel %vm542, %v569, %v576
        %v578 = vrot.slane %v573, 4
        %v580 = vshrl.u32 %v454, 16
        %v582 = vrot.slane %v580, 7
        %v583 = vshll.u32 %v454, 16
        %v585 = vor.u32 %v582, %v583
        %v586 = vsel %vm542, %v578, %v585
        %v588 = vshrl.u32 %v456, 16
        %v590 = vrot.slane %v588, 7
        %v591 = vrot.slane %v590, 4
        %v593 = vshrl.u32 %v457, 16
        %v595 = vrot.slane %v593, 7
        %v596 = vshll.u32 %v457, 16
        %v598 = vor.u32 %v595, %v596
        %v599 = vsel %vm542, %v591, %v598
        %v600 = vrot.slane %v595, 4
        %v602 = vshrl.u32 %v458, 16
        %v604 = vrot.slane %v602, 7
        %v605 = vshll.u32 %v458, 16
        %v607 = vor.u32 %v604, %v605
        %v608 = vsel %vm542, %v600, %v607
        %v610 = vshrl.u32 %v460, 16
        %v612 = vrot.slane %v610, 7
        %v613 = vrot.slane %v612, 4
        %v615 = vshrl.u32 %v461, 16
        %v617 = vrot.slane %v615, 7
        %v618 = vshll.u32 %v461, 16
        %v620 = vor.u32 %v617, %v618
        %v621 = vsel %vm542, %v613, %v620
        %v622 = vrot.slane %v617, 4
        %v624 = vshrl.u32 %v462, 16
        %v626 = vrot.slane %v624, 7
        %v627 = vshll.u32 %v462, 16
        %v629 = vor.u32 %v626, %v627
        %v630 = vsel %vm542, %v622, %v629
        %v632 = vshrl.u32 %v464, 16
        %v634 = vrot.slane %v632, 7
        %v635 = vrot.slane %v634, 4
        %v637 = vshrl.u32 %v465, 16
        %v639 = vrot.slane %v637, 7
        %v640 = vshll.u32 %v465, 16
        %v642 = vor.u32 %v639, %v640
        %v643 = vsel %vm542, %v635, %v642
        %v644 = vrot.slane %v639, 4
        %v646 = vshrl.u32 %v466, 16
        %v648 = vrot.slane %v646, 7
        %v649 = vshll.u32 %v466, 16
        %v651 = vor.u32 %v648, %v649
        %v652 = vsel %vm542, %v644, %v651
        %v654 = vshrl.u32 %v468, 16
        %v656 = vrot.slane %v654, 7
        %v657 = vrot.slane %v656, 4
        %v659 = vshrl.u32 %v469, 16
        %v661 = vrot.slane %v659, 7
        %v662 = vshll.u32 %v469, 16
        %v664 = vor.u32 %v661, %v662
        %v665 = vsel %vm542, %v657, %v664
        %v666 = vrot.slane %v661, 4
        %v668 = vshrl.u32 %v470, 16
        %v670 = vrot.slane %v668, 7
        %v671 = vshll.u32 %v470, 16
        %v673 = vor.u32 %v670, %v671
        %v674 = vsel %vm542, %v666, %v673
        %v676 = vshrl.u32 %v472, 16
        %v678 = vrot.slane %v676, 7
        %v679 = vrot.slane %v678, 4
        %v681 = vshrl.u32 %v473, 16
        %v683 = vrot.slane %v681, 7
        %v684 = vshll.u32 %v473, 16
        %v686 = vor.u32 %v683, %v684
        %v687 = vsel %vm542, %v679, %v686
        %v688 = vrot.slane %v683, 4
        %v690 = vshrl.u32 %v474, 16
        %v692 = vrot.slane %v690, 7
        %v693 = vshll.u32 %v474, 16
        %v695 = vor.u32 %v692, %v693
        %v696 = vsel %vm542, %v688, %v695
        %v698 = vshrl.u32 %v476, 16
        %v700 = vrot.slane %v698, 7
        %v701 = vrot.slane %v700, 4
        %v703 = vshrl.u32 %v477, 16
        %v705 = vrot.slane %v703, 7
        %v706 = vshll.u32 %v477, 16
        %v708 = vor.u32 %v705, %v706
        %v709 = vsel %vm542, %v701, %v708
        %v710 = vrot.slane %v705, 4
        %v712 = vshrl.u32 %v478, 16
        %v714 = vrot.slane %v712, 7
        %v715 = vshll.u32 %v478, 16
        %v717 = vor.u32 %v714, %v715
        %v718 = vsel %vm542, %v710, %v717
        %v720 = vshrl.u32 %v480, 16
        %v722 = vrot.slane %v720, 7
        %v723 = vrot.slane %v722, 4
        %v725 = vshrl.u32 %v481, 16
        %v727 = vrot.slane %v725, 7
        %v728 = vshll.u32 %v481, 16
        %v730 = vor.u32 %v727, %v728
        %v731 = vsel %vm542, %v723, %v730
        %v732 = vrot.slane %v727, 4
        %v734 = vshrl.u32 %v482, 16
        %v736 = vrot.slane %v734, 7
        %v737 = vshll.u32 %v482, 16
        %v739 = vor.u32 %v736, %v737
        %v740 = vsel %vm542, %v732, %v739
        %v742 = vshrl.u32 %v484, 16
        %v744 = vrot.slane %v742, 7
        %v745 = vrot.slane %v744, 4
        %v747 = vshrl.u32 %v485, 16
        %v749 = vrot.slane %v747, 7
        %v750 = vshll.u32 %v485, 16
        %v752 = vor.u32 %v749, %v750
        %v753 = vsel %vm542, %v745, %v752
        %v754 = vrot.slane %v749, 4
        %v756 = vshrl.u32 %v486, 16
        %v758 = vrot.slane %v756, 7
        %v759 = vshll.u32 %v486, 16
        %v761 = vor.u32 %v758, %v759
        %v762 = vsel %vm542, %v754, %v761
        %v764 = vshrl.u32 %v488, 16
        %v766 = vrot.slane %v764, 7
        %v767 = vrot.slane %v766, 4
        %v769 = vshrl.u32 %v489, 16
        %v771 = vrot.slane %v769, 7
        %v772 = vshll.u32 %v489, 16
        %v774 = vor.u32 %v771, %v772
        %v775 = vsel %vm542, %v767, %v774
        %v776 = vrot.slane %v771, 4
        %v778 = vshrl.u32 %v490, 16
        %v780 = vrot.slane %v778, 7
        %v781 = vshll.u32 %v490, 16
        %v783 = vor.u32 %v780, %v781
        %v784 = vsel %vm542, %v776, %v783
        %v786 = vshrl.u32 %v492, 16
        %v788 = vrot.slane %v786, 7
        %v789 = vrot.slane %v788, 4
        %v791 = vshrl.u32 %v493, 16
        %v793 = vrot.slane %v791, 7
        %v794 = vshll.u32 %v493, 16
        %v796 = vor.u32 %v793, %v794
        %v797 = vsel %vm542, %v789, %v796
        %v798 = vrot.slane %v793, 4
        %v800 = vshrl.u32 %v494, 16
        %v802 = vrot.slane %v800, 7
        %v803 = vshll.u32 %v494, 16
        %v805 = vor.u32 %v802, %v803
        %v806 = vsel %vm542, %v798, %v805
        %v808 = vshrl.u32 %v496, 16
        %v810 = vrot.slane %v808, 7
        %v811 = vrot.slane %v810, 4
        %v813 = vshrl.u32 %v497, 16
        %v815 = vrot.slane %v813, 7
        %v816 = vshll.u32 %v497, 16
        %v818 = vor.u32 %v815, %v816
        %v819 = vsel %vm542, %v811, %v818
        %v820 = vrot.slane %v815, 4
        %v822 = vshrl.u32 %v498, 16
        %v824 = vrot.slane %v822, 7
        %v825 = vshll.u32 %v498, 16
        %v827 = vor.u32 %v824, %v825
        %v828 = vsel %vm542, %v820, %v827
        %v830 = vshrl.u32 %v500, 16
        %v832 = vrot.slane %v830, 7
        %v833 = vrot.slane %v832, 4
        %v835 = vshrl.u32 %v501, 16
        %v837 = vrot.slane %v835, 7
        %v838 = vshll.u32 %v501, 16
        %v840 = vor.u32 %v837, %v838
        %v841 = vsel %vm542, %v833, %v840
        %v842 = vrot.slane %v837, 4
        %v844 = vshrl.u32 %v502, 16
        %v846 = vrot.slane %v844, 7
        %v847 = vshll.u32 %v502, 16
        %v849 = vor.u32 %v846, %v847
        %v850 = vsel %vm542, %v842, %v849
        %v852 = vshrl.u32 %v504, 16
        %v854 = vrot.slane %v852, 7
        %v855 = vrot.slane %v854, 4
        %v857 = vshrl.u32 %v505, 16
        %v859 = vrot.slane %v857, 7
        %v860 = vshll.u32 %v505, 16
        %v862 = vor.u32 %v859, %v860
        %v863 = vsel %vm542, %v855, %v862
        %v864 = vrot.slane %v859, 4
        %v866 = vshrl.u32 %v506, 16
        %v868 = vrot.slane %v866, 7
        %v869 = vshll.u32 %v506, 16
        %v871 = vor.u32 %v868, %v869
        %v872 = vsel %vm542, %v864, %v871
        %v874 = vshrl.u32 %v508, 16
        %v876 = vrot.slane %v874, 7
        %v877 = vrot.slane %v876, 4
        %v879 = vshrl.u32 %v509, 16
        %v881 = vrot.slane %v879, 7
        %v882 = vshll.u32 %v509, 16
        %v884 = vor.u32 %v881, %v882
        %v885 = vsel %vm542, %v877, %v884
        %v886 = vrot.slane %v881, 4
        %v888 = vshrl.u32 %v510, 16
        %v890 = vrot.slane %v888, 7
        %v891 = vshll.u32 %v510, 16
        %v893 = vor.u32 %v890, %v891
        %v894 = vsel %vm542, %v886, %v893
        %v895 = vld [vmem:[#allocation5] sm:$0xf]
        %v896 = vld [vmem:[#allocation5 + $0x4] sm:$0xf]
        %v897 = vld [vmem:[#allocation5 + $0x8] sm:$0xf]
        %v898 = vld [vmem:[#allocation5 + $0xc] sm:$0xf]
        %v899 = vunpack.c.l.b16 %v555
        %v900 = vunpack.c.l.b16 %v564
        %v901 = vunpack.c.l.b16 %v577
        %v902 = vunpack.c.l.b16 %v586
        %v903 = vunpack.c.l.b16 %v599
        %v904 = vunpack.c.l.b16 %v608
        %v905 = vunpack.c.l.b16 %v621
        %v906 = vunpack.c.l.b16 %v630
        %v907 = vunpack.c.l.b16 %v643
        %v908 = vunpack.c.l.b16 %v652
        %v909 = vunpack.c.l.b16 %v665
        %v910 = vunpack.c.l.b16 %v674
        %v911 = vunpack.c.l.b16 %v687
        %v912 = vunpack.c.l.b16 %v696
        %v913 = vunpack.c.l.b16 %v709
        %v914 = vunpack.c.l.b16 %v718
        %v915 = vunpack.c.l.b16 %v731
        %v916 = vunpack.c.l.b16 %v740
        %v917 = vunpack.c.l.b16 %v753
        %v918 = vunpack.c.l.b16 %v762
        %v919 = vunpack.c.l.b16 %v775
        %v920 = vunpack.c.l.b16 %v784
        %v921 = vunpack.c.l.b16 %v797
        %v922 = vunpack.c.l.b16 %v806
        %v923 = vunpack.c.l.b16 %v819
        %v924 = vunpack.c.l.b16 %v828
        %v925 = vunpack.c.l.b16 %v841
        %v926 = vunpack.c.l.b16 %v850
        %v927 = vunpack.c.l.b16 %v863
        %v928 = vunpack.c.l.b16 %v872
        %v929 = vunpack.c.l.b16 %v885
        %v930 = vunpack.c.l.b16 %v894
        %v931 = vpack.c.b16 %v900, %v899
        %v932 = vpack.c.b16 %v902, %v901
        %v933 = vpack.c.b16 %v904, %v903
        %v934 = vpack.c.b16 %v906, %v905
        %v935 = vpack.c.b16 %v908, %v907
        %v936 = vpack.c.b16 %v910, %v909
        %v937 = vpack.c.b16 %v912, %v911
        %v938 = vpack.c.b16 %v914, %v913
        %v939 = vpack.c.b16 %v916, %v915
        %v940 = vpack.c.b16 %v918, %v917
        %v941 = vpack.c.b16 %v920, %v919
        %v942 = vpack.c.b16 %v922, %v921
        %v943 = vpack.c.b16 %v924, %v923
        %v944 = vpack.c.b16 %v926, %v925
        %v945 = vpack.c.b16 %v928, %v927
        %v946 = vpack.c.b16 %v930, %v929
        %v951 = vunpack.c.l.b16 %v895
        %v952 = vunpack.c.l.b16 %v896
        %v953 = vunpack.c.l.b16 %v897
        %v954 = vunpack.c.l.b16 %v898
        %v955 = vpack.c.b16 %v952, %v951
        %v956 = vpack.c.b16 %v954, %v953
        %vm959 = vcmask 261120
        %v961 = vsel %vm959, %v931, 0
        %v964 = vsel %vm959, %v932, 0
        %v967 = vsel %vm959, %v933, 0
        %v970 = vsel %vm959, %v934, 0
        %v973 = vsel %vm959, %v935, 0
        %v976 = vsel %vm959, %v936, 0
        %v979 = vsel %vm959, %v937, 0
        %v982 = vsel %vm959, %v938, 0
        %v985 = vsel %vm959, %v939, 0
        %v988 = vsel %vm959, %v940, 0
        %v991 = vsel %vm959, %v941, 0
        %v994 = vsel %vm959, %v942, 0
        %v997 = vsel %vm959, %v943, 0
        %v1000 = vsel %vm959, %v944, 0
        %v1003 = vsel %vm959, %v945, 0
        %v1006 = vsel %vm959, %v946, 0
        %1008 = vmatprep.subr.bf16.mxu0 0
        %1009 = vmatpush1.bf16.msra.mxu0 %v955
        %1010 = vmatprep.subr.bf16.mxu0 0
        %1011 = vmatpush1.bf16.msra.mxu0 %v956
        %1012 = vmatprep.subr.bf16.mxu0 0
        %1013 = vmatpush1.bf16.msra.mxu0 0
        %1014 = vmatprep.subr.bf16.mxu0 0
        %1015 = vmatpush1.bf16.msra.mxu0 0
        %1016 = vmatprep.subr.bf16.mxu0 0
        %1017 = vmatpush1.bf16.msra.mxu0 0
        %1018 = vmatprep.subr.bf16.mxu0 0
        %1019 = vmatpush1.bf16.msra.mxu0 0
        %1020 = vmatprep.subr.bf16.mxu0 0
        %1021 = vmatpush1.bf16.msra.mxu0 0
        %1022 = vmatprep.subr.bf16.mxu0 0
        %1023 = vmatpush1.bf16.msra.mxu0 0
        %1024 = vmatprep.subr.bf16.mxu0 0
        %1025 = vmatpush1.bf16.msra.mxu0 0
        %1026 = vmatprep.subr.bf16.mxu0 0
        %1027 = vmatpush1.bf16.msra.mxu0 0
        %1028 = vmatprep.subr.bf16.mxu0 0
        %1029 = vmatpush1.bf16.msra.mxu0 0
        %1030 = vmatprep.subr.bf16.mxu0 0
        %1031 = vmatpush1.bf16.msra.mxu0 0
        %1032 = vmatprep.subr.bf16.mxu0 0
        %1033 = vmatpush1.bf16.msra.mxu0 0
        %1034 = vmatprep.subr.bf16.mxu0 0
        %1035 = vmatpush1.bf16.msra.mxu0 0
        %1036 = vmatprep.subr.bf16.mxu0 0
        %1037 = vmatpush1.bf16.msra.mxu0 0
        %1038 = vmatprep.subr.bf16.mxu0 0
        %1039 = vmatpush1.bf16.msra.mxu0 0
        %1040 = vmatprep.mubr.bf16.mxu0 0
        %1041 = vmatmul.mubr.bf16.gmra.mrb[0].mxu0 %v961
        %v1042 = vpop.f32.mrb[0].mxu0
        %v1043 = vadd.f32 0.0, %v1042
        %v1044 = vpop.f32.mrb[0].mxu0
        %v1045 = vpop.f32.mrb[0].mxu0
        %v1046 = vadd.f32 0.0, %v1045
        %v1047 = vpop.f32.mrb[0].mxu0
        %1048 = vmatprep.mubr.bf16.mxu0 0
        %1049 = vmatmul.mubr.bf16.gmra.mrb[0].mxu0 %v964
        %v1050 = vpop.f32.mrb[0].mxu0
        %v1051 = vadd.f32 0.0, %v1050
        %v1052 = vpop.f32.mrb[0].mxu0
        %v1053 = vpop.f32.mrb[0].mxu0
        %v1054 = vadd.f32 0.0, %v1053
        %v1055 = vpop.f32.mrb[0].mxu0
        %1056 = vmatprep.mubr.bf16.mxu0 0
        %1057 = vmatmul.mubr.bf16.gmra.mrb[0].mxu0 %v967
        %v1058 = vpop.f32.mrb[0].mxu0
        %v1059 = vadd.f32 0.0, %v1058
        %v1060 = vpop.f32.mrb[0].mxu0
        %v1061 = vpop.f32.mrb[0].mxu0
        %v1062 = vadd.f32 0.0, %v1061
        %v1063 = vpop.f32.mrb[0].mxu0
        %1064 = vmatprep.mubr.bf16.mxu0 0
        %1065 = vmatmul.mubr.bf16.gmra.mrb[0].mxu0 %v970
        %v1066 = vpop.f32.mrb[0].mxu0
        %v1067 = vadd.f32 0.0, %v1066
        %v1068 = vpop.f32.mrb[0].mxu0
        %v1069 = vpop.f32.mrb[0].mxu0
        %v1070 = vadd.f32 0.0, %v1069
        %v1071 = vpop.f32.mrb[0].mxu0
        %1072 = vmatprep.mubr.bf16.mxu0 0
        %1073 = vmatmul.mubr.bf16.gmra.mrb[0].mxu0 %v973
        %v1074 = vpop.f32.mrb[0].mxu0
        %v1075 = vadd.f32 0.0, %v1074
        %v1076 = vpop.f32.mrb[0].mxu0
        %v1077 = vpop.f32.mrb[0].mxu0
        %v1078 = vadd.f32 0.0, %v1077
        %v1079 = vpop.f32.mrb[0].mxu0
        %1080 = vmatprep.mubr.bf16.mxu0 0
        %1081 = vmatmul.mubr.bf16.gmra.mrb[0].mxu0 %v976
        %v1082 = vpop.f32.mrb[0].mxu0
        %v1083 = vadd.f32 0.0, %v1082
        %v1084 = vpop.f32.mrb[0].mxu0
        %v1085 = vpop.f32.mrb[0].mxu0
        %v1086 = vadd.f32 0.0, %v1085
        %v1087 = vpop.f32.mrb[0].mxu0
        %1088 = vmatprep.mubr.bf16.mxu0 0
        %1089 = vmatmul.mubr.bf16.gmra.mrb[0].mxu0 %v979
        %v1090 = vpop.f32.mrb[0].mxu0
        %v1091 = vadd.f32 0.0, %v1090
        %v1092 = vpop.f32.mrb[0].mxu0
        %v1093 = vpop.f32.mrb[0].mxu0
        %v1094 = vadd.f32 0.0, %v1093
        %v1095 = vpop.f32.mrb[0].mxu0
        %1096 = vmatprep.mubr.bf16.mxu0 0
        %1097 = vmatmul.mubr.bf16.gmra.mrb[0].mxu0 %v982
        %v1098 = vpop.f32.mrb[0].mxu0
        %v1099 = vadd.f32 0.0, %v1098
        %v1100 = vpop.f32.mrb[0].mxu0
        %v1101 = vpop.f32.mrb[0].mxu0
        %v1102 = vadd.f32 0.0, %v1101
        %v1103 = vpop.f32.mrb[0].mxu0
        %1104 = vmatprep.mubr.bf16.mxu0 0
        %1105 = vmatmul.mubr.bf16.gmra.mrb[0].mxu0 %v985
        %v1106 = vpop.f32.mrb[0].mxu0
        %v1107 = vadd.f32 0.0, %v1106
        %v1108 = vpop.f32.mrb[0].mxu0
        %v1109 = vpop.f32.mrb[0].mxu0
        %v1110 = vadd.f32 0.0, %v1109
        %v1111 = vpop.f32.mrb[0].mxu0
        %1112 = vmatprep.mubr.bf16.mxu0 0
        %1113 = vmatmul.mubr.bf16.gmra.mrb[0].mxu0 %v988
        %v1114 = vpop.f32.mrb[0].mxu0
        %v1115 = vadd.f32 0.0, %v1114
        %v1116 = vpop.f32.mrb[0].mxu0
        %v1117 = vpop.f32.mrb[0].mxu0
        %v1118 = vadd.f32 0.0, %v1117
        %v1119 = vpop.f32.mrb[0].mxu0
        %1120 = vmatprep.mubr.bf16.mxu0 0
        %1121 = vmatmul.mubr.bf16.gmra.mrb[0].mxu0 %v991
        %v1122 = vpop.f32.mrb[0].mxu0
        %v1123 = vadd.f32 0.0, %v1122
        %v1124 = vpop.f32.mrb[0].mxu0
        %v1125 = vpop.f32.mrb[0].mxu0
        %v1126 = vadd.f32 0.0, %v1125
        %v1127 = vpop.f32.mrb[0].mxu0
        %1128 = vmatprep.mubr.bf16.mxu0 0
        %1129 = vmatmul.mubr.bf16.gmra.mrb[0].mxu0 %v994
        %v1130 = vpop.f32.mrb[0].mxu0
        %v1131 = vadd.f32 0.0, %v1130
        %v1132 = vpop.f32.mrb[0].mxu0
        %v1133 = vpop.f32.mrb[0].mxu0
        %v1134 = vadd.f32 0.0, %v1133
        %v1135 = vpop.f32.mrb[0].mxu0
        %1136 = vmatprep.mubr.bf16.mxu0 0
        %1137 = vmatmul.mubr.bf16.gmra.mrb[0].mxu0 %v997
        %v1138 = vpop.f32.mrb[0].mxu0
        %v1139 = vadd.f32 0.0, %v1138
        %v1140 = vpop.f32.mrb[0].mxu0
        %v1141 = vpop.f32.mrb[0].mxu0
        %v1142 = vadd.f32 0.0, %v1141
        %v1143 = vpop.f32.mrb[0].mxu0
        %1144 = vmatprep.mubr.bf16.mxu0 0
        %1145 = vmatmul.mubr.bf16.gmra.mrb[0].mxu0 %v1000
        %v1146 = vpop.f32.mrb[0].mxu0
        %v1147 = vadd.f32 0.0, %v1146
        %v1148 = vpop.f32.mrb[0].mxu0
        %v1149 = vpop.f32.mrb[0].mxu0
        %v1150 = vadd.f32 0.0, %v1149
        %v1151 = vpop.f32.mrb[0].mxu0
        %1152 = vmatprep.mubr.bf16.mxu0 0
        %1153 = vmatmul.mubr.bf16.gmra.mrb[0].mxu0 %v1003
        %v1154 = vpop.f32.mrb[0].mxu0
        %v1155 = vadd.f32 0.0, %v1154
        %v1156 = vpop.f32.mrb[0].mxu0
        %v1157 = vpop.f32.mrb[0].mxu0
        %v1158 = vadd.f32 0.0, %v1157
        %v1159 = vpop.f32.mrb[0].mxu0
        %1160 = vmatprep.mubr.bf16.mxu0 0
        %1161 = vmatmul.mubr.bf16.gmra.mrb[0].mxu0 %v1006
        %v1162 = vpop.f32.mrb[0].mxu0
        %v1163 = vadd.f32 0.0, %v1162
        %v1164 = vpop.f32.mrb[0].mxu0
        %v1165 = vpop.f32.mrb[0].mxu0
        %v1166 = vadd.f32 0.0, %v1165
        %v1167 = vpop.f32.mrb[0].mxu0
        %1168 = vdwg.mxu0
        %v1169 = vld [vmem:[#allocation8] sm:$0x1]
        %v1171 = vlaneseq
        %v1172 = vshrl.u32 %v1171, 7
        %v1173 = vsub.s32 0, %v1172
        %v1174 = vrot.slane %v1169, %v1173
        %v1176 = vmul.f32 %v1043, %v1174
        %v1177 = vmul.f32 %v1046, %v1174
        %v1178 = vmul.f32 %v1051, %v1174
        %v1179 = vmul.f32 %v1054, %v1174
        %v1180 = vmul.f32 %v1059, %v1174
        %v1181 = vmul.f32 %v1062, %v1174
        %v1182 = vmul.f32 %v1067, %v1174
        %v1183 = vmul.f32 %v1070, %v1174
        %v1184 = vmul.f32 %v1075, %v1174
        %v1185 = vmul.f32 %v1078, %v1174
        %v1186 = vmul.f32 %v1083, %v1174
        %v1187 = vmul.f32 %v1086, %v1174
        %v1188 = vmul.f32 %v1091, %v1174
        %v1189 = vmul.f32 %v1094, %v1174
        %v1190 = vmul.f32 %v1099, %v1174
        %v1191 = vmul.f32 %v1102, %v1174
        %v1192 = vmul.f32 %v1107, %v1174
        %v1193 = vmul.f32 %v1110, %v1174
        %v1194 = vmul.f32 %v1115, %v1174
        %v1195 = vmul.f32 %v1118, %v1174
        %v1196 = vmul.f32 %v1123, %v1174
        %v1197 = vmul.f32 %v1126, %v1174
        %v1198 = vmul.f32 %v1131, %v1174
        %v1199 = vmul.f32 %v1134, %v1174
        %v1200 = vmul.f32 %v1139, %v1174
        %v1201 = vmul.f32 %v1142, %v1174
        %v1202 = vmul.f32 %v1147, %v1174
        %v1203 = vmul.f32 %v1150, %v1174
        %v1204 = vmul.f32 %v1155, %v1174
        %v1205 = vmul.f32 %v1158, %v1174
        %v1206 = vmul.f32 %v1163, %v1174
        %v1207 = vmul.f32 %v1166, %v1174
        %v1208 = vld [vmem:[#allocation10] sm:$0x1]
        %v1210 = vlaneseq
        %v1211 = vshrl.u32 %v1210, 7
        %v1212 = vsub.s32 0, %v1211
        %v1213 = vrot.slane %v1208, %v1212
        %v1215 = vadd.f32 %v1176, %v1213
        %v1216 = vadd.f32 %v1177, %v1213
        %v1217 = vadd.f32 %v1178, %v1213
        %v1218 = vadd.f32 %v1179, %v1213
        %v1219 = vadd.f32 %v1180, %v1213
        %v1220 = vadd.f32 %v1181, %v1213
        %v1221 = vadd.f32 %v1182, %v1213
        %v1222 = vadd.f32 %v1183, %v1213
        %v1223 = vadd.f32 %v1184, %v1213
        %v1224 = vadd.f32 %v1185, %v1213
        %v1225 = vadd.f32 %v1186, %v1213
        %v1226 = vadd.f32 %v1187, %v1213
        %v1227 = vadd.f32 %v1188, %v1213
        %v1228 = vadd.f32 %v1189, %v1213
        %v1229 = vadd.f32 %v1190, %v1213
        %v1230 = vadd.f32 %v1191, %v1213
        %v1231 = vadd.f32 %v1192, %v1213
        %v1232 = vadd.f32 %v1193, %v1213
        %v1233 = vadd.f32 %v1194, %v1213
        %v1234 = vadd.f32 %v1195, %v1213
        %v1235 = vadd.f32 %v1196, %v1213
        %v1236 = vadd.f32 %v1197, %v1213
        %v1237 = vadd.f32 %v1198, %v1213
        %v1238 = vadd.f32 %v1199, %v1213
        %v1239 = vadd.f32 %v1200, %v1213
        %v1240 = vadd.f32 %v1201, %v1213
        %v1241 = vadd.f32 %v1202, %v1213
        %v1242 = vadd.f32 %v1203, %v1213
        %v1243 = vadd.f32 %v1204, %v1213
        %v1244 = vadd.f32 %v1205, %v1213
        %v1245 = vadd.f32 %v1206, %v1213
        %v1246 = vadd.f32 %v1207, %v1213
        %v1247 = vmax.f32 %v1215, 0.0
        %v1248 = vmax.f32 %v1216, 0.0
        %v1249 = vmax.f32 %v1217, 0.0
        %v1250 = vmax.f32 %v1218, 0.0
        %v1251 = vmax.f32 %v1219, 0.0
        %v1252 = vmax.f32 %v1220, 0.0
        %v1253 = vmax.f32 %v1221, 0.0
        %v1254 = vmax.f32 %v1222, 0.0
        %v1255 = vmax.f32 %v1223, 0.0
        %v1256 = vmax.f32 %v1224, 0.0
        %v1257 = vmax.f32 %v1225, 0.0
        %v1258 = vmax.f32 %v1226, 0.0
        %v1259 = vmax.f32 %v1227, 0.0
        %v1260 = vmax.f32 %v1228, 0.0
        %v1261 = vmax.f32 %v1229, 0.0
        %v1262 = vmax.f32 %v1230, 0.0
        %v1263 = vmax.f32 %v1231, 0.0
        %v1264 = vmax.f32 %v1232, 0.0
        %v1265 = vmax.f32 %v1233, 0.0
        %v1266 = vmax.f32 %v1234, 0.0
        %v1267 = vmax.f32 %v1235, 0.0
        %v1268 = vmax.f32 %v1236, 0.0
        %v1269 = vmax.f32 %v1237, 0.0
        %v1270 = vmax.f32 %v1238, 0.0
        %v1271 = vmax.f32 %v1239, 0.0
        %v1272 = vmax.f32 %v1240, 0.0
        %v1273 = vmax.f32 %v1241, 0.0
        %v1274 = vmax.f32 %v1242, 0.0
        %v1275 = vmax.f32 %v1243, 0.0
        %v1276 = vmax.f32 %v1244, 0.0
        %v1277 = vmax.f32 %v1245, 0.0
        %v1278 = vmax.f32 %v1246, 0.0
        %vm1327 = vcmask 1041408
        %vm1328 = vcmask 1045508
        %vm1329 = vmor %vm1327, %vm1328
        %v1330 = vrot.slane %v436, 6
        %v1331 = vrot.slane %v1330, 4
        %v1332 = vrot.slane %v437, 6
        %v1333 = vsel %vm1329, %v1331, %v1332
        %v1334 = vrot.slane %v1332, 4
        %v1335 = vrot.slane %v438, 6
        %v1336 = vsel %vm1329, %v1334, %v1335
        %v1337 = vrot.slane %v440, 6
        %v1338 = vrot.slane %v1337, 4
        %v1339 = vrot.slane %v441, 6
        %v1340 = vsel %vm1329, %v1338, %v1339
        %v1341 = vrot.slane %v1339, 4
        %v1342 = vrot.slane %v442, 6
        %v1343 = vsel %vm1329, %v1341, %v1342
        %v1344 = vrot.slane %v444, 6
        %v1345 = vrot.slane %v1344, 4
        %v1346 = vrot.slane %v445, 6
        %v1347 = vsel %vm1329, %v1345, %v1346
        %v1348 = vrot.slane %v1346, 4
        %v1349 = vrot.slane %v446, 6
        %v1350 = vsel %vm1329, %v1348, %v1349
        %v1351 = vrot.slane %v448, 6
        %v1352 = vrot.slane %v1351, 4
        %v1353 = vrot.slane %v449, 6
        %v1354 = vsel %vm1329, %v1352, %v1353
        %v1355 = vrot.slane %v1353, 4
        %v1356 = vrot.slane %v450, 6
        %v1357 = vsel %vm1329, %v1355, %v1356
        %v1358 = vrot.slane %v452, 6
        %v1359 = vrot.slane %v1358, 4
        %v1360 = vrot.slane %v453, 6
        %v1361 = vsel %vm1329, %v1359, %v1360
        %v1362 = vrot.slane %v1360, 4
        %v1363 = vrot.slane %v454, 6
        %v1364 = vsel %vm1329, %v1362, %v1363
        %v1365 = vrot.slane %v456, 6
        %v1366 = vrot.slane %v1365, 4
        %v1367 = vrot.slane %v457, 6
        %v1368 = vsel %vm1329, %v1366, %v1367
        %v1369 = vrot.slane %v1367, 4
        %v1370 = vrot.slane %v458, 6
        %v1371 = vsel %vm1329, %v1369, %v1370
        %v1372 = vrot.slane %v460, 6
        %v1373 = vrot.slane %v1372, 4
        %v1374 = vrot.slane %v461, 6
        %v1375 = vsel %vm1329, %v1373, %v1374
        %v1376 = vrot.slane %v1374, 4
        %v1377 = vrot.slane %v462, 6
        %v1378 = vsel %vm1329, %v1376, %v1377
        %v1379 = vrot.slane %v464, 6
        %v1380 = vrot.slane %v1379, 4
        %v1381 = vrot.slane %v465, 6
        %v1382 = vsel %vm1329, %v1380, %v1381
        %v1383 = vrot.slane %v1381, 4
        %v1384 = vrot.slane %v466, 6
        %v1385 = vsel %vm1329, %v1383, %v1384
        %v1386 = vrot.slane %v468, 6
        %v1387 = vrot.slane %v1386, 4
        %v1388 = vrot.slane %v469, 6
        %v1389 = vsel %vm1329, %v1387, %v1388
        %v1390 = vrot.slane %v1388, 4
        %v1391 = vrot.slane %v470, 6
        %v1392 = vsel %vm1329, %v1390, %v1391
        %v1393 = vrot.slane %v472, 6
        %v1394 = vrot.slane %v1393, 4
        %v1395 = vrot.slane %v473, 6
        %v1396 = vsel %vm1329, %v1394, %v1395
        %v1397 = vrot.slane %v1395, 4
        %v1398 = vrot.slane %v474, 6
        %v1399 = vsel %vm1329, %v1397, %v1398
        %v1400 = vrot.slane %v476, 6
        %v1401 = vrot.slane %v1400, 4
        %v1402 = vrot.slane %v477, 6
        %v1403 = vsel %vm1329, %v1401, %v1402
        %v1404 = vrot.slane %v1402, 4
        %v1405 = vrot.slane %v478, 6
        %v1406 = vsel %vm1329, %v1404, %v1405
        %v1407 = vrot.slane %v480, 6
        %v1408 = vrot.slane %v1407, 4
        %v1409 = vrot.slane %v481, 6
        %v1410 = vsel %vm1329, %v1408, %v1409
        %v1411 = vrot.slane %v1409, 4
        %v1412 = vrot.slane %v482, 6
        %v1413 = vsel %vm1329, %v1411, %v1412
        %v1414 = vrot.slane %v484, 6
        %v1415 = vrot.slane %v1414, 4
        %v1416 = vrot.slane %v485, 6
        %v1417 = vsel %vm1329, %v1415, %v1416
        %v1418 = vrot.slane %v1416, 4
        %v1419 = vrot.slane %v486, 6
        %v1420 = vsel %vm1329, %v1418, %v1419
        %v1421 = vrot.slane %v488, 6
        %v1422 = vrot.slane %v1421, 4
        %v1423 = vrot.slane %v489, 6
        %v1424 = vsel %vm1329, %v1422, %v1423
        %v1425 = vrot.slane %v1423, 4
        %v1426 = vrot.slane %v490, 6
        %v1427 = vsel %vm1329, %v1425, %v1426
        %v1428 = vrot.slane %v492, 6
        %v1429 = vrot.slane %v1428, 4
        %v1430 = vrot.slane %v493, 6
        %v1431 = vsel %vm1329, %v1429, %v1430
        %v1432 = vrot.slane %v1430, 4
        %v1433 = vrot.slane %v494, 6
        %v1434 = vsel %vm1329, %v1432, %v1433
        %v1435 = vrot.slane %v496, 6
        %v1436 = vrot.slane %v1435, 4
        %v1437 = vrot.slane %v497, 6
        %v1438 = vsel %vm1329, %v1436, %v1437
        %v1439 = vrot.slane %v1437, 4
        %v1440 = vrot.slane %v498, 6
        %v1441 = vsel %vm1329, %v1439, %v1440
        %v1443 = vshrl.u32 %v436, 16
        %v1445 = vrot.slane %v1443, 7
        %v1446 = vrot.slane %v1445, 4
        %v1448 = vshrl.u32 %v437, 16
        %v1450 = vrot.slane %v1448, 7
        %v1451 = vshll.u32 %v437, 16
        %v1453 = vor.u32 %v1450, %v1451
        %v1454 = vsel %vm542, %v1446, %v1453
        %v1455 = vrot.slane %v1450, 4
        %v1457 = vshrl.u32 %v438, 16
        %v1459 = vrot.slane %v1457, 7
        %v1460 = vshll.u32 %v438, 16
        %v1462 = vor.u32 %v1459, %v1460
        %v1463 = vsel %vm542, %v1455, %v1462
        %v1465 = vshrl.u32 %v440, 16
        %v1467 = vrot.slane %v1465, 7
        %v1468 = vrot.slane %v1467, 4
        %v1470 = vshrl.u32 %v441, 16
        %v1472 = vrot.slane %v1470, 7
        %v1473 = vshll.u32 %v441, 16
        %v1475 = vor.u32 %v1472, %v1473
        %v1476 = vsel %vm542, %v1468, %v1475
        %v1477 = vrot.slane %v1472, 4
        %v1479 = vshrl.u32 %v442, 16
        %v1481 = vrot.slane %v1479, 7
        %v1482 = vshll.u32 %v442, 16
        %v1484 = vor.u32 %v1481, %v1482
        %v1485 = vsel %vm542, %v1477, %v1484
        %v1487 = vshrl.u32 %v444, 16
        %v1489 = vrot.slane %v1487, 7
        %v1490 = vrot.slane %v1489, 4
        %v1492 = vshrl.u32 %v445, 16
        %v1494 = vrot.slane %v1492, 7
        %v1495 = vshll.u32 %v445, 16
        %v1497 = vor.u32 %v1494, %v1495
        %v1498 = vsel %vm542, %v1490, %v1497
        %v1499 = vrot.slane %v1494, 4
        %v1501 = vshrl.u32 %v446, 16
        %v1503 = vrot.slane %v1501, 7
        %v1504 = vshll.u32 %v446, 16
        %v1506 = vor.u32 %v1503, %v1504
        %v1507 = vsel %vm542, %v1499, %v1506
        %vm1524 = vcmask 1042432
        %vm1525 = vcmask 1046532
        %vm1526 = vmor %vm1524, %vm1525
        %v1527 = vrot.slane %v437, 5
        %v1528 = vrot.slane %v1527, 4
        %v1529 = vrot.slane %v438, 5
        %v1530 = vsel %vm1526, %v1528, %v1529
        %v1531 = vrot.slane %v1529, 4
        %v1532 = vrot.slane %v439, 5
        %v1533 = vsel %vm1526, %v1531, %v1532
        %v1534 = vrot.slane %v441, 5
        %v1535 = vrot.slane %v1534, 4
        %v1536 = vrot.slane %v442, 5
        %v1537 = vsel %vm1526, %v1535, %v1536
        %v1538 = vrot.slane %v1536, 4
        %v1539 = vrot.slane %v443, 5
        %v1540 = vsel %vm1526, %v1538, %v1539
        %v1541 = vrot.slane %v445, 5
        %v1542 = vrot.slane %v1541, 4
        %v1543 = vrot.slane %v446, 5
        %v1544 = vsel %vm1526, %v1542, %v1543
        %v1545 = vrot.slane %v1543, 4
        %v1546 = vrot.slane %v447, 5
        %v1547 = vsel %vm1526, %v1545, %v1546
        %v1548 = vrot.slane %v449, 5
        %v1549 = vrot.slane %v1548, 4
        %v1550 = vrot.slane %v450, 5
        %v1551 = vsel %vm1526, %v1549, %v1550
        %v1552 = vrot.slane %v1550, 4
        %v1553 = vrot.slane %v451, 5
        %v1554 = vsel %vm1526, %v1552, %v1553
        %v1555 = vrot.slane %v453, 5
        %v1556 = vrot.slane %v1555, 4
        %v1557 = vrot.slane %v454, 5
        %v1558 = vsel %vm1526, %v1556, %v1557
        %v1559 = vrot.slane %v1557, 4
        %v1560 = vrot.slane %v455, 5
        %v1561 = vsel %vm1526, %v1559, %v1560
        %v1562 = vrot.slane %v457, 5
        %v1563 = vrot.slane %v1562, 4
        %v1564 = vrot.slane %v458, 5
        %v1565 = vsel %vm1526, %v1563, %v1564
        %v1566 = vrot.slane %v1564, 4
        %v1567 = vrot.slane %v459, 5
        %v1568 = vsel %vm1526, %v1566, %v1567
        %v1569 = vrot.slane %v461, 5
        %v1570 = vrot.slane %v1569, 4
        %v1571 = vrot.slane %v462, 5
        %v1572 = vsel %vm1526, %v1570, %v1571
        %v1573 = vrot.slane %v1571, 4
        %v1574 = vrot.slane %v463, 5
        %v1575 = vsel %vm1526, %v1573, %v1574
        %v1576 = vrot.slane %v465, 5
        %v1577 = vrot.slane %v1576, 4
        %v1578 = vrot.slane %v466, 5
        %v1579 = vsel %vm1526, %v1577, %v1578
        %v1580 = vrot.slane %v1578, 4
        %v1581 = vrot.slane %v467, 5
        %v1582 = vsel %vm1526, %v1580, %v1581
        %v1583 = vrot.slane %v469, 5
        %v1584 = vrot.slane %v1583, 4
        %v1585 = vrot.slane %v470, 5
        %v1586 = vsel %vm1526, %v1584, %v1585
        %v1587 = vrot.slane %v1585, 4
        %v1588 = vrot.slane %v471, 5
        %v1589 = vsel %vm1526, %v1587, %v1588
        %v1590 = vrot.slane %v473, 5
        %v1591 = vrot.slane %v1590, 4
        %v1592 = vrot.slane %v474, 5
        %v1593 = vsel %vm1526, %v1591, %v1592
        %v1594 = vrot.slane %v1592, 4
        %v1595 = vrot.slane %v475, 5
        %v1596 = vsel %vm1526, %v1594, %v1595
        %v1597 = vrot.slane %v477, 5
        %v1598 = vrot.slane %v1597, 4
        %v1599 = vrot.slane %v478, 5
        %v1600 = vsel %vm1526, %v1598, %v1599
        %v1601 = vrot.slane %v1599, 4
        %v1602 = vrot.slane %v479, 5
        %v1603 = vsel %vm1526, %v1601, %v1602
        %v1604 = vrot.slane %v481, 5
        %v1605 = vrot.slane %v1604, 4
        %v1606 = vrot.slane %v482, 5
        %v1607 = vsel %vm1526, %v1605, %v1606
        %v1608 = vrot.slane %v1606, 4
        %v1609 = vrot.slane %v483, 5
        %v1610 = vsel %vm1526, %v1608, %v1609
        %v1611 = vrot.slane %v485, 5
        %v1612 = vrot.slane %v1611, 4
        %v1613 = vrot.slane %v486, 5
        %v1614 = vsel %vm1526, %v1612, %v1613
        %v1615 = vrot.slane %v1613, 4
        %v1616 = vrot.slane %v487, 5
        %v1617 = vsel %vm1526, %v1615, %v1616
        %v1618 = vrot.slane %v489, 5
        %v1619 = vrot.slane %v1618, 4
        %v1620 = vrot.slane %v490, 5
        %v1621 = vsel %vm1526, %v1619, %v1620
        %v1622 = vrot.slane %v1620, 4
        %v1623 = vrot.slane %v491, 5
        %v1624 = vsel %vm1526, %v1622, %v1623
        %v1625 = vrot.slane %v493, 5
        %v1626 = vrot.slane %v1625, 4
        %v1627 = vrot.slane %v494, 5
        %v1628 = vsel %vm1526, %v1626, %v1627
        %v1629 = vrot.slane %v1627, 4
        %v1630 = vrot.slane %v495, 5
        %v1631 = vsel %vm1526, %v1629, %v1630
        %v1632 = vrot.slane %v497, 5
        %v1633 = vrot.slane %v1632, 4
        %v1634 = vrot.slane %v498, 5
        %v1635 = vsel %vm1526, %v1633, %v1634
        %v1636 = vrot.slane %v1634, 4
        %v1637 = vrot.slane %v499, 5
        %v1638 = vsel %vm1526, %v1636, %v1637
        %v1648 = vrot.slane %v500, 6
        %v1649 = vrot.slane %v1648, 4
        %v1650 = vrot.slane %v501, 6
        %v1651 = vsel %vm1329, %v1649, %v1650
        %v1652 = vrot.slane %v1650, 4
        %v1653 = vrot.slane %v502, 6
        %v1654 = vsel %vm1329, %v1652, %v1653
        %v1655 = vrot.slane %v504, 6
        %v1656 = vrot.slane %v1655, 4
        %v1657 = vrot.slane %v505, 6
        %v1658 = vsel %vm1329, %v1656, %v1657
        %v1659 = vrot.slane %v1657, 4
        %v1660 = vrot.slane %v506, 6
        %v1661 = vsel %vm1329, %v1659, %v1660
        %v1662 = vrot.slane %v508, 6
        %v1663 = vrot.slane %v1662, 4
        %v1664 = vrot.slane %v509, 6
        %v1665 = vsel %vm1329, %v1663, %v1664
        %v1666 = vrot.slane %v1664, 4
        %v1667 = vrot.slane %v510, 6
        %v1668 = vsel %vm1329, %v1666, %v1667
        %v1672 = vrot.slane %v501, 5
        %v1673 = vrot.slane %v1672, 4
        %v1674 = vrot.slane %v502, 5
        %v1675 = vsel %vm1526, %v1673, %v1674
        %v1676 = vrot.slane %v1674, 4
        %v1677 = vrot.slane %v503, 5
        %v1678 = vsel %vm1526, %v1676, %v1677
        %v1679 = vrot.slane %v505, 5
        %v1680 = vrot.slane %v1679, 4
        %v1681 = vrot.slane %v506, 5
        %v1682 = vsel %vm1526, %v1680, %v1681
        %v1683 = vrot.slane %v1681, 4
        %v1684 = vrot.slane %v507, 5
        %v1685 = vsel %vm1526, %v1683, %v1684
        %v1686 = vrot.slane %v509, 5
        %v1687 = vrot.slane %v1686, 4
        %v1688 = vrot.slane %v510, 5
        %v1689 = vsel %vm1526, %v1687, %v1688
        %v1690 = vrot.slane %v1688, 4
        %v1691 = vrot.slane %v511, 5
        %v1692 = vsel %vm1526, %v1690, %v1691
        %v1702 = vrot.slane %v512, 6
        %v1703 = vrot.slane %v1702, 4
        %v1704 = vrot.slane %v513, 6
        %v1705 = vsel %vm1329, %v1703, %v1704
        %v1706 = vrot.slane %v1704, 4
        %v1707 = vrot.slane %v514, 6
        %v1708 = vsel %vm1329, %v1706, %v1707
        %v1709 = vrot.slane %v516, 6
        %v1710 = vrot.slane %v1709, 4
        %v1711 = vrot.slane %v517, 6
        %v1712 = vsel %vm1329, %v1710, %v1711
        %v1713 = vrot.slane %v1711, 4
        %v1714 = vrot.slane %v518, 6
        %v1715 = vsel %vm1329, %v1713, %v1714
        %v1716 = vrot.slane %v520, 6
        %v1717 = vrot.slane %v1716, 4
        %v1718 = vrot.slane %v521, 6
        %v1719 = vsel %vm1329, %v1717, %v1718
        %v1720 = vrot.slane %v1718, 4
        %v1721 = vrot.slane %v522, 6
        %v1722 = vsel %vm1329, %v1720, %v1721
        %v1724 = vshrl.u32 %v512, 16
        %v1726 = vrot.slane %v1724, 7
        %v1727 = vrot.slane %v1726, 4
        %v1729 = vshrl.u32 %v513, 16
        %v1731 = vrot.slane %v1729, 7
        %v1732 = vshll.u32 %v513, 16
        %v1734 = vor.u32 %v1731, %v1732
        %v1735 = vsel %vm542, %v1727, %v1734
        %v1736 = vrot.slane %v1731, 4
        %v1738 = vshrl.u32 %v514, 16
        %v1740 = vrot.slane %v1738, 7
        %v1741 = vshll.u32 %v514, 16
        %v1743 = vor.u32 %v1740, %v1741
        %v1744 = vsel %vm542, %v1736, %v1743
        %v1746 = vshrl.u32 %v516, 16
        %v1748 = vrot.slane %v1746, 7
        %v1749 = vrot.slane %v1748, 4
        %v1751 = vshrl.u32 %v517, 16
        %v1753 = vrot.slane %v1751, 7
        %v1754 = vshll.u32 %v517, 16
        %v1756 = vor.u32 %v1753, %v1754
        %v1757 = vsel %vm542, %v1749, %v1756
        %v1758 = vrot.slane %v1753, 4
        %v1760 = vshrl.u32 %v518, 16
        %v1762 = vrot.slane %v1760, 7
        %v1763 = vshll.u32 %v518, 16
        %v1765 = vor.u32 %v1762, %v1763
        %v1766 = vsel %vm542, %v1758, %v1765
        %v1768 = vshrl.u32 %v520, 16
        %v1770 = vrot.slane %v1768, 7
        %v1771 = vrot.slane %v1770, 4
        %v1773 = vshrl.u32 %v521, 16
        %v1775 = vrot.slane %v1773, 7
        %v1776 = vshll.u32 %v521, 16
        %v1778 = vor.u32 %v1775, %v1776
        %v1779 = vsel %vm542, %v1771, %v1778
        %v1780 = vrot.slane %v1775, 4
        %v1782 = vshrl.u32 %v522, 16
        %v1784 = vrot.slane %v1782, 7
        %v1785 = vshll.u32 %v522, 16
        %v1787 = vor.u32 %v1784, %v1785
        %v1788 = vsel %vm542, %v1780, %v1787
        %v1792 = vrot.slane %v513, 5
        %v1793 = vrot.slane %v1792, 4
        %v1794 = vrot.slane %v514, 5
        %v1795 = vsel %vm1526, %v1793, %v1794
        %v1796 = vrot.slane %v1794, 4
        %v1797 = vrot.slane %v515, 5
        %v1798 = vsel %vm1526, %v1796, %v1797
        %v1799 = vrot.slane %v517, 5
        %v1800 = vrot.slane %v1799, 4
        %v1801 = vrot.slane %v518, 5
        %v1802 = vsel %vm1526, %v1800, %v1801
        %v1803 = vrot.slane %v1801, 4
        %v1804 = vrot.slane %v519, 5
        %v1805 = vsel %vm1526, %v1803, %v1804
        %v1806 = vrot.slane %v521, 5
        %v1807 = vrot.slane %v1806, 4
        %v1808 = vrot.slane %v522, 5
        %v1809 = vsel %vm1526, %v1807, %v1808
        %v1810 = vrot.slane %v1808, 4
        %v1811 = vrot.slane %v523, 5
        %v1812 = vsel %vm1526, %v1810, %v1811
        %v1813 = vunpack.c.l.b16 %v1333
        %v1814 = vunpack.c.l.b16 %v1336
        %v1815 = vunpack.c.l.b16 %v1340
        %v1816 = vunpack.c.l.b16 %v1343
        %v1817 = vunpack.c.l.b16 %v1347
        %v1818 = vunpack.c.l.b16 %v1350
        %v1819 = vunpack.c.l.b16 %v1354
        %v1820 = vunpack.c.l.b16 %v1357
        %v1821 = vunpack.c.l.b16 %v1361
        %v1822 = vunpack.c.l.b16 %v1364
        %v1823 = vunpack.c.l.b16 %v1368
        %v1824 = vunpack.c.l.b16 %v1371
        %v1825 = vunpack.c.l.b16 %v1375
        %v1826 = vunpack.c.l.b16 %v1378
        %v1827 = vunpack.c.l.b16 %v1382
        %v1828 = vunpack.c.l.b16 %v1385
        %v1829 = vunpack.c.l.b16 %v1389
        %v1830 = vunpack.c.l.b16 %v1392
        %v1831 = vunpack.c.l.b16 %v1396
        %v1832 = vunpack.c.l.b16 %v1399
        %v1833 = vunpack.c.l.b16 %v1403
        %v1834 = vunpack.c.l.b16 %v1406
        %v1835 = vunpack.c.l.b16 %v1410
        %v1836 = vunpack.c.l.b16 %v1413
        %v1837 = vunpack.c.l.b16 %v1417
        %v1838 = vunpack.c.l.b16 %v1420
        %v1839 = vunpack.c.l.b16 %v1424
        %v1840 = vunpack.c.l.b16 %v1427
        %v1841 = vunpack.c.l.b16 %v1431
        %v1842 = vunpack.c.l.b16 %v1434
        %v1843 = vunpack.c.l.b16 %v1438
        %v1844 = vunpack.c.l.b16 %v1441
        %v1845 = vpack.c.b16 %v1814, %v1813
        %v1846 = vpack.c.b16 %v1816, %v1815
        %v1847 = vpack.c.b16 %v1818, %v1817
        %v1848 = vpack.c.b16 %v1820, %v1819
        %v1849 = vpack.c.b16 %v1822, %v1821
        %v1850 = vpack.c.b16 %v1824, %v1823
        %v1851 = vpack.c.b16 %v1826, %v1825
        %v1852 = vpack.c.b16 %v1828, %v1827
        %v1853 = vpack.c.b16 %v1830, %v1829
        %v1854 = vpack.c.b16 %v1832, %v1831
        %v1855 = vpack.c.b16 %v1834, %v1833
        %v1856 = vpack.c.b16 %v1836, %v1835
        %v1857 = vpack.c.b16 %v1838, %v1837
        %v1858 = vpack.c.b16 %v1840, %v1839
        %v1859 = vpack.c.b16 %v1842, %v1841
        %v1860 = vpack.c.b16 %v1844, %v1843
        %v1861 = vunpack.c.l.b16 %v1454
        %v1862 = vunpack.c.l.b16 %v1463
        %v1863 = vunpack.c.l.b16 %v1476
        %v1864 = vunpack.c.l.b16 %v1485
        %v1865 = vunpack.c.l.b16 %v1498
        %v1866 = vunpack.c.l.b16 %v1507
        %v1867 = vpack.c.b16 %v1862, %v1861
        %v1868 = vpack.c.b16 %v1864, %v1863
        %v1869 = vpack.c.b16 %v1866, %v1865
        %1870 = vrot.lane.b32.xlu0 %v1867, 32
        %v1871 = vpop.permute.xlu0 %1870
        %1872 = vrot.lane.b32.xlu0 %v1868, 32
        %v1873 = vpop.permute.xlu0 %1872
        %1874 = vrot.lane.b32.xlu0 %v1869, 32
        %v1875 = vpop.permute.xlu0 %1874
        %1876 = vrot.lane.b32.xlu0 %v931, 32
        %v1877 = vpop.permute.xlu0 %1876
        %1878 = vrot.lane.b32.xlu0 %v932, 32
        %v1879 = vpop.permute.xlu0 %1878
        %1880 = vrot.lane.b32.xlu0 %v933, 32
        %v1881 = vpop.permute.xlu0 %1880
        %1882 = vrot.lane.b32.xlu0 %v934, 32
        %v1883 = vpop.permute.xlu0 %1882
        %1884 = vrot.lane.b32.xlu0 %v935, 32
        %v1885 = vpop.permute.xlu0 %1884
        %1886 = vrot.lane.b32.xlu0 %v936, 32
        %v1887 = vpop.permute.xlu0 %1886
        %1888 = vrot.lane.b32.xlu0 %v937, 32
        %v1889 = vpop.permute.xlu0 %1888
        %1890 = vrot.lane.b32.xlu0 %v938, 32
        %v1891 = vpop.permute.xlu0 %1890
        %1892 = vrot.lane.b32.xlu0 %v939, 32
        %v1893 = vpop.permute.xlu0 %1892
        %1894 = vrot.lane.b32.xlu0 %v940, 32
        %v1895 = vpop.permute.xlu0 %1894
        %1896 = vrot.lane.b32.xlu0 %v941, 32
        %v1897 = vpop.permute.xlu0 %1896
        %1898 = vrot.lane.b32.xlu0 %v942, 32
        %v1899 = vpop.permute.xlu0 %1898
        %1900 = vrot.lane.b32.xlu0 %v943, 32
        %v1901 = vpop.permute.xlu0 %1900
        %v1902 = vunpack.c.l.b16 %v1530
        %v1903 = vunpack.c.l.b16 %v1533
        %v1904 = vunpack.c.l.b16 %v1537
        %v1905 = vunpack.c.l.b16 %v1540
        %v1906 = vunpack.c.l.b16 %v1544
        %v1907 = vunpack.c.l.b16 %v1547
        %v1908 = vunpack.c.l.b16 %v1551
        %v1909 = vunpack.c.l.b16 %v1554
        %v1910 = vunpack.c.l.b16 %v1558
        %v1911 = vunpack.c.l.b16 %v1561
        %v1912 = vunpack.c.l.b16 %v1565
        %v1913 = vunpack.c.l.b16 %v1568
        %v1914 = vunpack.c.l.b16 %v1572
        %v1915 = vunpack.c.l.b16 %v1575
        %v1916 = vunpack.c.l.b16 %v1579
        %v1917 = vunpack.c.l.b16 %v1582
        %v1918 = vunpack.c.l.b16 %v1586
        %v1919 = vunpack.c.l.b16 %v1589
        %v1920 = vunpack.c.l.b16 %v1593
        %v1921 = vunpack.c.l.b16 %v1596
        %v1922 = vunpack.c.l.b16 %v1600
        %v1923 = vunpack.c.l.b16 %v1603
        %v1924 = vunpack.c.l.b16 %v1607
        %v1925 = vunpack.c.l.b16 %v1610
        %v1926 = vunpack.c.l.b16 %v1614
        %v1927 = vunpack.c.l.b16 %v1617
        %v1928 = vunpack.c.l.b16 %v1621
        %v1929 = vunpack.c.l.b16 %v1624
        %v1930 = vunpack.c.l.b16 %v1628
        %v1931 = vunpack.c.l.b16 %v1631
        %v1932 = vunpack.c.l.b16 %v1635
        %v1933 = vunpack.c.l.b16 %v1638
        %v1934 = vpack.c.b16 %v1903, %v1902
        %v1935 = vpack.c.b16 %v1905, %v1904
        %v1936 = vpack.c.b16 %v1907, %v1906
        %v1937 = vpack.c.b16 %v1909, %v1908
        %v1938 = vpack.c.b16 %v1911, %v1910
        %v1939 = vpack.c.b16 %v1913, %v1912
        %v1940 = vpack.c.b16 %v1915, %v1914
        %v1941 = vpack.c.b16 %v1917, %v1916
        %v1942 = vpack.c.b16 %v1919, %v1918
        %v1943 = vpack.c.b16 %v1921, %v1920
        %v1944 = vpack.c.b16 %v1923, %v1922
        %v1945 = vpack.c.b16 %v1925, %v1924
        %v1946 = vpack.c.b16 %v1927, %v1926
        %v1947 = vpack.c.b16 %v1929, %v1928
        %v1948 = vpack.c.b16 %v1931, %v1930
        %v1949 = vpack.c.b16 %v1933, %v1932
        %1950 = vrot.lane.b32.xlu0 %v1934, 64
        %v1951 = vpop.permute.xlu0 %1950
        %1952 = vrot.lane.b32.xlu0 %v1935, 64
        %v1953 = vpop.permute.xlu0 %1952
        %1954 = vrot.lane.b32.xlu0 %v1936, 64
        %v1955 = vpop.permute.xlu0 %1954
        %1956 = vrot.lane.b32.xlu0 %v1937, 64
        %v1957 = vpop.permute.xlu0 %1956
        %1958 = vrot.lane.b32.xlu0 %v1938, 64
        %v1959 = vpop.permute.xlu0 %1958
        %1960 = vrot.lane.b32.xlu0 %v1939, 64
        %v1961 = vpop.permute.xlu0 %1960
        %1962 = vrot.lane.b32.xlu0 %v1940, 64
        %v1963 = vpop.permute.xlu0 %1962
        %1964 = vrot.lane.b32.xlu0 %v1941, 64
        %v1965 = vpop.permute.xlu0 %1964
        %1966 = vrot.lane.b32.xlu0 %v1942, 64
        %v1967 = vpop.permute.xlu0 %1966
        %1968 = vrot.lane.b32.xlu0 %v1943, 64
        %v1969 = vpop.permute.xlu0 %1968
        %1970 = vrot.lane.b32.xlu0 %v1944, 64
        %v1971 = vpop.permute.xlu0 %1970
        %1972 = vrot.lane.b32.xlu0 %v1945, 64
        %v1973 = vpop.permute.xlu0 %1972
        %1974 = vrot.lane.b32.xlu0 %v1946, 64
        %v1975 = vpop.permute.xlu0 %1974
        %1976 = vrot.lane.b32.xlu0 %v1947, 64
        %v1977 = vpop.permute.xlu0 %1976
        %1978 = vrot.lane.b32.xlu0 %v1948, 64
        %v1979 = vpop.permute.xlu0 %1978
        %1980 = vrot.lane.b32.xlu0 %v1949, 64
        %v1981 = vpop.permute.xlu0 %1980
        %v1982 = vunpack.c.l.b16 %v1651
        %v1983 = vunpack.c.l.b16 %v1654
        %v1984 = vunpack.c.l.b16 %v1658
        %v1985 = vunpack.c.l.b16 %v1661
        %v1986 = vunpack.c.l.b16 %v1665
        %v1987 = vunpack.c.l.b16 %v1668
        %v1988 = vpack.c.b16 %v1983, %v1982
        %v1989 = vpack.c.b16 %v1985, %v1984
        %v1990 = vpack.c.b16 %v1987, %v1986
        %1991 = vrot.lane.b32.xlu0 %v1848, 96
        %v1992 = vpop.permute.xlu0 %1991
        %1993 = vrot.lane.b32.xlu0 %v1849, 96
        %v1994 = vpop.permute.xlu0 %1993
        %1995 = vrot.lane.b32.xlu0 %v1850, 96
        %v1996 = vpop.permute.xlu0 %1995
        %1997 = vrot.lane.b32.xlu0 %v1851, 96
        %v1998 = vpop.permute.xlu0 %1997
        %1999 = vrot.lane.b32.xlu0 %v1852, 96
        %v2000 = vpop.permute.xlu0 %1999
        %2001 = vrot.lane.b32.xlu0 %v1853, 96
        %v2002 = vpop.permute.xlu0 %2001
        %2003 = vrot.lane.b32.xlu0 %v1854, 96
        %v2004 = vpop.permute.xlu0 %2003
        %2005 = vrot.lane.b32.xlu0 %v1855, 96
        %v2006 = vpop.permute.xlu0 %2005
        %2007 = vrot.lane.b32.xlu0 %v1856, 96
        %v2008 = vpop.permute.xlu0 %2007
        %2009 = vrot.lane.b32.xlu0 %v1857, 96
        %v2010 = vpop.permute.xlu0 %2009
        %2011 = vrot.lane.b32.xlu0 %v1858, 96
        %v2012 = vpop.permute.xlu0 %2011
        %2013 = vrot.lane.b32.xlu0 %v1859, 96
        %v2014 = vpop.permute.xlu0 %2013
        %2015 = vrot.lane.b32.xlu0 %v1860, 96
        %v2016 = vpop.permute.xlu0 %2015
        %2017 = vrot.lane.b32.xlu0 %v1988, 96
        %v2018 = vpop.permute.xlu0 %2017
        %2019 = vrot.lane.b32.xlu0 %v1989, 96
        %v2020 = vpop.permute.xlu0 %2019
        %2021 = vrot.lane.b32.xlu0 %v1990, 96
        %v2022 = vpop.permute.xlu0 %2021
        %v2023 = vunpack.c.l.b16 %v1675
        %v2024 = vunpack.c.l.b16 %v1678
        %v2025 = vunpack.c.l.b16 %v1682
        %v2026 = vunpack.c.l.b16 %v1685
        %v2027 = vunpack.c.l.b16 %v1689
        %v2028 = vunpack.c.l.b16 %v1692
        %v2029 = vpack.c.b16 %v2024, %v2023
        %v2030 = vpack.c.b16 %v2026, %v2025
        %v2031 = vpack.c.b16 %v2028, %v2027
        %2032 = vrot.lane.b32.xlu0 %v1937, 32
        %v2033 = vpop.permute.xlu0 %2032
        %2034 = vrot.lane.b32.xlu0 %v1938, 32
        %v2035 = vpop.permute.xlu0 %2034
        %2036 = vrot.lane.b32.xlu0 %v1939, 32
        %v2037 = vpop.permute.xlu0 %2036
        %2038 = vrot.lane.b32.xlu0 %v1940, 32
        %v2039 = vpop.permute.xlu0 %2038
        %2040 = vrot.lane.b32.xlu0 %v1941, 32
        %v2041 = vpop.permute.xlu0 %2040
        %2042 = vrot.lane.b32.xlu0 %v1942, 32
        %v2043 = vpop.permute.xlu0 %2042
        %2044 = vrot.lane.b32.xlu0 %v1943, 32
        %v2045 = vpop.permute.xlu0 %2044
        %2046 = vrot.lane.b32.xlu0 %v1944, 32
        %v2047 = vpop.permute.xlu0 %2046
        %2048 = vrot.lane.b32.xlu0 %v1945, 32
        %v2049 = vpop.permute.xlu0 %2048
        %2050 = vrot.lane.b32.xlu0 %v1946, 32
        %v2051 = vpop.permute.xlu0 %2050
        %2052 = vrot.lane.b32.xlu0 %v1947, 32
        %v2053 = vpop.permute.xlu0 %2052
        %2054 = vrot.lane.b32.xlu0 %v1948, 32
        %v2055 = vpop.permute.xlu0 %2054
        %2056 = vrot.lane.b32.xlu0 %v1949, 32
        %v2057 = vpop.permute.xlu0 %2056
        %2058 = vrot.lane.b32.xlu0 %v2029, 32
        %v2059 = vpop.permute.xlu0 %2058
        %2060 = vrot.lane.b32.xlu0 %v2030, 32
        %v2061 = vpop.permute.xlu0 %2060
        %2062 = vrot.lane.b32.xlu0 %v2031, 32
        %v2063 = vpop.permute.xlu0 %2062
        %v2064 = vunpack.c.l.b16 %v1705
        %v2065 = vunpack.c.l.b16 %v1708
        %v2066 = vunpack.c.l.b16 %v1712
        %v2067 = vunpack.c.l.b16 %v1715
        %v2068 = vunpack.c.l.b16 %v1719
        %v2069 = vunpack.c.l.b16 %v1722
        %v2070 = vpack.c.b16 %v2065, %v2064
        %v2071 = vpack.c.b16 %v2067, %v2066
        %v2072 = vpack.c.b16 %v2069, %v2068
        %2073 = vrot.lane.b32.xlu0 %v1851, 64
        %v2074 = vpop.permute.xlu0 %2073
        %2075 = vrot.lane.b32.xlu0 %v1852, 64
        %v2076 = vpop.permute.xlu0 %2075
        %2077 = vrot.lane.b32.xlu0 %v1853, 64
        %v2078 = vpop.permute.xlu0 %2077
        %2079 = vrot.lane.b32.xlu0 %v1854, 64
        %v2080 = vpop.permute.xlu0 %2079
        %2081 = vrot.lane.b32.xlu0 %v1855, 64
        %v2082 = vpop.permute.xlu0 %2081
        %2083 = vrot.lane.b32.xlu0 %v1856, 64
        %v2084 = vpop.permute.xlu0 %2083
        %2085 = vrot.lane.b32.xlu0 %v1857, 64
        %v2086 = vpop.permute.xlu0 %2085
        %2087 = vrot.lane.b32.xlu0 %v1858, 64
        %v2088 = vpop.permute.xlu0 %2087
        %2089 = vrot.lane.b32.xlu0 %v1859, 64
        %v2090 = vpop.permute.xlu0 %2089
        %2091 = vrot.lane.b32.xlu0 %v1860, 64
        %v2092 = vpop.permute.xlu0 %2091
        %2093 = vrot.lane.b32.xlu0 %v1988, 64
        %v2094 = vpop.permute.xlu0 %2093
        %2095 = vrot.lane.b32.xlu0 %v1989, 64
        %v2096 = vpop.permute.xlu0 %2095
        %2097 = vrot.lane.b32.xlu0 %v1990, 64
        %v2098 = vpop.permute.xlu0 %2097
        %2099 = vrot.lane.b32.xlu0 %v2070, 64
        %v2100 = vpop.permute.xlu0 %2099
        %2101 = vrot.lane.b32.xlu0 %v2071, 64
        %v2102 = vpop.permute.xlu0 %2101
        %2103 = vrot.lane.b32.xlu0 %v2072, 64
        %v2104 = vpop.permute.xlu0 %2103
        %v2105 = vunpack.c.l.b16 %v1735
        %v2106 = vunpack.c.l.b16 %v1744
        %v2107 = vunpack.c.l.b16 %v1757
        %v2108 = vunpack.c.l.b16 %v1766
        %v2109 = vunpack.c.l.b16 %v1779
        %v2110 = vunpack.c.l.b16 %v1788
        %v2111 = vpack.c.b16 %v2106, %v2105
        %v2112 = vpack.c.b16 %v2108, %v2107
        %v2113 = vpack.c.b16 %v2110, %v2109
        %2114 = vrot.lane.b32.xlu0 %v934, 96
        %v2115 = vpop.permute.xlu0 %2114
        %2116 = vrot.lane.b32.xlu0 %v935, 96
        %v2117 = vpop.permute.xlu0 %2116
        %2118 = vrot.lane.b32.xlu0 %v936, 96
        %v2119 = vpop.permute.xlu0 %2118
        %2120 = vrot.lane.b32.xlu0 %v937, 96
        %v2121 = vpop.permute.xlu0 %2120
        %2122 = vrot.lane.b32.xlu0 %v938, 96
        %v2123 = vpop.permute.xlu0 %2122
        %2124 = vrot.lane.b32.xlu0 %v939, 96
        %v2125 = vpop.permute.xlu0 %2124
        %2126 = vrot.lane.b32.xlu0 %v940, 96
        %v2127 = vpop.permute.xlu0 %2126
        %2128 = vrot.lane.b32.xlu0 %v941, 96
        %v2129 = vpop.permute.xlu0 %2128
        %2130 = vrot.lane.b32.xlu0 %v942, 96
        %v2131 = vpop.permute.xlu0 %2130
        %2132 = vrot.lane.b32.xlu0 %v943, 96
        %v2133 = vpop.permute.xlu0 %2132
        %2134 = vrot.lane.b32.xlu0 %v944, 96
        %v2135 = vpop.permute.xlu0 %2134
        %2136 = vrot.lane.b32.xlu0 %v945, 96
        %v2137 = vpop.permute.xlu0 %2136
        %2138 = vrot.lane.b32.xlu0 %v946, 96
        %v2139 = vpop.permute.xlu0 %2138
        %2140 = vrot.lane.b32.xlu0 %v2111, 96
        %v2141 = vpop.permute.xlu0 %2140
        %2142 = vrot.lane.b32.xlu0 %v2112, 96
        %v2143 = vpop.permute.xlu0 %2142
        %2144 = vrot.lane.b32.xlu0 %v2113, 96
        %v2145 = vpop.permute.xlu0 %2144
        %v2146 = vunpack.c.l.b16 %v1795
        %v2147 = vunpack.c.l.b16 %v1798
        %v2148 = vunpack.c.l.b16 %v1802
        %v2149 = vunpack.c.l.b16 %v1805
        %v2150 = vunpack.c.l.b16 %v1809
        %v2151 = vunpack.c.l.b16 %v1812
        %v2152 = vpack.c.b16 %v2147, %v2146
        %v2153 = vpack.c.b16 %v2149, %v2148
        %v2154 = vpack.c.b16 %v2151, %v2150
        %v2157 = vsel %vm959, %v1845, %v1871
        %v2160 = vsel %vm959, %v1846, %v1873
        %v2163 = vsel %vm959, %v1847, %v1875
        %v2166 = vsel %vm959, %v1848, %v1877
        %v2169 = vsel %vm959, %v1849, %v1879
        %v2172 = vsel %vm959, %v1850, %v1881
        %v2175 = vsel %vm959, %v1851, %v1883
        %v2178 = vsel %vm959, %v1852, %v1885
        %v2181 = vsel %vm959, %v1853, %v1887
        %v2184 = vsel %vm959, %v1854, %v1889
        %v2187 = vsel %vm959, %v1855, %v1891
        %v2190 = vsel %vm959, %v1856, %v1893
        %v2193 = vsel %vm959, %v1857, %v1895
        %v2196 = vsel %vm959, %v1858, %v1897
        %v2199 = vsel %vm959, %v1859, %v1899
        %v2202 = vsel %vm959, %v1860, %v1901
        %vm2203 = vcmask 523264
        %v2205 = vsel %vm2203, %v2157, %v1951
        %v2207 = vsel %vm2203, %v2160, %v1953
        %v2209 = vsel %vm2203, %v2163, %v1955
        %v2211 = vsel %vm2203, %v2166, %v1957
        %v2213 = vsel %vm2203, %v2169, %v1959
        %v2215 = vsel %vm2203, %v2172, %v1961
        %v2217 = vsel %vm2203, %v2175, %v1963
        %v2219 = vsel %vm2203, %v2178, %v1965
        %v2221 = vsel %vm2203, %v2181, %v1967
        %v2223 = vsel %vm2203, %v2184, %v1969
        %v2225 = vsel %vm2203, %v2187, %v1971
        %v2227 = vsel %vm2203, %v2190, %v1973
        %v2229 = vsel %vm2203, %v2193, %v1975
        %v2231 = vsel %vm2203, %v2196, %v1977
        %v2233 = vsel %vm2203, %v2199, %v1979
        %v2235 = vsel %vm2203, %v2202, %v1981
        %vm2236 = vcmask 785408
        %v2238 = vsel %vm2236, %v2205, %v1992
        %v2241 = vsel %vm2236, %v2207, %v1994
        %v2244 = vsel %vm2236, %v2209, %v1996
        %v2247 = vsel %vm2236, %v2211, %v1998
        %v2250 = vsel %vm2236, %v2213, %v2000
        %v2253 = vsel %vm2236, %v2215, %v2002
        %v2256 = vsel %vm2236, %v2217, %v2004
        %v2259 = vsel %vm2236, %v2219, %v2006
        %v2262 = vsel %vm2236, %v2221, %v2008
        %v2265 = vsel %vm2236, %v2223, %v2010
        %v2268 = vsel %vm2236, %v2225, %v2012
        %v2271 = vsel %vm2236, %v2227, %v2014
        %v2274 = vsel %vm2236, %v2229, %v2016
        %v2277 = vsel %vm2236, %v2231, %v2018
        %v2280 = vsel %vm2236, %v2233, %v2020
        %v2283 = vsel %vm2236, %v2235, %v2022
        %v2286 = vsel %vm959, %v931, %v2033
        %v2288 = vsel %vm959, %v932, %v2035
        %v2290 = vsel %vm959, %v933, %v2037
        %v2292 = vsel %vm959, %v934, %v2039
        %v2294 = vsel %vm959, %v935, %v2041
        %v2296 = vsel %vm959, %v936, %v2043
        %v2298 = vsel %vm959, %v937, %v2045
        %v2300 = vsel %vm959, %v938, %v2047
        %v2302 = vsel %vm959, %v939, %v2049
        %v2304 = vsel %vm959, %v940, %v2051
        %v2306 = vsel %vm959, %v941, %v2053
        %v2308 = vsel %vm959, %v942, %v2055
        %v2310 = vsel %vm959, %v943, %v2057
        %v2312 = vsel %vm959, %v944, %v2059
        %v2314 = vsel %vm959, %v945, %v2061
        %v2316 = vsel %vm959, %v946, %v2063
        %v2318 = vsel %vm2203, %v2286, %v2074
        %v2320 = vsel %vm2203, %v2288, %v2076
        %v2322 = vsel %vm2203, %v2290, %v2078
        %v2324 = vsel %vm2203, %v2292, %v2080
        %v2326 = vsel %vm2203, %v2294, %v2082
        %v2328 = vsel %vm2203, %v2296, %v2084
        %v2330 = vsel %vm2203, %v2298, %v2086
        %v2332 = vsel %vm2203, %v2300, %v2088
        %v2334 = vsel %vm2203, %v2302, %v2090
        %v2336 = vsel %vm2203, %v2304, %v2092
        %v2338 = vsel %vm2203, %v2306, %v2094
        %v2340 = vsel %vm2203, %v2308, %v2096
        %v2342 = vsel %vm2203, %v2310, %v2098
        %v2344 = vsel %vm2203, %v2312, %v2100
        %v2346 = vsel %vm2203, %v2314, %v2102
        %v2348 = vsel %vm2203, %v2316, %v2104
        %v2350 = vsel %vm2236, %v2318, %v2115
        %v2353 = vsel %vm2236, %v2320, %v2117
        %v2356 = vsel %vm2236, %v2322, %v2119
        %v2359 = vsel %vm2236, %v2324, %v2121
        %v2362 = vsel %vm2236, %v2326, %v2123
        %v2365 = vsel %vm2236, %v2328, %v2125
        %v2368 = vsel %vm2236, %v2330, %v2127
        %v2371 = vsel %vm2236, %v2332, %v2129
        %v2374 = vsel %vm2236, %v2334, %v2131
        %v2377 = vsel %vm2236, %v2336, %v2133
        %v2380 = vsel %vm2236, %v2338, %v2135
        %v2383 = vsel %vm2236, %v2340, %v2137
        %v2386 = vsel %vm2236, %v2342, %v2139
        %v2389 = vsel %vm2236, %v2344, %v2141
        %v2392 = vsel %vm2236, %v2346, %v2143
        %v2395 = vsel %vm2236, %v2348, %v2145
        %v2397 = vld [vmem:[#allocation7] sm:$0xf]
        %v2398 = vld [vmem:[#allocation7 + $0x4] sm:$0xf]
        %v2399 = vld [vmem:[#allocation7 + $0x8] sm:$0xf]
        %v2400 = vld [vmem:[#allocation7 + $0xc] sm:$0xf]
        %v2401 = vld [vmem:[#allocation7 + $0x10] sm:$0xf]
        %v2402 = vld [vmem:[#allocation7 + $0x14] sm:$0xf]
        %v2403 = vld [vmem:[#allocation7 + $0x18] sm:$0xf]
        %v2404 = vld [vmem:[#allocation7 + $0x1c] sm:$0xf]
        %v2405 = vld [vmem:[#allocation7 + $0x20] sm:$0xf]
        %v2406 = vld [vmem:[#allocation7 + $0x24] sm:$0xf]
        %v2407 = vld [vmem:[#allocation7 + $0x28] sm:$0xf]
        %v2408 = vld [vmem:[#allocation7 + $0x2c] sm:$0xf]
        %v2409 = vld [vmem:[#allocation7 + $0x30] sm:$0xf]
        %v2410 = vld [vmem:[#allocation7 + $0x34] sm:$0xf]
        %v2411 = vld [vmem:[#allocation7 + $0x38] sm:$0xf]
        %v2412 = vld [vmem:[#allocation7 + $0x3c] sm:$0xf]
        %v2413 = vld [vmem:[#allocation7 + $0x40] sm:$0xf]
        %v2414 = vld [vmem:[#allocation7 + $0x44] sm:$0xf]
        %v2415 = vld [vmem:[#allocation7 + $0x48] sm:$0xf]
        %v2416 = vld [vmem:[#allocation7 + $0x4c] sm:$0xf]
        %v2417 = vld [vmem:[#allocation7 + $0x50] sm:$0xf]
        %v2418 = vld [vmem:[#allocation7 + $0x54] sm:$0xf]
        %v2419 = vld [vmem:[#allocation7 + $0x58] sm:$0xf]
        %v2420 = vld [vmem:[#allocation7 + $0x5c] sm:$0xf]
        %v2421 = vld [vmem:[#allocation7 + $0x60] sm:$0xf]
        %v2422 = vld [vmem:[#allocation7 + $0x64] sm:$0xf]
        %v2423 = vld [vmem:[#allocation7 + $0x68] sm:$0xf]
        %v2424 = vld [vmem:[#allocation7 + $0x6c] sm:$0xf]
        %v2425 = vld [vmem:[#allocation7 + $0x70] sm:$0xf]
        %v2426 = vld [vmem:[#allocation7 + $0x74] sm:$0xf]
        %v2427 = vld [vmem:[#allocation7 + $0x78] sm:$0xf]
        %v2428 = vld [vmem:[#allocation7 + $0x7c] sm:$0xf]
        %v2429 = vld [vmem:[#allocation7 + $0x80] sm:$0xf]
        %v2430 = vld [vmem:[#allocation7 + $0x84] sm:$0xf]
        %v2431 = vld [vmem:[#allocation7 + $0x88] sm:$0xf]
        %v2432 = vld [vmem:[#allocation7 + $0x8c] sm:$0xf]
        %v2469 = vunpack.c.l.b16 %v2397
        %v2470 = vunpack.c.l.b16 %v2398
        %v2471 = vunpack.c.l.b16 %v2399
        %v2472 = vunpack.c.l.b16 %v2400
        %v2473 = vunpack.c.l.b16 %v2401
        %v2474 = vunpack.c.l.b16 %v2402
        %v2475 = vunpack.c.l.b16 %v2403
        %v2476 = vunpack.c.l.b16 %v2404
        %v2477 = vunpack.c.l.b16 %v2405
        %v2478 = vunpack.c.l.b16 %v2406
        %v2479 = vunpack.c.l.b16 %v2407
        %v2480 = vunpack.c.l.b16 %v2408
        %v2481 = vunpack.c.l.b16 %v2409
        %v2482 = vunpack.c.l.b16 %v2410
        %v2483 = vunpack.c.l.b16 %v2411
        %v2484 = vunpack.c.l.b16 %v2412
        %v2485 = vunpack.c.l.b16 %v2413
        %v2486 = vunpack.c.l.b16 %v2414
        %v2487 = vunpack.c.l.b16 %v2415
        %v2488 = vunpack.c.l.b16 %v2416
        %v2489 = vunpack.c.l.b16 %v2417
        %v2490 = vunpack.c.l.b16 %v2418
        %v2491 = vunpack.c.l.b16 %v2419
        %v2492 = vunpack.c.l.b16 %v2420
        %v2493 = vunpack.c.l.b16 %v2421
        %v2494 = vunpack.c.l.b16 %v2422
        %v2495 = vunpack.c.l.b16 %v2423
        %v2496 = vunpack.c.l.b16 %v2424
        %v2497 = vunpack.c.l.b16 %v2425
        %v2498 = vunpack.c.l.b16 %v2426
        %v2499 = vunpack.c.l.b16 %v2427
        %v2500 = vunpack.c.l.b16 %v2428
        %v2501 = vunpack.c.l.b16 %v2429
        %v2502 = vunpack.c.l.b16 %v2430
        %v2503 = vunpack.c.l.b16 %v2431
        %v2504 = vunpack.c.l.b16 %v2432
        %v2505 = vpack.c.b16 %v2470, %v2469
        %v2506 = vpack.c.b16 %v2472, %v2471
        %v2507 = vpack.c.b16 %v2474, %v2473
        %v2508 = vpack.c.b16 %v2476, %v2475
        %v2509 = vpack.c.b16 %v2478, %v2477
        %v2510 = vpack.c.b16 %v2480, %v2479
        %v2511 = vpack.c.b16 %v2482, %v2481
        %v2512 = vpack.c.b16 %v2484, %v2483
        %v2513 = vpack.c.b16 %v2486, %v2485
        %v2514 = vpack.c.b16 %v2488, %v2487
        %v2515 = vpack.c.b16 %v2490, %v2489
        %v2516 = vpack.c.b16 %v2492, %v2491
        %v2517 = vpack.c.b16 %v2494, %v2493
        %v2518 = vpack.c.b16 %v2496, %v2495
        %v2519 = vpack.c.b16 %v2498, %v2497
        %v2520 = vpack.c.b16 %v2500, %v2499
        %v2521 = vpack.c.b16 %v2502, %v2501
        %v2522 = vpack.c.b16 %v2504, %v2503
        %v2542 = vsel %vm959, %v1940, 0
        %v2545 = vsel %vm959, %v1941, 0
        %v2548 = vsel %vm959, %v1942, 0
        %v2551 = vsel %vm959, %v1943, 0
        %v2554 = vsel %vm959, %v1944, 0
        %v2557 = vsel %vm959, %v1945, 0
        %v2560 = vsel %vm959, %v1946, 0
        %v2563 = vsel %vm959, %v1947, 0
        %v2566 = vsel %vm959, %v1948, 0
        %v2569 = vsel %vm959, %v1949, 0
        %v2572 = vsel %vm959, %v2029, 0
        %v2575 = vsel %vm959, %v2030, 0
        %v2578 = vsel %vm959, %v2031, 0
        %v2581 = vsel %vm959, %v2152, 0
        %v2584 = vsel %vm959, %v2153, 0
        %v2587 = vsel %vm959, %v2154, 0
        %2589 = vmatprep.subr.bf16.mxu0 0
        %2590 = vmatpush1.bf16.msra.mxu0 %v2505
        %2591 = vmatprep.subr.bf16.mxu0 0
        %2592 = vmatpush1.bf16.msra.mxu0 %v2506
        %2593 = vmatprep.subr.bf16.mxu0 0
        %2594 = vmatpush1.bf16.msra.mxu0 %v2507
        %2595 = vmatprep.subr.bf16.mxu0 0
        %2596 = vmatpush1.bf16.msra.mxu0 %v2508
        %2597 = vmatprep.subr.bf16.mxu0 0
        %2598 = vmatpush1.bf16.msra.mxu0 %v2509
        %2599 = vmatprep.subr.bf16.mxu0 0
        %2600 = vmatpush1.bf16.msra.mxu0 %v2510
        %2601 = vmatprep.subr.bf16.mxu0 0
        %2602 = vmatpush1.bf16.msra.mxu0 %v2511
        %2603 = vmatprep.subr.bf16.mxu0 0
        %2604 = vmatpush1.bf16.msra.mxu0 %v2512
        %2605 = vmatprep.subr.bf16.mxu0 0
        %2606 = vmatpush1.bf16.msra.mxu0 %v2513
        %2607 = vmatprep.subr.bf16.mxu0 0
        %2608 = vmatpush1.bf16.msra.mxu0 %v2514
        %2609 = vmatprep.subr.bf16.mxu0 0
        %2610 = vmatpush1.bf16.msra.mxu0 %v2515
        %2611 = vmatprep.subr.bf16.mxu0 0
        %2612 = vmatpush1.bf16.msra.mxu0 %v2516
        %2613 = vmatprep.subr.bf16.mxu0 0
        %2614 = vmatpush1.bf16.msra.mxu0 %v2517
        %2615 = vmatprep.subr.bf16.mxu0 0
        %2616 = vmatpush1.bf16.msra.mxu0 %v2518
        %2617 = vmatprep.subr.bf16.mxu0 0
        %2618 = vmatpush1.bf16.msra.mxu0 %v2519
        %2619 = vmatprep.subr.bf16.mxu0 0
        %2620 = vmatpush1.bf16.msra.mxu0 %v2520
        %2621 = vmatprep.mubr.bf16.mxu0 %v2350
        %2622 = vmatmul.mubr.bf16.gmra.mrb[0].mxu0 %v2238
        %v2623 = vpop.f32.mrb[0].mxu0
        %v2624 = vadd.f32 0.0, %v2623
        %v2625 = vpop.f32.mrb[0].mxu0
        %v2626 = vpop.f32.mrb[0].mxu0
        %v2627 = vadd.f32 0.0, %v2626
        %v2628 = vpop.f32.mrb[0].mxu0
        %2629 = vmatprep.mubr.bf16.mxu0 %v2353
        %2630 = vmatmul.mubr.bf16.gmra.mrb[0].mxu0 %v2241
        %v2631 = vpop.f32.mrb[0].mxu0
        %v2632 = vadd.f32 0.0, %v2631
        %v2633 = vpop.f32.mrb[0].mxu0
        %v2634 = vpop.f32.mrb[0].mxu0
        %v2635 = vadd.f32 0.0, %v2634
        %v2636 = vpop.f32.mrb[0].mxu0
        %2637 = vmatprep.mubr.bf16.mxu0 %v2356
        %2638 = vmatmul.mubr.bf16.gmra.mrb[0].mxu0 %v2244
        %v2639 = vpop.f32.mrb[0].mxu0
        %v2640 = vadd.f32 0.0, %v2639
        %v2641 = vpop.f32.mrb[0].mxu0
        %v2642 = vpop.f32.mrb[0].mxu0
        %v2643 = vadd.f32 0.0, %v2642
        %v2644 = vpop.f32.mrb[0].mxu0
        %2645 = vmatprep.mubr.bf16.mxu0 %v2359
        %2646 = vmatmul.mubr.bf16.gmra.mrb[0].mxu0 %v2247
        %v2647 = vpop.f32.mrb[0].mxu0
        %v2648 = vadd.f32 0.0, %v2647
        %v2649 = vpop.f32.mrb[0].mxu0
        %v2650 = vpop.f32.mrb[0].mxu0
        %v2651 = vadd.f32 0.0, %v2650
        %v2652 = vpop.f32.mrb[0].mxu0
        %2653 = vmatprep.mubr.bf16.mxu0 %v2362
        %2654 = vmatmul.mubr.bf16.gmra.mrb[0].mxu0 %v2250
        %v2655 = vpop.f32.mrb[0].mxu0
        %v2656 = vadd.f32 0.0, %v2655
        %v2657 = vpop.f32.mrb[0].mxu0
        %v2658 = vpop.f32.mrb[0].mxu0
        %v2659 = vadd.f32 0.0, %v2658
        %v2660 = vpop.f32.mrb[0].mxu0
        %2661 = vmatprep.mubr.bf16.mxu0 %v2365
        %2662 = vmatmul.mubr.bf16.gmra.mrb[0].mxu0 %v2253
        %v2663 = vpop.f32.mrb[0].mxu0
        %v2664 = vadd.f32 0.0, %v2663
        %v2665 = vpop.f32.mrb[0].mxu0
        %v2666 = vpop.f32.mrb[0].mxu0
        %v2667 = vadd.f32 0.0, %v2666
        %v2668 = vpop.f32.mrb[0].mxu0
        %2669 = vmatprep.mubr.bf16.mxu0 %v2368
        %2670 = vmatmul.mubr.bf16.gmra.mrb[0].mxu0 %v2256
        %v2671 = vpop.f32.mrb[0].mxu0
        %v2672 = vadd.f32 0.0, %v2671
        %v2673 = vpop.f32.mrb[0].mxu0
        %v2674 = vpop.f32.mrb[0].mxu0
        %v2675 = vadd.f32 0.0, %v2674
        %v2676 = vpop.f32.mrb[0].mxu0
        %2677 = vmatprep.mubr.bf16.mxu0 %v2371
        %2678 = vmatmul.mubr.bf16.gmra.mrb[0].mxu0 %v2259
        %v2679 = vpop.f32.mrb[0].mxu0
        %v2680 = vadd.f32 0.0, %v2679
        %v2681 = vpop.f32.mrb[0].mxu0
        %v2682 = vpop.f32.mrb[0].mxu0
        %v2683 = vadd.f32 0.0, %v2682
        %v2684 = vpop.f32.mrb[0].mxu0
        %2685 = vmatprep.mubr.bf16.mxu0 %v2374
        %2686 = vmatmul.mubr.bf16.gmra.mrb[0].mxu0 %v2262
        %v2687 = vpop.f32.mrb[0].mxu0
        %v2688 = vadd.f32 0.0, %v2687
        %v2689 = vpop.f32.mrb[0].mxu0
        %v2690 = vpop.f32.mrb[0].mxu0
        %v2691 = vadd.f32 0.0, %v2690
        %v2692 = vpop.f32.mrb[0].mxu0
        %2693 = vmatprep.mubr.bf16.mxu0 %v2377
        %2694 = vmatmul.mubr.bf16.gmra.mrb[0].mxu0 %v2265
        %v2695 = vpop.f32.mrb[0].mxu0
        %v2696 = vadd.f32 0.0, %v2695
        %v2697 = vpop.f32.mrb[0].mxu0
        %v2698 = vpop.f32.mrb[0].mxu0
        %v2699 = vadd.f32 0.0, %v2698
        %v2700 = vpop.f32.mrb[0].mxu0
        %2701 = vmatprep.mubr.bf16.mxu0 %v2380
        %2702 = vmatmul.mubr.bf16.gmra.mrb[0].mxu0 %v2268
        %v2703 = vpop.f32.mrb[0].mxu0
        %v2704 = vadd.f32 0.0, %v2703
        %v2705 = vpop.f32.mrb[0].mxu0
        %v2706 = vpop.f32.mrb[0].mxu0
        %v2707 = vadd.f32 0.0, %v2706
        %v2708 = vpop.f32.mrb[0].mxu0
        %2709 = vmatprep.mubr.bf16.mxu0 %v2383
        %2710 = vmatmul.mubr.bf16.gmra.mrb[0].mxu0 %v2271
        %v2711 = vpop.f32.mrb[0].mxu0
        %v2712 = vadd.f32 0.0, %v2711
        %v2713 = vpop.f32.mrb[0].mxu0
        %v2714 = vpop.f32.mrb[0].mxu0
        %v2715 = vadd.f32 0.0, %v2714
        %v2716 = vpop.f32.mrb[0].mxu0
        %2717 = vmatprep.mubr.bf16.mxu0 %v2386
        %2718 = vmatmul.mubr.bf16.gmra.mrb[0].mxu0 %v2274
        %v2719 = vpop.f32.mrb[0].mxu0
        %v2720 = vadd.f32 0.0, %v2719
        %v2721 = vpop.f32.mrb[0].mxu0
        %v2722 = vpop.f32.mrb[0].mxu0
        %v2723 = vadd.f32 0.0, %v2722
        %v2724 = vpop.f32.mrb[0].mxu0
        %2725 = vmatprep.mubr.bf16.mxu0 %v2389
        %2726 = vmatmul.mubr.bf16.gmra.mrb[0].mxu0 %v2277
        %v2727 = vpop.f32.mrb[0].mxu0
        %v2728 = vadd.f32 0.0, %v2727
        %v2729 = vpop.f32.mrb[0].mxu0
        %v2730 = vpop.f32.mrb[0].mxu0
        %v2731 = vadd.f32 0.0, %v2730
        %v2732 = vpop.f32.mrb[0].mxu0
        %2733 = vmatprep.mubr.bf16.mxu0 %v2392
        %2734 = vmatmul.mubr.bf16.gmra.mrb[0].mxu0 %v2280
        %v2735 = vpop.f32.mrb[0].mxu0
        %v2736 = vadd.f32 0.0, %v2735
        %v2737 = vpop.f32.mrb[0].mxu0
        %v2738 = vpop.f32.mrb[0].mxu0
        %v2739 = vadd.f32 0.0, %v2738
        %v2740 = vpop.f32.mrb[0].mxu0
        %2741 = vmatprep.mubr.bf16.mxu0 %v2395
        %2742 = vmatmul.mubr.bf16.gmra.mrb[0].mxu0 %v2283
        %v2743 = vpop.f32.mrb[0].mxu0
        %v2744 = vadd.f32 0.0, %v2743
        %v2745 = vpop.f32.mrb[0].mxu0
        %v2746 = vpop.f32.mrb[0].mxu0
        %v2747 = vadd.f32 0.0, %v2746
        %v2748 = vpop.f32.mrb[0].mxu0
        %2749 = vdwg.mxu0
        %2750 = vmatprep.subr.bf16.mxu0 0
        %2751 = vmatpush1.bf16.msra.mxu0 %v2521
        %2752 = vmatprep.subr.bf16.mxu0 0
        %2753 = vmatpush1.bf16.msra.mxu0 %v2522
        %2754 = vmatprep.subr.bf16.mxu0 0
        %2755 = vmatpush1.bf16.msra.mxu0 0
        %2756 = vmatprep.subr.bf16.mxu0 0
        %2757 = vmatpush1.bf16.msra.mxu0 0
        %2758 = vmatprep.subr.bf16.mxu0 0
        %2759 = vmatpush1.bf16.msra.mxu0 0
        %2760 = vmatprep.subr.bf16.mxu0 0
        %2761 = vmatpush1.bf16.msra.mxu0 0
        %2762 = vmatprep.subr.bf16.mxu0 0
        %2763 = vmatpush1.bf16.msra.mxu0 0
        %2764 = vmatprep.subr.bf16.mxu0 0
        %2765 = vmatpush1.bf16.msra.mxu0 0
        %2766 = vmatprep.subr.bf16.mxu0 0
        %2767 = vmatpush1.bf16.msra.mxu0 0
        %2768 = vmatprep.subr.bf16.mxu0 0
        %2769 = vmatpush1.bf16.msra.mxu0 0
        %2770 = vmatprep.subr.bf16.mxu0 0
        %2771 = vmatpush1.bf16.msra.mxu0 0
        %2772 = vmatprep.subr.bf16.mxu0 0
        %2773 = vmatpush1.bf16.msra.mxu0 0
        %2774 = vmatprep.subr.bf16.mxu0 0
        %2775 = vmatpush1.bf16.msra.mxu0 0
        %2776 = vmatprep.subr.bf16.mxu0 0
        %2777 = vmatpush1.bf16.msra.mxu0 0
        %2778 = vmatprep.subr.bf16.mxu0 0
        %2779 = vmatpush1.bf16.msra.mxu0 0
        %2780 = vmatprep.subr.bf16.mxu0 0
        %2781 = vmatpush1.bf16.msra.mxu0 0
        %2782 = vmatprep.mubr.bf16.mxu0 0
        %2783 = vmatmul.mubr.bf16.gmra.mrb[0].mxu0 %v2542
        %v2784 = vpop.f32.mrb[0].mxu0
        %v2785 = vadd.f32 %v2624, %v2784
        %v2786 = vpop.f32.mrb[0].mxu0
        %v2787 = vpop.f32.mrb[0].mxu0
        %v2788 = vadd.f32 %v2627, %v2787
        %v2789 = vpop.f32.mrb[0].mxu0
        %2790 = vmatprep.mubr.bf16.mxu0 0
        %2791 = vmatmul.mubr.bf16.gmra.mrb[0].mxu0 %v2545
        %v2792 = vpop.f32.mrb[0].mxu0
        %v2793 = vadd.f32 %v2632, %v2792
        %v2794 = vpop.f32.mrb[0].mxu0
        %v2795 = vpop.f32.mrb[0].mxu0
        %v2796 = vadd.f32 %v2635, %v2795
        %v2797 = vpop.f32.mrb[0].mxu0
        %2798 = vmatprep.mubr.bf16.mxu0 0
        %2799 = vmatmul.mubr.bf16.gmra.mrb[0].mxu0 %v2548
        %v2800 = vpop.f32.mrb[0].mxu0
        %v2801 = vadd.f32 %v2640, %v2800
        %v2802 = vpop.f32.mrb[0].mxu0
        %v2803 = vpop.f32.mrb[0].mxu0
        %v2804 = vadd.f32 %v2643, %v2803
        %v2805 = vpop.f32.mrb[0].mxu0
        %2806 = vmatprep.mubr.bf16.mxu0 0
        %2807 = vmatmul.mubr.bf16.gmra.mrb[0].mxu0 %v2551
        %v2808 = vpop.f32.mrb[0].mxu0
        %v2809 = vadd.f32 %v2648, %v2808
        %v2810 = vpop.f32.mrb[0].mxu0
        %v2811 = vpop.f32.mrb[0].mxu0
        %v2812 = vadd.f32 %v2651, %v2811
        %v2813 = vpop.f32.mrb[0].mxu0
        %2814 = vmatprep.mubr.bf16.mxu0 0
        %2815 = vmatmul.mubr.bf16.gmra.mrb[0].mxu0 %v2554
        %v2816 = vpop.f32.mrb[0].mxu0
        %v2817 = vadd.f32 %v2656, %v2816
        %v2818 = vpop.f32.mrb[0].mxu0
        %v2819 = vpop.f32.mrb[0].mxu0
        %v2820 = vadd.f32 %v2659, %v2819
        %v2821 = vpop.f32.mrb[0].mxu0
        %2822 = vmatprep.mubr.bf16.mxu0 0
        %2823 = vmatmul.mubr.bf16.gmra.mrb[0].mxu0 %v2557
        %v2824 = vpop.f32.mrb[0].mxu0
        %v2825 = vadd.f32 %v2664, %v2824
        %v2826 = vpop.f32.mrb[0].mxu0
        %v2827 = vpop.f32.mrb[0].mxu0
        %v2828 = vadd.f32 %v2667, %v2827
        %v2829 = vpop.f32.mrb[0].mxu0
        %2830 = vmatprep.mubr.bf16.mxu0 0
        %2831 = vmatmul.mubr.bf16.gmra.mrb[0].mxu0 %v2560
        %v2832 = vpop.f32.mrb[0].mxu0
        %v2833 = vadd.f32 %v2672, %v2832
        %v2834 = vpop.f32.mrb[0].mxu0
        %v2835 = vpop.f32.mrb[0].mxu0
        %v2836 = vadd.f32 %v2675, %v2835
        %v2837 = vpop.f32.mrb[0].mxu0
        %2838 = vmatprep.mubr.bf16.mxu0 0
        %2839 = vmatmul.mubr.bf16.gmra.mrb[0].mxu0 %v2563
        %v2840 = vpop.f32.mrb[0].mxu0
        %v2841 = vadd.f32 %v2680, %v2840
        %v2842 = vpop.f32.mrb[0].mxu0
        %v2843 = vpop.f32.mrb[0].mxu0
        %v2844 = vadd.f32 %v2683, %v2843
        %v2845 = vpop.f32.mrb[0].mxu0
        %2846 = vmatprep.mubr.bf16.mxu0 0
        %2847 = vmatmul.mubr.bf16.gmra.mrb[0].mxu0 %v2566
        %v2848 = vpop.f32.mrb[0].mxu0
        %v2849 = vadd.f32 %v2688, %v2848
        %v2850 = vpop.f32.mrb[0].mxu0
        %v2851 = vpop.f32.mrb[0].mxu0
        %v2852 = vadd.f32 %v2691, %v2851
        %v2853 = vpop.f32.mrb[0].mxu0
        %2854 = vmatprep.mubr.bf16.mxu0 0
        %2855 = vmatmul.mubr.bf16.gmra.mrb[0].mxu0 %v2569
        %v2856 = vpop.f32.mrb[0].mxu0
        %v2857 = vadd.f32 %v2696, %v2856
        %v2858 = vpop.f32.mrb[0].mxu0
        %v2859 = vpop.f32.mrb[0].mxu0
        %v2860 = vadd.f32 %v2699, %v2859
        %v2861 = vpop.f32.mrb[0].mxu0
        %2862 = vmatprep.mubr.bf16.mxu0 0
        %2863 = vmatmul.mubr.bf16.gmra.mrb[0].mxu0 %v2572
        %v2864 = vpop.f32.mrb[0].mxu0
        %v2865 = vadd.f32 %v2704, %v2864
        %v2866 = vpop.f32.mrb[0].mxu0
        %v2867 = vpop.f32.mrb[0].mxu0
        %v2868 = vadd.f32 %v2707, %v2867
        %v2869 = vpop.f32.mrb[0].mxu0
        %2870 = vmatprep.mubr.bf16.mxu0 0
        %2871 = vmatmul.mubr.bf16.gmra.mrb[0].mxu0 %v2575
        %v2872 = vpop.f32.mrb[0].mxu0
        %v2873 = vadd.f32 %v2712, %v2872
        %v2874 = vpop.f32.mrb[0].mxu0
        %v2875 = vpop.f32.mrb[0].mxu0
        %v2876 = vadd.f32 %v2715, %v2875
        %v2877 = vpop.f32.mrb[0].mxu0
        %2878 = vmatprep.mubr.bf16.mxu0 0
        %2879 = vmatmul.mubr.bf16.gmra.mrb[0].mxu0 %v2578
        %v2880 = vpop.f32.mrb[0].mxu0
        %v2881 = vadd.f32 %v2720, %v2880
        %v2882 = vpop.f32.mrb[0].mxu0
        %v2883 = vpop.f32.mrb[0].mxu0
        %v2884 = vadd.f32 %v2723, %v2883
        %v2885 = vpop.f32.mrb[0].mxu0
        %2886 = vmatprep.mubr.bf16.mxu0 0
        %2887 = vmatmul.mubr.bf16.gmra.mrb[0].mxu0 %v2581
        %v2888 = vpop.f32.mrb[0].mxu0
        %v2889 = vadd.f32 %v2728, %v2888
        %v2890 = vpop.f32.mrb[0].mxu0
        %v2891 = vpop.f32.mrb[0].mxu0
        %v2892 = vadd.f32 %v2731, %v2891
        %v2893 = vpop.f32.mrb[0].mxu0
        %2894 = vmatprep.mubr.bf16.mxu0 0
        %2895 = vmatmul.mubr.bf16.gmra.mrb[0].mxu0 %v2584
        %v2896 = vpop.f32.mrb[0].mxu0
        %v2897 = vadd.f32 %v2736, %v2896
        %v2898 = vpop.f32.mrb[0].mxu0
        %v2899 = vpop.f32.mrb[0].mxu0
        %v2900 = vadd.f32 %v2739, %v2899
        %v2901 = vpop.f32.mrb[0].mxu0
        %2902 = vmatprep.mubr.bf16.mxu0 0
        %2903 = vmatmul.mubr.bf16.gmra.mrb[0].mxu0 %v2587
        %v2904 = vpop.f32.mrb[0].mxu0
        %v2905 = vadd.f32 %v2744, %v2904
        %v2906 = vpop.f32.mrb[0].mxu0
        %v2907 = vpop.f32.mrb[0].mxu0
        %v2908 = vadd.f32 %v2747, %v2907
        %v2909 = vpop.f32.mrb[0].mxu0
        %2910 = vdwg.mxu0
        %s2911 = scalar_lea.vmem [#allocation8], 1
        %v2912 = vld [vmem:[%s2911] sm:$0x1]
        %v2914 = vlaneseq
        %v2915 = vshrl.u32 %v2914, 7
        %v2916 = vsub.s32 0, %v2915
        %v2917 = vrot.slane %v2912, %v2916
        %v2919 = vmul.f32 %v2785, %v2917
        %v2920 = vmul.f32 %v2788, %v2917
        %v2921 = vmul.f32 %v2793, %v2917
        %v2922 = vmul.f32 %v2796, %v2917
        %v2923 = vmul.f32 %v2801, %v2917
        %v2924 = vmul.f32 %v2804, %v2917
        %v2925 = vmul.f32 %v2809, %v2917
        %v2926 = vmul.f32 %v2812, %v2917
        %v2927 = vmul.f32 %v2817, %v2917
        %v2928 = vmul.f32 %v2820, %v2917
        %v2929 = vmul.f32 %v2825, %v2917
        %v2930 = vmul.f32 %v2828, %v2917
        %v2931 = vmul.f32 %v2833, %v2917
        %v2932 = vmul.f32 %v2836, %v2917
        %v2933 = vmul.f32 %v2841, %v2917
        %v2934 = vmul.f32 %v2844, %v2917
        %v2935 = vmul.f32 %v2849, %v2917
        %v2936 = vmul.f32 %v2852, %v2917
        %v2937 = vmul.f32 %v2857, %v2917
        %v2938 = vmul.f32 %v2860, %v2917
        %v2939 = vmul.f32 %v2865, %v2917
        %v2940 = vmul.f32 %v2868, %v2917
        %v2941 = vmul.f32 %v2873, %v2917
        %v2942 = vmul.f32 %v2876, %v2917
        %v2943 = vmul.f32 %v2881, %v2917
        %v2944 = vmul.f32 %v2884, %v2917
        %v2945 = vmul.f32 %v2889, %v2917
        %v2946 = vmul.f32 %v2892, %v2917
        %v2947 = vmul.f32 %v2897, %v2917
        %v2948 = vmul.f32 %v2900, %v2917
        %v2949 = vmul.f32 %v2905, %v2917
        %v2950 = vmul.f32 %v2908, %v2917
        %s2951 = scalar_lea.vmem [#allocation10], 1
        %v2952 = vld [vmem:[%s2951] sm:$0x1]
        %v2954 = vlaneseq
        %v2955 = vshrl.u32 %v2954, 7
        %v2956 = vsub.s32 0, %v2955
        %v2957 = vrot.slane %v2952, %v2956
        %v2959 = vadd.f32 %v2919, %v2957
        %v2960 = vadd.f32 %v2920, %v2957
        %v2961 = vadd.f32 %v2921, %v2957
        %v2962 = vadd.f32 %v2922, %v2957
        %v2963 = vadd.f32 %v2923, %v2957
        %v2964 = vadd.f32 %v2924, %v2957
        %v2965 = vadd.f32 %v2925, %v2957
        %v2966 = vadd.f32 %v2926, %v2957
        %v2967 = vadd.f32 %v2927, %v2957
        %v2968 = vadd.f32 %v2928, %v2957
        %v2969 = vadd.f32 %v2929, %v2957
        %v2970 = vadd.f32 %v2930, %v2957
        %v2971 = vadd.f32 %v2931, %v2957
        %v2972 = vadd.f32 %v2932, %v2957
        %v2973 = vadd.f32 %v2933, %v2957
        %v2974 = vadd.f32 %v2934, %v2957
        %v2975 = vadd.f32 %v2935, %v2957
        %v2976 = vadd.f32 %v2936, %v2957
        %v2977 = vadd.f32 %v2937, %v2957
        %v2978 = vadd.f32 %v2938, %v2957
        %v2979 = vadd.f32 %v2939, %v2957
        %v2980 = vadd.f32 %v2940, %v2957
        %v2981 = vadd.f32 %v2941, %v2957
        %v2982 = vadd.f32 %v2942, %v2957
        %v2983 = vadd.f32 %v2943, %v2957
        %v2984 = vadd.f32 %v2944, %v2957
        %v2985 = vadd.f32 %v2945, %v2957
        %v2986 = vadd.f32 %v2946, %v2957
        %v2987 = vadd.f32 %v2947, %v2957
        %v2988 = vadd.f32 %v2948, %v2957
        %v2989 = vadd.f32 %v2949, %v2957
        %v2990 = vadd.f32 %v2950, %v2957
        %v2991 = vmax.f32 %v2959, 0.0
        %v2992 = vmax.f32 %v2960, 0.0
        %v2993 = vmax.f32 %v2961, 0.0
        %v2994 = vmax.f32 %v2962, 0.0
        %v2995 = vmax.f32 %v2963, 0.0
        %v2996 = vmax.f32 %v2964, 0.0
        %v2997 = vmax.f32 %v2965, 0.0
        %v2998 = vmax.f32 %v2966, 0.0
        %v2999 = vmax.f32 %v2967, 0.0
        %v3000 = vmax.f32 %v2968, 0.0
        %v3001 = vmax.f32 %v2969, 0.0
        %v3002 = vmax.f32 %v2970, 0.0
        %v3003 = vmax.f32 %v2971, 0.0
        %v3004 = vmax.f32 %v2972, 0.0
        %v3005 = vmax.f32 %v2973, 0.0
        %v3006 = vmax.f32 %v2974, 0.0
        %v3007 = vmax.f32 %v2975, 0.0
        %v3008 = vmax.f32 %v2976, 0.0
        %v3009 = vmax.f32 %v2977, 0.0
        %v3010 = vmax.f32 %v2978, 0.0
        %v3011 = vmax.f32 %v2979, 0.0
        %v3012 = vmax.f32 %v2980, 0.0
        %v3013 = vmax.f32 %v2981, 0.0
        %v3014 = vmax.f32 %v2982, 0.0
        %v3015 = vmax.f32 %v2983, 0.0
        %v3016 = vmax.f32 %v2984, 0.0
        %v3017 = vmax.f32 %v2985, 0.0
        %v3018 = vmax.f32 %v2986, 0.0
        %v3019 = vmax.f32 %v2987, 0.0
        %v3020 = vmax.f32 %v2988, 0.0
        %v3021 = vmax.f32 %v2989, 0.0
        %v3022 = vmax.f32 %v2990, 0.0
        %v3029 = vrot.slane %v428, 5
        %v3030 = vrot.slane %v3029, 4
        %v3031 = vrot.slane %v429, 5
        %v3032 = vsel %vm1526, %v3030, %v3031
        %v3033 = vrot.slane %v3031, 4
        %v3034 = vrot.slane %v430, 5
        %v3035 = vsel %vm1526, %v3033, %v3034
        %v3036 = vrot.slane %v432, 5
        %v3037 = vrot.slane %v3036, 4
        %v3038 = vrot.slane %v433, 5
        %v3039 = vsel %vm1526, %v3037, %v3038
        %v3040 = vrot.slane %v3038, 4
        %v3041 = vrot.slane %v434, 5
        %v3042 = vsel %vm1526, %v3040, %v3041
        %v3043 = vrot.slane %v436, 5
        %v3044 = vrot.slane %v3043, 4
        %v3045 = vsel %vm1526, %v3044, %v1527
        %v3046 = vrot.slane %v440, 5
        %v3047 = vrot.slane %v3046, 4
        %v3048 = vsel %vm1526, %v3047, %v1534
        %v3049 = vrot.slane %v444, 5
        %v3050 = vrot.slane %v3049, 4
        %v3051 = vsel %vm1526, %v3050, %v1541
        %v3052 = vrot.slane %v448, 5
        %v3053 = vrot.slane %v3052, 4
        %v3054 = vsel %vm1526, %v3053, %v1548
        %v3055 = vrot.slane %v452, 5
        %v3056 = vrot.slane %v3055, 4
        %v3057 = vsel %vm1526, %v3056, %v1555
        %v3058 = vrot.slane %v456, 5
        %v3059 = vrot.slane %v3058, 4
        %v3060 = vsel %vm1526, %v3059, %v1562
        %v3061 = vrot.slane %v460, 5
        %v3062 = vrot.slane %v3061, 4
        %v3063 = vsel %vm1526, %v3062, %v1569
        %v3064 = vrot.slane %v464, 5
        %v3065 = vrot.slane %v3064, 4
        %v3066 = vsel %vm1526, %v3065, %v1576
        %v3067 = vrot.slane %v468, 5
        %v3068 = vrot.slane %v3067, 4
        %v3069 = vsel %vm1526, %v3068, %v1583
        %v3070 = vrot.slane %v472, 5
        %v3071 = vrot.slane %v3070, 4
        %v3072 = vsel %vm1526, %v3071, %v1590
        %v3073 = vrot.slane %v476, 5
        %v3074 = vrot.slane %v3073, 4
        %v3075 = vsel %vm1526, %v3074, %v1597
        %v3076 = vrot.slane %v480, 5
        %v3077 = vrot.slane %v3076, 4
        %v3078 = vsel %vm1526, %v3077, %v1604
        %v3079 = vrot.slane %v484, 5
        %v3080 = vrot.slane %v3079, 4
        %v3081 = vsel %vm1526, %v3080, %v1611
        %v3082 = vrot.slane %v488, 5
        %v3083 = vrot.slane %v3082, 4
        %v3084 = vsel %vm1526, %v3083, %v1618
        %v3086 = vshrl.u32 %v428, 16
        %v3088 = vrot.slane %v3086, 7
        %v3089 = vrot.slane %v3088, 4
        %v3091 = vshrl.u32 %v429, 16
        %v3093 = vrot.slane %v3091, 7
        %v3094 = vshll.u32 %v429, 16
        %v3096 = vor.u32 %v3093, %v3094
        %v3097 = vsel %vm542, %v3089, %v3096
        %v3098 = vrot.slane %v3093, 4
        %v3100 = vshrl.u32 %v430, 16
        %v3102 = vrot.slane %v3100, 7
        %v3103 = vshll.u32 %v430, 16
        %v3105 = vor.u32 %v3102, %v3103
        %v3106 = vsel %vm542, %v3098, %v3105
        %v3108 = vshrl.u32 %v432, 16
        %v3110 = vrot.slane %v3108, 7
        %v3111 = vrot.slane %v3110, 4
        %v3113 = vshrl.u32 %v433, 16
        %v3115 = vrot.slane %v3113, 7
        %v3116 = vshll.u32 %v433, 16
        %v3118 = vor.u32 %v3115, %v3116
        %v3119 = vsel %vm542, %v3111, %v3118
        %v3120 = vrot.slane %v3115, 4
        %v3122 = vshrl.u32 %v434, 16
        %v3124 = vrot.slane %v3122, 7
        %v3125 = vshll.u32 %v434, 16
        %v3127 = vor.u32 %v3124, %v3125
        %v3128 = vsel %vm542, %v3120, %v3127
        %v3131 = vrot.slane %v429, 6
        %v3132 = vrot.slane %v3131, 4
        %v3133 = vrot.slane %v430, 6
        %v3134 = vsel %vm1329, %v3132, %v3133
        %v3135 = vrot.slane %v3133, 4
        %v3136 = vrot.slane %v431, 6
        %v3137 = vsel %vm1329, %v3135, %v3136
        %v3138 = vrot.slane %v433, 6
        %v3139 = vrot.slane %v3138, 4
        %v3140 = vrot.slane %v434, 6
        %v3141 = vsel %vm1329, %v3139, %v3140
        %v3142 = vrot.slane %v3140, 4
        %v3143 = vrot.slane %v435, 6
        %v3144 = vsel %vm1329, %v3142, %v3143
        %v3145 = vrot.slane %v1335, 4
        %v3146 = vrot.slane %v439, 6
        %v3147 = vsel %vm1329, %v3145, %v3146
        %v3148 = vrot.slane %v1342, 4
        %v3149 = vrot.slane %v443, 6
        %v3150 = vsel %vm1329, %v3148, %v3149
        %v3151 = vrot.slane %v1349, 4
        %v3152 = vrot.slane %v447, 6
        %v3153 = vsel %vm1329, %v3151, %v3152
        %v3154 = vrot.slane %v1356, 4
        %v3155 = vrot.slane %v451, 6
        %v3156 = vsel %vm1329, %v3154, %v3155
        %v3157 = vrot.slane %v1363, 4
        %v3158 = vrot.slane %v455, 6
        %v3159 = vsel %vm1329, %v3157, %v3158
        %v3160 = vrot.slane %v1370, 4
        %v3161 = vrot.slane %v459, 6
        %v3162 = vsel %vm1329, %v3160, %v3161
        %v3163 = vrot.slane %v1377, 4
        %v3164 = vrot.slane %v463, 6
        %v3165 = vsel %vm1329, %v3163, %v3164
        %v3166 = vrot.slane %v1384, 4
        %v3167 = vrot.slane %v467, 6
        %v3168 = vsel %vm1329, %v3166, %v3167
        %v3169 = vrot.slane %v1391, 4
        %v3170 = vrot.slane %v471, 6
        %v3171 = vsel %vm1329, %v3169, %v3170
        %v3172 = vrot.slane %v1398, 4
        %v3173 = vrot.slane %v475, 6
        %v3174 = vsel %vm1329, %v3172, %v3173
        %v3175 = vrot.slane %v1405, 4
        %v3176 = vrot.slane %v479, 6
        %v3177 = vsel %vm1329, %v3175, %v3176
        %v3178 = vrot.slane %v1412, 4
        %v3179 = vrot.slane %v483, 6
        %v3180 = vsel %vm1329, %v3178, %v3179
        %v3181 = vrot.slane %v1419, 4
        %v3182 = vrot.slane %v487, 6
        %v3183 = vsel %vm1329, %v3181, %v3182
        %v3184 = vrot.slane %v1426, 4
        %v3185 = vrot.slane %v491, 6
        %v3186 = vsel %vm1329, %v3184, %v3185
        %v3187 = vrot.slane %v492, 5
        %v3188 = vrot.slane %v3187, 4
        %v3189 = vsel %vm1526, %v3188, %v1625
        %v3190 = vrot.slane %v496, 5
        %v3191 = vrot.slane %v3190, 4
        %v3192 = vsel %vm1526, %v3191, %v1632
        %v3193 = vrot.slane %v500, 5
        %v3194 = vrot.slane %v3193, 4
        %v3195 = vsel %vm1526, %v3194, %v1672
        %v3196 = vrot.slane %v504, 5
        %v3197 = vrot.slane %v3196, 4
        %v3198 = vsel %vm1526, %v3197, %v1679
        %v3199 = vrot.slane %v508, 5
        %v3200 = vrot.slane %v3199, 4
        %v3201 = vsel %vm1526, %v3200, %v1686
        %v3202 = vrot.slane %v1433, 4
        %v3203 = vrot.slane %v495, 6
        %v3204 = vsel %vm1329, %v3202, %v3203
        %v3205 = vrot.slane %v1440, 4
        %v3206 = vrot.slane %v499, 6
        %v3207 = vsel %vm1329, %v3205, %v3206
        %v3208 = vrot.slane %v1653, 4
        %v3209 = vrot.slane %v503, 6
        %v3210 = vsel %vm1329, %v3208, %v3209
        %v3211 = vrot.slane %v1660, 4
        %v3212 = vrot.slane %v507, 6
        %v3213 = vsel %vm1329, %v3211, %v3212
        %v3214 = vrot.slane %v1667, 4
        %v3215 = vrot.slane %v511, 6
        %v3216 = vsel %vm1329, %v3214, %v3215
        %v3223 = vrot.slane %v512, 5
        %v3224 = vrot.slane %v3223, 4
        %v3225 = vsel %vm1526, %v3224, %v1792
        %v3226 = vrot.slane %v516, 5
        %v3227 = vrot.slane %v3226, 4
        %v3228 = vsel %vm1526, %v3227, %v1799
        %v3229 = vrot.slane %v520, 5
        %v3230 = vrot.slane %v3229, 4
        %v3231 = vsel %vm1526, %v3230, %v1806
        %v3232 = vrot.slane %v524, 5
        %v3233 = vrot.slane %v3232, 4
        %v3234 = vrot.slane %v525, 5
        %v3235 = vsel %vm1526, %v3233, %v3234
        %v3236 = vrot.slane %v3234, 4
        %v3237 = vrot.slane %v526, 5
        %v3238 = vsel %vm1526, %v3236, %v3237
        %v3239 = vrot.slane %v528, 5
        %v3240 = vrot.slane %v3239, 4
        %v3241 = vrot.slane %v529, 5
        %v3242 = vsel %vm1526, %v3240, %v3241
        %v3243 = vrot.slane %v3241, 4
        %v3244 = vrot.slane %v530, 5
        %v3245 = vsel %vm1526, %v3243, %v3244
        %v3247 = vshrl.u32 %v524, 16
        %v3249 = vrot.slane %v3247, 7
        %v3250 = vrot.slane %v3249, 4
        %v3252 = vshrl.u32 %v525, 16
        %v3254 = vrot.slane %v3252, 7
        %v3255 = vshll.u32 %v525, 16
        %v3257 = vor.u32 %v3254, %v3255
        %v3258 = vsel %vm542, %v3250, %v3257
        %v3259 = vrot.slane %v3254, 4
        %v3261 = vshrl.u32 %v526, 16
        %v3263 = vrot.slane %v3261, 7
        %v3264 = vshll.u32 %v526, 16
        %v3266 = vor.u32 %v3263, %v3264
        %v3267 = vsel %vm542, %v3259, %v3266
        %v3269 = vshrl.u32 %v528, 16
        %v3271 = vrot.slane %v3269, 7
        %v3272 = vrot.slane %v3271, 4
        %v3274 = vshrl.u32 %v529, 16
        %v3276 = vrot.slane %v3274, 7
        %v3277 = vshll.u32 %v529, 16
        %v3279 = vor.u32 %v3276, %v3277
        %v3280 = vsel %vm542, %v3272, %v3279
        %v3281 = vrot.slane %v3276, 4
        %v3283 = vshrl.u32 %v530, 16
        %v3285 = vrot.slane %v3283, 7
        %v3286 = vshll.u32 %v530, 16
        %v3288 = vor.u32 %v3285, %v3286
        %v3289 = vsel %vm542, %v3281, %v3288
        %v3292 = vrot.slane %v1707, 4
        %v3293 = vrot.slane %v515, 6
        %v3294 = vsel %vm1329, %v3292, %v3293
        %v3295 = vrot.slane %v1714, 4
        %v3296 = vrot.slane %v519, 6
        %v3297 = vsel %vm1329, %v3295, %v3296
        %v3298 = vrot.slane %v1721, 4
        %v3299 = vrot.slane %v523, 6
        %v3300 = vsel %vm1329, %v3298, %v3299
        %v3301 = vrot.slane %v525, 6
        %v3302 = vrot.slane %v3301, 4
        %v3303 = vrot.slane %v526, 6
        %v3304 = vsel %vm1329, %v3302, %v3303
        %v3305 = vrot.slane %v3303, 4
        %v3306 = vrot.slane %v527, 6
        %v3307 = vsel %vm1329, %v3305, %v3306
        %v3308 = vrot.slane %v529, 6
        %v3309 = vrot.slane %v3308, 4
        %v3310 = vrot.slane %v530, 6
        %v3311 = vsel %vm1329, %v3309, %v3310
        %v3312 = vrot.slane %v3310, 4
        %v3313 = vrot.slane %v531, 6
        %v3314 = vsel %vm1329, %v3312, %v3313
        %v3315 = vunpack.c.l.b16 %v3032
        %v3316 = vunpack.c.l.b16 %v3035
        %v3317 = vunpack.c.l.b16 %v3039
        %v3318 = vunpack.c.l.b16 %v3042
        %v3319 = vunpack.c.l.b16 %v3045
        %v3320 = vunpack.c.l.b16 %v3048
        %v3321 = vunpack.c.l.b16 %v3051
        %v3322 = vunpack.c.l.b16 %v3054
        %v3323 = vunpack.c.l.b16 %v3057
        %v3324 = vunpack.c.l.b16 %v3060
        %v3325 = vunpack.c.l.b16 %v3063
        %v3326 = vunpack.c.l.b16 %v3066
        %v3327 = vunpack.c.l.b16 %v3069
        %v3328 = vunpack.c.l.b16 %v3072
        %v3329 = vunpack.c.l.b16 %v3075
        %v3330 = vunpack.c.l.b16 %v3078
        %v3331 = vunpack.c.l.b16 %v3081
        %v3332 = vunpack.c.l.b16 %v3084
        %v3333 = vpack.c.b16 %v3316, %v3315
        %v3334 = vpack.c.b16 %v3318, %v3317
        %v3335 = vpack.c.b16 %v1902, %v3319
        %v3336 = vpack.c.b16 %v1904, %v3320
        %v3337 = vpack.c.b16 %v1906, %v3321
        %v3338 = vpack.c.b16 %v1908, %v3322
        %v3339 = vpack.c.b16 %v1910, %v3323
        %v3340 = vpack.c.b16 %v1912, %v3324
        %v3341 = vpack.c.b16 %v1914, %v3325
        %v3342 = vpack.c.b16 %v1916, %v3326
        %v3343 = vpack.c.b16 %v1918, %v3327
        %v3344 = vpack.c.b16 %v1920, %v3328
        %v3345 = vpack.c.b16 %v1922, %v3329
        %v3346 = vpack.c.b16 %v1924, %v3330
        %v3347 = vpack.c.b16 %v1926, %v3331
        %v3348 = vpack.c.b16 %v1928, %v3332
        %v3349 = vunpack.c.l.b16 %v3097
        %v3350 = vunpack.c.l.b16 %v3106
        %v3351 = vunpack.c.l.b16 %v3119
        %v3352 = vunpack.c.l.b16 %v3128
        %v3353 = vpack.c.b16 %v3350, %v3349
        %v3354 = vpack.c.b16 %v3352, %v3351
        %3355 = vrot.lane.b32.xlu0 %v3353, 32
        %v3356 = vpop.permute.xlu0 %3355
        %3357 = vrot.lane.b32.xlu0 %v3354, 32
        %v3358 = vpop.permute.xlu0 %3357
        %v3359 = vunpack.c.l.b16 %v3134
        %v3360 = vunpack.c.l.b16 %v3137
        %v3361 = vunpack.c.l.b16 %v3141
        %v3362 = vunpack.c.l.b16 %v3144
        %v3363 = vunpack.c.l.b16 %v3147
        %v3364 = vunpack.c.l.b16 %v3150
        %v3365 = vunpack.c.l.b16 %v3153
        %v3366 = vunpack.c.l.b16 %v3156
        %v3367 = vunpack.c.l.b16 %v3159
        %v3368 = vunpack.c.l.b16 %v3162
        %v3369 = vunpack.c.l.b16 %v3165
        %v3370 = vunpack.c.l.b16 %v3168
        %v3371 = vunpack.c.l.b16 %v3171
        %v3372 = vunpack.c.l.b16 %v3174
        %v3373 = vunpack.c.l.b16 %v3177
        %v3374 = vunpack.c.l.b16 %v3180
        %v3375 = vunpack.c.l.b16 %v3183
        %v3376 = vunpack.c.l.b16 %v3186
        %v3377 = vpack.c.b16 %v3360, %v3359
        %v3378 = vpack.c.b16 %v3362, %v3361
        %v3379 = vpack.c.b16 %v3363, %v1814
        %v3380 = vpack.c.b16 %v3364, %v1816
        %v3381 = vpack.c.b16 %v3365, %v1818
        %v3382 = vpack.c.b16 %v3366, %v1820
        %v3383 = vpack.c.b16 %v3367, %v1822
        %v3384 = vpack.c.b16 %v3368, %v1824
        %v3385 = vpack.c.b16 %v3369, %v1826
        %v3386 = vpack.c.b16 %v3370, %v1828
        %v3387 = vpack.c.b16 %v3371, %v1830
        %v3388 = vpack.c.b16 %v3372, %v1832
        %v3389 = vpack.c.b16 %v3373, %v1834
        %v3390 = vpack.c.b16 %v3374, %v1836
        %v3391 = vpack.c.b16 %v3375, %v1838
        %v3392 = vpack.c.b16 %v3376, %v1840
        %3393 = vrot.lane.b32.xlu0 %v3377, 64
        %v3394 = vpop.permute.xlu0 %3393
        %3395 = vrot.lane.b32.xlu0 %v3378, 64
        %v3396 = vpop.permute.xlu0 %3395
        %3397 = vrot.lane.b32.xlu0 %v3379, 64
        %v3398 = vpop.permute.xlu0 %3397
        %3399 = vrot.lane.b32.xlu0 %v3380, 64
        %v3400 = vpop.permute.xlu0 %3399
        %3401 = vrot.lane.b32.xlu0 %v3381, 64
        %v3402 = vpop.permute.xlu0 %3401
        %3403 = vrot.lane.b32.xlu0 %v3382, 64
        %v3404 = vpop.permute.xlu0 %3403
        %3405 = vrot.lane.b32.xlu0 %v3383, 64
        %v3406 = vpop.permute.xlu0 %3405
        %3407 = vrot.lane.b32.xlu0 %v3384, 64
        %v3408 = vpop.permute.xlu0 %3407
        %3409 = vrot.lane.b32.xlu0 %v3385, 64
        %v3410 = vpop.permute.xlu0 %3409
        %3411 = vrot.lane.b32.xlu0 %v3386, 64
        %v3412 = vpop.permute.xlu0 %3411
        %3413 = vrot.lane.b32.xlu0 %v3387, 64
        %v3414 = vpop.permute.xlu0 %3413
        %3415 = vrot.lane.b32.xlu0 %v3388, 64
        %v3416 = vpop.permute.xlu0 %3415
        %3417 = vrot.lane.b32.xlu0 %v3389, 64
        %v3418 = vpop.permute.xlu0 %3417
        %3419 = vrot.lane.b32.xlu0 %v3390, 64
        %v3420 = vpop.permute.xlu0 %3419
        %3421 = vrot.lane.b32.xlu0 %v3391, 64
        %v3422 = vpop.permute.xlu0 %3421
        %3423 = vrot.lane.b32.xlu0 %v3392, 64
        %v3424 = vpop.permute.xlu0 %3423
        %v3425 = vunpack.c.l.b16 %v3189
        %v3426 = vunpack.c.l.b16 %v3192
        %v3427 = vunpack.c.l.b16 %v3195
        %v3428 = vunpack.c.l.b16 %v3198
        %v3429 = vunpack.c.l.b16 %v3201
        %v3430 = vpack.c.b16 %v1930, %v3425
        %v3431 = vpack.c.b16 %v1932, %v3426
        %v3432 = vpack.c.b16 %v2023, %v3427
        %v3433 = vpack.c.b16 %v2025, %v3428
        %v3434 = vpack.c.b16 %v2027, %v3429
        %3435 = vrot.lane.b32.xlu0 %v3338, 96
        %v3436 = vpop.permute.xlu0 %3435
        %3437 = vrot.lane.b32.xlu0 %v3339, 96
        %v3438 = vpop.permute.xlu0 %3437
        %3439 = vrot.lane.b32.xlu0 %v3340, 96
        %v3440 = vpop.permute.xlu0 %3439
        %3441 = vrot.lane.b32.xlu0 %v3341, 96
        %v3442 = vpop.permute.xlu0 %3441
        %3443 = vrot.lane.b32.xlu0 %v3342, 96
        %v3444 = vpop.permute.xlu0 %3443
        %3445 = vrot.lane.b32.xlu0 %v3343, 96
        %v3446 = vpop.permute.xlu0 %3445
        %3447 = vrot.lane.b32.xlu0 %v3344, 96
        %v3448 = vpop.permute.xlu0 %3447
        %3449 = vrot.lane.b32.xlu0 %v3345, 96
        %v3450 = vpop.permute.xlu0 %3449
        %3451 = vrot.lane.b32.xlu0 %v3346, 96
        %v3452 = vpop.permute.xlu0 %3451
        %3453 = vrot.lane.b32.xlu0 %v3347, 96
        %v3454 = vpop.permute.xlu0 %3453
        %3455 = vrot.lane.b32.xlu0 %v3348, 96
        %v3456 = vpop.permute.xlu0 %3455
        %3457 = vrot.lane.b32.xlu0 %v3430, 96
        %v3458 = vpop.permute.xlu0 %3457
        %3459 = vrot.lane.b32.xlu0 %v3431, 96
        %v3460 = vpop.permute.xlu0 %3459
        %3461 = vrot.lane.b32.xlu0 %v3432, 96
        %v3462 = vpop.permute.xlu0 %3461
        %3463 = vrot.lane.b32.xlu0 %v3433, 96
        %v3464 = vpop.permute.xlu0 %3463
        %3465 = vrot.lane.b32.xlu0 %v3434, 96
        %v3466 = vpop.permute.xlu0 %3465
        %v3467 = vunpack.c.l.b16 %v3204
        %v3468 = vunpack.c.l.b16 %v3207
        %v3469 = vunpack.c.l.b16 %v3210
        %v3470 = vunpack.c.l.b16 %v3213
        %v3471 = vunpack.c.l.b16 %v3216
        %v3472 = vpack.c.b16 %v3467, %v1842
        %v3473 = vpack.c.b16 %v3468, %v1844
        %v3474 = vpack.c.b16 %v3469, %v1983
        %v3475 = vpack.c.b16 %v3470, %v1985
        %v3476 = vpack.c.b16 %v3471, %v1987
        %3477 = vrot.lane.b32.xlu0 %v3382, 32
        %v3478 = vpop.permute.xlu0 %3477
        %3479 = vrot.lane.b32.xlu0 %v3383, 32
        %v3480 = vpop.permute.xlu0 %3479
        %3481 = vrot.lane.b32.xlu0 %v3384, 32
        %v3482 = vpop.permute.xlu0 %3481
        %3483 = vrot.lane.b32.xlu0 %v3385, 32
        %v3484 = vpop.permute.xlu0 %3483
        %3485 = vrot.lane.b32.xlu0 %v3386, 32
        %v3486 = vpop.permute.xlu0 %3485
        %3487 = vrot.lane.b32.xlu0 %v3387, 32
        %v3488 = vpop.permute.xlu0 %3487
        %3489 = vrot.lane.b32.xlu0 %v3388, 32
        %v3490 = vpop.permute.xlu0 %3489
        %3491 = vrot.lane.b32.xlu0 %v3389, 32
        %v3492 = vpop.permute.xlu0 %3491
        %3493 = vrot.lane.b32.xlu0 %v3390, 32
        %v3494 = vpop.permute.xlu0 %3493
        %3495 = vrot.lane.b32.xlu0 %v3391, 32
        %v3496 = vpop.permute.xlu0 %3495
        %3497 = vrot.lane.b32.xlu0 %v3392, 32
        %v3498 = vpop.permute.xlu0 %3497
        %3499 = vrot.lane.b32.xlu0 %v3472, 32
        %v3500 = vpop.permute.xlu0 %3499
        %3501 = vrot.lane.b32.xlu0 %v3473, 32
        %v3502 = vpop.permute.xlu0 %3501
        %3503 = vrot.lane.b32.xlu0 %v3474, 32
        %v3504 = vpop.permute.xlu0 %3503
        %3505 = vrot.lane.b32.xlu0 %v3475, 32
        %v3506 = vpop.permute.xlu0 %3505
        %3507 = vrot.lane.b32.xlu0 %v3476, 32
        %v3508 = vpop.permute.xlu0 %3507
        %v3509 = vunpack.c.l.b16 %v3225
        %v3510 = vunpack.c.l.b16 %v3228
        %v3511 = vunpack.c.l.b16 %v3231
        %v3512 = vunpack.c.l.b16 %v3235
        %v3513 = vunpack.c.l.b16 %v3238
        %v3514 = vunpack.c.l.b16 %v3242
        %v3515 = vunpack.c.l.b16 %v3245
        %v3516 = vpack.c.b16 %v2146, %v3509
        %v3517 = vpack.c.b16 %v2148, %v3510
        %v3518 = vpack.c.b16 %v2150, %v3511
        %v3519 = vpack.c.b16 %v3513, %v3512
        %v3520 = vpack.c.b16 %v3515, %v3514
        %3521 = vrot.lane.b32.xlu0 %v3343, 64
        %v3522 = vpop.permute.xlu0 %3521
        %3523 = vrot.lane.b32.xlu0 %v3344, 64
        %v3524 = vpop.permute.xlu0 %3523
        %3525 = vrot.lane.b32.xlu0 %v3345, 64
        %v3526 = vpop.permute.xlu0 %3525
        %3527 = vrot.lane.b32.xlu0 %v3346, 64
        %v3528 = vpop.permute.xlu0 %3527
        %3529 = vrot.lane.b32.xlu0 %v3347, 64
        %v3530 = vpop.permute.xlu0 %3529
        %3531 = vrot.lane.b32.xlu0 %v3348, 64
        %v3532 = vpop.permute.xlu0 %3531
        %3533 = vrot.lane.b32.xlu0 %v3430, 64
        %v3534 = vpop.permute.xlu0 %3533
        %3535 = vrot.lane.b32.xlu0 %v3431, 64
        %v3536 = vpop.permute.xlu0 %3535
        %3537 = vrot.lane.b32.xlu0 %v3432, 64
        %v3538 = vpop.permute.xlu0 %3537
        %3539 = vrot.lane.b32.xlu0 %v3433, 64
        %v3540 = vpop.permute.xlu0 %3539
        %3541 = vrot.lane.b32.xlu0 %v3434, 64
        %v3542 = vpop.permute.xlu0 %3541
        %3543 = vrot.lane.b32.xlu0 %v3516, 64
        %v3544 = vpop.permute.xlu0 %3543
        %3545 = vrot.lane.b32.xlu0 %v3517, 64
        %v3546 = vpop.permute.xlu0 %3545
        %3547 = vrot.lane.b32.xlu0 %v3518, 64
        %v3548 = vpop.permute.xlu0 %3547
        %3549 = vrot.lane.b32.xlu0 %v3519, 64
        %v3550 = vpop.permute.xlu0 %3549
        %3551 = vrot.lane.b32.xlu0 %v3520, 64
        %v3552 = vpop.permute.xlu0 %3551
        %v3553 = vunpack.c.l.b16 %v3258
        %v3554 = vunpack.c.l.b16 %v3267
        %v3555 = vunpack.c.l.b16 %v3280
        %v3556 = vunpack.c.l.b16 %v3289
        %v3557 = vpack.c.b16 %v3554, %v3553
        %v3558 = vpack.c.b16 %v3556, %v3555
        %3559 = vrot.lane.b32.xlu0 %v3557, 96
        %v3560 = vpop.permute.xlu0 %3559
        %3561 = vrot.lane.b32.xlu0 %v3558, 96
        %v3562 = vpop.permute.xlu0 %3561
        %v3563 = vunpack.c.l.b16 %v3294
        %v3564 = vunpack.c.l.b16 %v3297
        %v3565 = vunpack.c.l.b16 %v3300
        %v3566 = vunpack.c.l.b16 %v3304
        %v3567 = vunpack.c.l.b16 %v3307
        %v3568 = vunpack.c.l.b16 %v3311
        %v3569 = vunpack.c.l.b16 %v3314
        %v3570 = vpack.c.b16 %v3563, %v2065
        %v3571 = vpack.c.b16 %v3564, %v2067
        %v3572 = vpack.c.b16 %v3565, %v2069
        %v3573 = vpack.c.b16 %v3567, %v3566
        %v3574 = vpack.c.b16 %v3569, %v3568
        %v3577 = vsel %vm959, %v3333, %v3356
        %v3580 = vsel %vm959, %v3334, %v3358
        %v3582 = vsel %vm959, %v3335, %v1871
        %v3584 = vsel %vm959, %v3336, %v1873
        %v3586 = vsel %vm959, %v3337, %v1875
        %v3588 = vsel %vm959, %v3338, %v1877
        %v3590 = vsel %vm959, %v3339, %v1879
        %v3592 = vsel %vm959, %v3340, %v1881
        %v3594 = vsel %vm959, %v3341, %v1883
        %v3596 = vsel %vm959, %v3342, %v1885
        %v3598 = vsel %vm959, %v3343, %v1887
        %v3600 = vsel %vm959, %v3344, %v1889
        %v3602 = vsel %vm959, %v3345, %v1891
        %v3604 = vsel %vm959, %v3346, %v1893
        %v3606 = vsel %vm959, %v3347, %v1895
        %v3608 = vsel %vm959, %v3348, %v1897
        %v3610 = vsel %vm2203, %v3577, %v3394
        %v3612 = vsel %vm2203, %v3580, %v3396
        %v3614 = vsel %vm2203, %v3582, %v3398
        %v3616 = vsel %vm2203, %v3584, %v3400
        %v3618 = vsel %vm2203, %v3586, %v3402
        %v3620 = vsel %vm2203, %v3588, %v3404
        %v3622 = vsel %vm2203, %v3590, %v3406
        %v3624 = vsel %vm2203, %v3592, %v3408
        %v3626 = vsel %vm2203, %v3594, %v3410
        %v3628 = vsel %vm2203, %v3596, %v3412
        %v3630 = vsel %vm2203, %v3598, %v3414
        %v3632 = vsel %vm2203, %v3600, %v3416
        %v3634 = vsel %vm2203, %v3602, %v3418
        %v3636 = vsel %vm2203, %v3604, %v3420
        %v3638 = vsel %vm2203, %v3606, %v3422
        %v3640 = vsel %vm2203, %v3608, %v3424
        %v3642 = vsel %vm2236, %v3610, %v3436
        %v3645 = vsel %vm2236, %v3612, %v3438
        %v3648 = vsel %vm2236, %v3614, %v3440
        %v3651 = vsel %vm2236, %v3616, %v3442
        %v3654 = vsel %vm2236, %v3618, %v3444
        %v3657 = vsel %vm2236, %v3620, %v3446
        %v3660 = vsel %vm2236, %v3622, %v3448
        %v3663 = vsel %vm2236, %v3624, %v3450
        %v3666 = vsel %vm2236, %v3626, %v3452
        %v3669 = vsel %vm2236, %v3628, %v3454
        %v3672 = vsel %vm2236, %v3630, %v3456
        %v3675 = vsel %vm2236, %v3632, %v3458
        %v3678 = vsel %vm2236, %v3634, %v3460
        %v3681 = vsel %vm2236, %v3636, %v3462
        %v3684 = vsel %vm2236, %v3638, %v3464
        %v3687 = vsel %vm2236, %v3640, %v3466
        %v3690 = vsel %vm959, %v931, %v3478
        %v3692 = vsel %vm959, %v932, %v3480
        %v3694 = vsel %vm959, %v933, %v3482
        %v3696 = vsel %vm959, %v934, %v3484
        %v3698 = vsel %vm959, %v935, %v3486
        %v3700 = vsel %vm959, %v936, %v3488
        %v3702 = vsel %vm959, %v937, %v3490
        %v3704 = vsel %vm959, %v938, %v3492
        %v3706 = vsel %vm959, %v939, %v3494
        %v3708 = vsel %vm959, %v940, %v3496
        %v3710 = vsel %vm959, %v941, %v3498
        %v3712 = vsel %vm959, %v942, %v3500
        %v3714 = vsel %vm959, %v943, %v3502
        %v3716 = vsel %vm959, %v944, %v3504
        %v3718 = vsel %vm959, %v945, %v3506
        %v3720 = vsel %vm959, %v946, %v3508
        %v3722 = vsel %vm2203, %v3690, %v3522
        %v3724 = vsel %vm2203, %v3692, %v3524
        %v3726 = vsel %vm2203, %v3694, %v3526
        %v3728 = vsel %vm2203, %v3696, %v3528
        %v3730 = vsel %vm2203, %v3698, %v3530
        %v3732 = vsel %vm2203, %v3700, %v3532
        %v3734 = vsel %vm2203, %v3702, %v3534
        %v3736 = vsel %vm2203, %v3704, %v3536
        %v3738 = vsel %vm2203, %v3706, %v3538
        %v3740 = vsel %vm2203, %v3708, %v3540
        %v3742 = vsel %vm2203, %v3710, %v3542
        %v3744 = vsel %vm2203, %v3712, %v3544
        %v3746 = vsel %vm2203, %v3714, %v3546
        %v3748 = vsel %vm2203, %v3716, %v3548
        %v3750 = vsel %vm2203, %v3718, %v3550
        %v3752 = vsel %vm2203, %v3720, %v3552
        %v3753 = vsel %vm2236, %v3722, %v2119
        %v3755 = vsel %vm2236, %v3724, %v2121
        %v3757 = vsel %vm2236, %v3726, %v2123
        %v3759 = vsel %vm2236, %v3728, %v2125
        %v3761 = vsel %vm2236, %v3730, %v2127
        %v3763 = vsel %vm2236, %v3732, %v2129
        %v3765 = vsel %vm2236, %v3734, %v2131
        %v3767 = vsel %vm2236, %v3736, %v2133
        %v3769 = vsel %vm2236, %v3738, %v2135
        %v3771 = vsel %vm2236, %v3740, %v2137
        %v3773 = vsel %vm2236, %v3742, %v2139
        %v3775 = vsel %vm2236, %v3744, %v2141
        %v3777 = vsel %vm2236, %v3746, %v2143
        %v3779 = vsel %vm2236, %v3748, %v2145
        %v3782 = vsel %vm2236, %v3750, %v3560
        %v3785 = vsel %vm2236, %v3752, %v3562
        %s3787 = scalar_lea.vmem [#allocation7], 144
        %v3788 = vld [vmem:[%s3787] sm:$0xf]
        %v3789 = vld [vmem:[%s3787 + $0x4] sm:$0xf]
        %v3790 = vld [vmem:[%s3787 + $0x8] sm:$0xf]
        %v3791 = vld [vmem:[%s3787 + $0xc] sm:$0xf]
        %v3792 = vld [vmem:[%s3787 + $0x10] sm:$0xf]
        %v3793 = vld [vmem:[%s3787 + $0x14] sm:$0xf]
        %v3794 = vld [vmem:[%s3787 + $0x18] sm:$0xf]
        %v3795 = vld [vmem:[%s3787 + $0x1c] sm:$0xf]
        %v3796 = vld [vmem:[%s3787 + $0x20] sm:$0xf]
        %v3797 = vld [vmem:[%s3787 + $0x24] sm:$0xf]
        %v3798 = vld [vmem:[%s3787 + $0x28] sm:$0xf]
        %v3799 = vld [vmem:[%s3787 + $0x2c] sm:$0xf]
        %v3800 = vld [vmem:[%s3787 + $0x30] sm:$0xf]
        %v3801 = vld [vmem:[%s3787 + $0x34] sm:$0xf]
        %v3802 = vld [vmem:[%s3787 + $0x38] sm:$0xf]
        %v3803 = vld [vmem:[%s3787 + $0x3c] sm:$0xf]
        %v3804 = vld [vmem:[%s3787 + $0x40] sm:$0xf]
        %v3805 = vld [vmem:[%s3787 + $0x44] sm:$0xf]
        %v3806 = vld [vmem:[%s3787 + $0x48] sm:$0xf]
        %v3807 = vld [vmem:[%s3787 + $0x4c] sm:$0xf]
        %v3808 = vld [vmem:[%s3787 + $0x50] sm:$0xf]
        %v3809 = vld [vmem:[%s3787 + $0x54] sm:$0xf]
        %v3810 = vld [vmem:[%s3787 + $0x58] sm:$0xf]
        %v3811 = vld [vmem:[%s3787 + $0x5c] sm:$0xf]
        %v3812 = vld [vmem:[%s3787 + $0x60] sm:$0xf]
        %v3813 = vld [vmem:[%s3787 + $0x64] sm:$0xf]
        %v3814 = vld [vmem:[%s3787 + $0x68] sm:$0xf]
        %v3815 = vld [vmem:[%s3787 + $0x6c] sm:$0xf]
        %v3816 = vld [vmem:[%s3787 + $0x70] sm:$0xf]
        %v3817 = vld [vmem:[%s3787 + $0x74] sm:$0xf]
        %v3818 = vld [vmem:[%s3787 + $0x78] sm:$0xf]
        %v3819 = vld [vmem:[%s3787 + $0x7c] sm:$0xf]
        %v3820 = vld [vmem:[%s3787 + $0x80] sm:$0xf]
        %v3821 = vld [vmem:[%s3787 + $0x84] sm:$0xf]
        %v3822 = vld [vmem:[%s3787 + $0x88] sm:$0xf]
        %v3823 = vld [vmem:[%s3787 + $0x8c] sm:$0xf]
        %v3860 = vunpack.c.l.b16 %v3788
        %v3861 = vunpack.c.l.b16 %v3789
        %v3862 = vunpack.c.l.b16 %v3790
        %v3863 = vunpack.c.l.b16 %v3791
        %v3864 = vunpack.c.l.b16 %v3792
        %v3865 = vunpack.c.l.b16 %v3793
        %v3866 = vunpack.c.l.b16 %v3794
        %v3867 = vunpack.c.l.b16 %v3795
        %v3868 = vunpack.c.l.b16 %v3796
        %v3869 = vunpack.c.l.b16 %v3797
        %v3870 = vunpack.c.l.b16 %v3798
        %v3871 = vunpack.c.l.b16 %v3799
        %v3872 = vunpack.c.l.b16 %v3800
        %v3873 = vunpack.c.l.b16 %v3801
        %v3874 = vunpack.c.l.b16 %v3802
        %v3875 = vunpack.c.l.b16 %v3803
        %v3876 = vunpack.c.l.b16 %v3804
        %v3877 = vunpack.c.l.b16 %v3805
        %v3878 = vunpack.c.l.b16 %v3806
        %v3879 = vunpack.c.l.b16 %v3807
        %v3880 = vunpack.c.l.b16 %v3808
        %v3881 = vunpack.c.l.b16 %v3809
        %v3882 = vunpack.c.l.b16 %v3810
        %v3883 = vunpack.c.l.b16 %v3811
        %v3884 = vunpack.c.l.b16 %v3812
        %v3885 = vunpack.c.l.b16 %v3813
        %v3886 = vunpack.c.l.b16 %v3814
        %v3887 = vunpack.c.l.b16 %v3815
        %v3888 = vunpack.c.l.b16 %v3816
        %v3889 = vunpack.c.l.b16 %v3817
        %v3890 = vunpack.c.l.b16 %v3818
        %v3891 = vunpack.c.l.b16 %v3819
        %v3892 = vunpack.c.l.b16 %v3820
        %v3893 = vunpack.c.l.b16 %v3821
        %v3894 = vunpack.c.l.b16 %v3822
        %v3895 = vunpack.c.l.b16 %v3823
        %v3896 = vpack.c.b16 %v3861, %v3860
        %v3897 = vpack.c.b16 %v3863, %v3862
        %v3898 = vpack.c.b16 %v3865, %v3864
        %v3899 = vpack.c.b16 %v3867, %v3866
        %v3900 = vpack.c.b16 %v3869, %v3868
        %v3901 = vpack.c.b16 %v3871, %v3870
        %v3902 = vpack.c.b16 %v3873, %v3872
        %v3903 = vpack.c.b16 %v3875, %v3874
        %v3904 = vpack.c.b16 %v3877, %v3876
        %v3905 = vpack.c.b16 %v3879, %v3878
        %v3906 = vpack.c.b16 %v3881, %v3880
        %v3907 = vpack.c.b16 %v3883, %v3882
        %v3908 = vpack.c.b16 %v3885, %v3884
        %v3909 = vpack.c.b16 %v3887, %v3886
        %v3910 = vpack.c.b16 %v3889, %v3888
        %v3911 = vpack.c.b16 %v3891, %v3890
        %v3912 = vpack.c.b16 %v3893, %v3892
        %v3913 = vpack.c.b16 %v3895, %v3894
        %v3933 = vsel %vm959, %v3387, 0
        %v3936 = vsel %vm959, %v3388, 0
        %v3939 = vsel %vm959, %v3389, 0
        %v3942 = vsel %vm959, %v3390, 0
        %v3945 = vsel %vm959, %v3391, 0
        %v3948 = vsel %vm959, %v3392, 0
        %v3951 = vsel %vm959, %v3472, 0
        %v3954 = vsel %vm959, %v3473, 0
        %v3957 = vsel %vm959, %v3474, 0
        %v3960 = vsel %vm959, %v3475, 0
        %v3963 = vsel %vm959, %v3476, 0
        %v3966 = vsel %vm959, %v3570, 0
        %v3969 = vsel %vm959, %v3571, 0
        %v3972 = vsel %vm959, %v3572, 0
        %v3975 = vsel %vm959, %v3573, 0
        %v3978 = vsel %vm959, %v3574, 0
        %3980 = vmatprep.subr.bf16.mxu0 0
        %3981 = vmatpush1.bf16.msra.mxu0 %v3896
        %3982 = vmatprep.subr.bf16.mxu0 0
        %3983 = vmatpush1.bf16.msra.mxu0 %v3897
        %3984 = vmatprep.subr.bf16.mxu0 0
        %3985 = vmatpush1.bf16.msra.mxu0 %v3898
        %3986 = vmatprep.subr.bf16.mxu0 0
        %3987 = vmatpush1.bf16.msra.mxu0 %v3899
        %3988 = vmatprep.subr.bf16.mxu0 0
        %3989 = vmatpush1.bf16.msra.mxu0 %v3900
        %3990 = vmatprep.subr.bf16.mxu0 0
        %3991 = vmatpush1.bf16.msra.mxu0 %v3901
        %3992 = vmatprep.subr.bf16.mxu0 0
        %3993 = vmatpush1.bf16.msra.mxu0 %v3902
        %3994 = vmatprep.subr.bf16.mxu0 0
        %3995 = vmatpush1.bf16.msra.mxu0 %v3903
        %3996 = vmatprep.subr.bf16.mxu0 0
        %3997 = vmatpush1.bf16.msra.mxu0 %v3904
        %3998 = vmatprep.subr.bf16.mxu0 0
        %3999 = vmatpush1.bf16.msra.mxu0 %v3905
        %4000 = vmatprep.subr.bf16.mxu0 0
        %4001 = vmatpush1.bf16.msra.mxu0 %v3906
        %4002 = vmatprep.subr.bf16.mxu0 0
        %4003 = vmatpush1.bf16.msra.mxu0 %v3907
        %4004 = vmatprep.subr.bf16.mxu0 0
        %4005 = vmatpush1.bf16.msra.mxu0 %v3908
        %4006 = vmatprep.subr.bf16.mxu0 0
        %4007 = vmatpush1.bf16.msra.mxu0 %v3909
        %4008 = vmatprep.subr.bf16.mxu0 0
        %4009 = vmatpush1.bf16.msra.mxu0 %v3910
        %4010 = vmatprep.subr.bf16.mxu0 0
        %4011 = vmatpush1.bf16.msra.mxu0 %v3911
        %4012 = vmatprep.mubr.bf16.mxu0 %v3753
        %4013 = vmatmul.mubr.bf16.gmra.mrb[0].mxu0 %v3642
        %v4014 = vpop.f32.mrb[0].mxu0
        %v4015 = vadd.f32 0.0, %v4014
        %v4016 = vpop.f32.mrb[0].mxu0
        %v4017 = vpop.f32.mrb[0].mxu0
        %v4018 = vadd.f32 0.0, %v4017
        %v4019 = vpop.f32.mrb[0].mxu0
        %4020 = vmatprep.mubr.bf16.mxu0 %v3755
        %4021 = vmatmul.mubr.bf16.gmra.mrb[0].mxu0 %v3645
        %v4022 = vpop.f32.mrb[0].mxu0
        %v4023 = vadd.f32 0.0, %v4022
        %v4024 = vpop.f32.mrb[0].mxu0
        %v4025 = vpop.f32.mrb[0].mxu0
        %v4026 = vadd.f32 0.0, %v4025
        %v4027 = vpop.f32.mrb[0].mxu0
        %4028 = vmatprep.mubr.bf16.mxu0 %v3757
        %4029 = vmatmul.mubr.bf16.gmra.mrb[0].mxu0 %v3648
        %v4030 = vpop.f32.mrb[0].mxu0
        %v4031 = vadd.f32 0.0, %v4030
        %v4032 = vpop.f32.mrb[0].mxu0
        %v4033 = vpop.f32.mrb[0].mxu0
        %v4034 = vadd.f32 0.0, %v4033
        %v4035 = vpop.f32.mrb[0].mxu0
        %4036 = vmatprep.mubr.bf16.mxu0 %v3759
        %4037 = vmatmul.mubr.bf16.gmra.mrb[0].mxu0 %v3651
        %v4038 = vpop.f32.mrb[0].mxu0
        %v4039 = vadd.f32 0.0, %v4038
        %v4040 = vpop.f32.mrb[0].mxu0
        %v4041 = vpop.f32.mrb[0].mxu0
        %v4042 = vadd.f32 0.0, %v4041
        %v4043 = vpop.f32.mrb[0].mxu0
        %4044 = vmatprep.mubr.bf16.mxu0 %v3761
        %4045 = vmatmul.mubr.bf16.gmra.mrb[0].mxu0 %v3654
        %v4046 = vpop.f32.mrb[0].mxu0
        %v4047 = vadd.f32 0.0, %v4046
        %v4048 = vpop.f32.mrb[0].mxu0
        %v4049 = vpop.f32.mrb[0].mxu0
        %v4050 = vadd.f32 0.0, %v4049
        %v4051 = vpop.f32.mrb[0].mxu0
        %4052 = vmatprep.mubr.bf16.mxu0 %v3763
        %4053 = vmatmul.mubr.bf16.gmra.mrb[0].mxu0 %v3657
        %v4054 = vpop.f32.mrb[0].mxu0
        %v4055 = vadd.f32 0.0, %v4054
        %v4056 = vpop.f32.mrb[0].mxu0
        %v4057 = vpop.f32.mrb[0].mxu0
        %v4058 = vadd.f32 0.0, %v4057
        %v4059 = vpop.f32.mrb[0].mxu0
        %4060 = vmatprep.mubr.bf16.mxu0 %v3765
        %4061 = vmatmul.mubr.bf16.gmra.mrb[0].mxu0 %v3660
        %v4062 = vpop.f32.mrb[0].mxu0
        %v4063 = vadd.f32 0.0, %v4062
        %v4064 = vpop.f32.mrb[0].mxu0
        %v4065 = vpop.f32.mrb[0].mxu0
        %v4066 = vadd.f32 0.0, %v4065
        %v4067 = vpop.f32.mrb[0].mxu0
        %4068 = vmatprep.mubr.bf16.mxu0 %v3767
        %4069 = vmatmul.mubr.bf16.gmra.mrb[0].mxu0 %v3663
        %v4070 = vpop.f32.mrb[0].mxu0
        %v4071 = vadd.f32 0.0, %v4070
        %v4072 = vpop.f32.mrb[0].mxu0
        %v4073 = vpop.f32.mrb[0].mxu0
        %v4074 = vadd.f32 0.0, %v4073
        %v4075 = vpop.f32.mrb[0].mxu0
        %4076 = vmatprep.mubr.bf16.mxu0 %v3769
        %4077 = vmatmul.mubr.bf16.gmra.mrb[0].mxu0 %v3666
        %v4078 = vpop.f32.mrb[0].mxu0
        %v4079 = vadd.f32 0.0, %v4078
        %v4080 = vpop.f32.mrb[0].mxu0
        %v4081 = vpop.f32.mrb[0].mxu0
        %v4082 = vadd.f32 0.0, %v4081
        %v4083 = vpop.f32.mrb[0].mxu0
        %4084 = vmatprep.mubr.bf16.mxu0 %v3771
        %4085 = vmatmul.mubr.bf16.gmra.mrb[0].mxu0 %v3669
        %v4086 = vpop.f32.mrb[0].mxu0
        %v4087 = vadd.f32 0.0, %v4086
        %v4088 = vpop.f32.mrb[0].mxu0
        %v4089 = vpop.f32.mrb[0].mxu0
        %v4090 = vadd.f32 0.0, %v4089
        %v4091 = vpop.f32.mrb[0].mxu0
        %4092 = vmatprep.mubr.bf16.mxu0 %v3773
        %4093 = vmatmul.mubr.bf16.gmra.mrb[0].mxu0 %v3672
        %v4094 = vpop.f32.mrb[0].mxu0
        %v4095 = vadd.f32 0.0, %v4094
        %v4096 = vpop.f32.mrb[0].mxu0
        %v4097 = vpop.f32.mrb[0].mxu0
        %v4098 = vadd.f32 0.0, %v4097
        %v4099 = vpop.f32.mrb[0].mxu0
        %4100 = vmatprep.mubr.bf16.mxu0 %v3775
        %4101 = vmatmul.mubr.bf16.gmra.mrb[0].mxu0 %v3675
        %v4102 = vpop.f32.mrb[0].mxu0
        %v4103 = vadd.f32 0.0, %v4102
        %v4104 = vpop.f32.mrb[0].mxu0
        %v4105 = vpop.f32.mrb[0].mxu0
        %v4106 = vadd.f32 0.0, %v4105
        %v4107 = vpop.f32.mrb[0].mxu0
        %4108 = vmatprep.mubr.bf16.mxu0 %v3777
        %4109 = vmatmul.mubr.bf16.gmra.mrb[0].mxu0 %v3678
        %v4110 = vpop.f32.mrb[0].mxu0
        %v4111 = vadd.f32 0.0, %v4110
        %v4112 = vpop.f32.mrb[0].mxu0
        %v4113 = vpop.f32.mrb[0].mxu0
        %v4114 = vadd.f32 0.0, %v4113
        %v4115 = vpop.f32.mrb[0].mxu0
        %4116 = vmatprep.mubr.bf16.mxu0 %v3779
        %4117 = vmatmul.mubr.bf16.gmra.mrb[0].mxu0 %v3681
        %v4118 = vpop.f32.mrb[0].mxu0
        %v4119 = vadd.f32 0.0, %v4118
        %v4120 = vpop.f32.mrb[0].mxu0
        %v4121 = vpop.f32.mrb[0].mxu0
        %v4122 = vadd.f32 0.0, %v4121
        %v4123 = vpop.f32.mrb[0].mxu0
        %4124 = vmatprep.mubr.bf16.mxu0 %v3782
        %4125 = vmatmul.mubr.bf16.gmra.mrb[0].mxu0 %v3684
        %v4126 = vpop.f32.mrb[0].mxu0
        %v4127 = vadd.f32 0.0, %v4126
        %v4128 = vpop.f32.mrb[0].mxu0
        %v4129 = vpop.f32.mrb[0].mxu0
        %v4130 = vadd.f32 0.0, %v4129
        %v4131 = vpop.f32.mrb[0].mxu0
        %4132 = vmatprep.mubr.bf16.mxu0 %v3785
        %4133 = vmatmul.mubr.bf16.gmra.mrb[0].mxu0 %v3687
        %v4134 = vpop.f32.mrb[0].mxu0
        %v4135 = vadd.f32 0.0, %v4134
        %v4136 = vpop.f32.mrb[0].mxu0
        %v4137 = vpop.f32.mrb[0].mxu0
        %v4138 = vadd.f32 0.0, %v4137
        %v4139 = vpop.f32.mrb[0].mxu0
        %4140 = vdwg.mxu0
        %4141 = vmatprep.subr.bf16.mxu0 0
        %4142 = vmatpush1.bf16.msra.mxu0 %v3912
        %4143 = vmatprep.subr.bf16.mxu0 0
        %4144 = vmatpush1.bf16.msra.mxu0 %v3913
        %4145 = vmatprep.subr.bf16.mxu0 0
        %4146 = vmatpush1.bf16.msra.mxu0 0
        %4147 = vmatprep.subr.bf16.mxu0 0
        %4148 = vmatpush1.bf16.msra.mxu0 0
        %4149 = vmatprep.subr.bf16.mxu0 0
        %4150 = vmatpush1.bf16.msra.mxu0 0
        %4151 = vmatprep.subr.bf16.mxu0 0
        %4152 = vmatpush1.bf16.msra.mxu0 0
        %4153 = vmatprep.subr.bf16.mxu0 0
        %4154 = vmatpush1.bf16.msra.mxu0 0
        %4155 = vmatprep.subr.bf16.mxu0 0
        %4156 = vmatpush1.bf16.msra.mxu0 0
        %4157 = vmatprep.subr.bf16.mxu0 0
        %4158 = vmatpush1.bf16.msra.mxu0 0
        %4159 = vmatprep.subr.bf16.mxu0 0
        %4160 = vmatpush1.bf16.msra.mxu0 0
        %4161 = vmatprep.subr.bf16.mxu0 0
        %4162 = vmatpush1.bf16.msra.mxu0 0
        %4163 = vmatprep.subr.bf16.mxu0 0
        %4164 = vmatpush1.bf16.msra.mxu0 0
        %4165 = vmatprep.subr.bf16.mxu0 0
        %4166 = vmatpush1.bf16.msra.mxu0 0
        %4167 = vmatprep.subr.bf16.mxu0 0
        %4168 = vmatpush1.bf16.msra.mxu0 0
        %4169 = vmatprep.subr.bf16.mxu0 0
        %4170 = vmatpush1.bf16.msra.mxu0 0
        %4171 = vmatprep.subr.bf16.mxu0 0
        %4172 = vmatpush1.bf16.msra.mxu0 0
        %4173 = vmatprep.mubr.bf16.mxu0 0
        %4174 = vmatmul.mubr.bf16.gmra.mrb[0].mxu0 %v3933
        %v4175 = vpop.f32.mrb[0].mxu0
        %v4176 = vadd.f32 %v4015, %v4175
        %v4177 = vpop.f32.mrb[0].mxu0
        %v4178 = vpop.f32.mrb[0].mxu0
        %v4179 = vadd.f32 %v4018, %v4178
        %v4180 = vpop.f32.mrb[0].mxu0
        %4181 = vmatprep.mubr.bf16.mxu0 0
        %4182 = vmatmul.mubr.bf16.gmra.mrb[0].mxu0 %v3936
        %v4183 = vpop.f32.mrb[0].mxu0
        %v4184 = vadd.f32 %v4023, %v4183
        %v4185 = vpop.f32.mrb[0].mxu0
        %v4186 = vpop.f32.mrb[0].mxu0
        %v4187 = vadd.f32 %v4026, %v4186
        %v4188 = vpop.f32.mrb[0].mxu0
        %4189 = vmatprep.mubr.bf16.mxu0 0
        %4190 = vmatmul.mubr.bf16.gmra.mrb[0].mxu0 %v3939
        %v4191 = vpop.f32.mrb[0].mxu0
        %v4192 = vadd.f32 %v4031, %v4191
        %v4193 = vpop.f32.mrb[0].mxu0
        %v4194 = vpop.f32.mrb[0].mxu0
        %v4195 = vadd.f32 %v4034, %v4194
        %v4196 = vpop.f32.mrb[0].mxu0
        %4197 = vmatprep.mubr.bf16.mxu0 0
        %4198 = vmatmul.mubr.bf16.gmra.mrb[0].mxu0 %v3942
        %v4199 = vpop.f32.mrb[0].mxu0
        %v4200 = vadd.f32 %v4039, %v4199
        %v4201 = vpop.f32.mrb[0].mxu0
        %v4202 = vpop.f32.mrb[0].mxu0
        %v4203 = vadd.f32 %v4042, %v4202
        %v4204 = vpop.f32.mrb[0].mxu0
        %4205 = vmatprep.mubr.bf16.mxu0 0
        %4206 = vmatmul.mubr.bf16.gmra.mrb[0].mxu0 %v3945
        %v4207 = vpop.f32.mrb[0].mxu0
        %v4208 = vadd.f32 %v4047, %v4207
        %v4209 = vpop.f32.mrb[0].mxu0
        %v4210 = vpop.f32.mrb[0].mxu0
        %v4211 = vadd.f32 %v4050, %v4210
        %v4212 = vpop.f32.mrb[0].mxu0
        %4213 = vmatprep.mubr.bf16.mxu0 0
        %4214 = vmatmul.mubr.bf16.gmra.mrb[0].mxu0 %v3948
        %v4215 = vpop.f32.mrb[0].mxu0
        %v4216 = vadd.f32 %v4055, %v4215
        %v4217 = vpop.f32.mrb[0].mxu0
        %v4218 = vpop.f32.mrb[0].mxu0
        %v4219 = vadd.f32 %v4058, %v4218
        %v4220 = vpop.f32.mrb[0].mxu0
        %4221 = vmatprep.mubr.bf16.mxu0 0
        %4222 = vmatmul.mubr.bf16.gmra.mrb[0].mxu0 %v3951
        %v4223 = vpop.f32.mrb[0].mxu0
        %v4224 = vadd.f32 %v4063, %v4223
        %v4225 = vpop.f32.mrb[0].mxu0
        %v4226 = vpop.f32.mrb[0].mxu0
        %v4227 = vadd.f32 %v4066, %v4226
        %v4228 = vpop.f32.mrb[0].mxu0
        %4229 = vmatprep.mubr.bf16.mxu0 0
        %4230 = vmatmul.mubr.bf16.gmra.mrb[0].mxu0 %v3954
        %v4231 = vpop.f32.mrb[0].mxu0
        %v4232 = vadd.f32 %v4071, %v4231
        %v4233 = vpop.f32.mrb[0].mxu0
        %v4234 = vpop.f32.mrb[0].mxu0
        %v4235 = vadd.f32 %v4074, %v4234
        %v4236 = vpop.f32.mrb[0].mxu0
        %4237 = vmatprep.mubr.bf16.mxu0 0
        %4238 = vmatmul.mubr.bf16.gmra.mrb[0].mxu0 %v3957
        %v4239 = vpop.f32.mrb[0].mxu0
        %v4240 = vadd.f32 %v4079, %v4239
        %v4241 = vpop.f32.mrb[0].mxu0
        %v4242 = vpop.f32.mrb[0].mxu0
        %v4243 = vadd.f32 %v4082, %v4242
        %v4244 = vpop.f32.mrb[0].mxu0
        %4245 = vmatprep.mubr.bf16.mxu0 0
        %4246 = vmatmul.mubr.bf16.gmra.mrb[0].mxu0 %v3960
        %v4247 = vpop.f32.mrb[0].mxu0
        %v4248 = vadd.f32 %v4087, %v4247
        %v4249 = vpop.f32.mrb[0].mxu0
        %v4250 = vpop.f32.mrb[0].mxu0
        %v4251 = vadd.f32 %v4090, %v4250
        %v4252 = vpop.f32.mrb[0].mxu0
        %4253 = vmatprep.mubr.bf16.mxu0 0
        %4254 = vmatmul.mubr.bf16.gmra.mrb[0].mxu0 %v3963
        %v4255 = vpop.f32.mrb[0].mxu0
        %v4256 = vadd.f32 %v4095, %v4255
        %v4257 = vpop.f32.mrb[0].mxu0
        %v4258 = vpop.f32.mrb[0].mxu0
        %v4259 = vadd.f32 %v4098, %v4258
        %v4260 = vpop.f32.mrb[0].mxu0
        %4261 = vmatprep.mubr.bf16.mxu0 0
        %4262 = vmatmul.mubr.bf16.gmra.mrb[0].mxu0 %v3966
        %v4263 = vpop.f32.mrb[0].mxu0
        %v4264 = vadd.f32 %v4103, %v4263
        %v4265 = vpop.f32.mrb[0].mxu0
        %v4266 = vpop.f32.mrb[0].mxu0
        %v4267 = vadd.f32 %v4106, %v4266
        %v4268 = vpop.f32.mrb[0].mxu0
        %4269 = vmatprep.mubr.bf16.mxu0 0
        %4270 = vmatmul.mubr.bf16.gmra.mrb[0].mxu0 %v3969
        %v4271 = vpop.f32.mrb[0].mxu0
        %v4272 = vadd.f32 %v4111, %v4271
        %v4273 = vpop.f32.mrb[0].mxu0
        %v4274 = vpop.f32.mrb[0].mxu0
        %v4275 = vadd.f32 %v4114, %v4274
        %v4276 = vpop.f32.mrb[0].mxu0
        %4277 = vmatprep.mubr.bf16.mxu0 0
        %4278 = vmatmul.mubr.bf16.gmra.mrb[0].mxu0 %v3972
        %v4279 = vpop.f32.mrb[0].mxu0
        %v4280 = vadd.f32 %v4119, %v4279
        %v4281 = vpop.f32.mrb[0].mxu0
        %v4282 = vpop.f32.mrb[0].mxu0
        %v4283 = vadd.f32 %v4122, %v4282
        %v4284 = vpop.f32.mrb[0].mxu0
        %4285 = vmatprep.mubr.bf16.mxu0 0
        %4286 = vmatmul.mubr.bf16.gmra.mrb[0].mxu0 %v3975
        %v4287 = vpop.f32.mrb[0].mxu0
        %v4288 = vadd.f32 %v4127, %v4287
        %v4289 = vpop.f32.mrb[0].mxu0
        %v4290 = vpop.f32.mrb[0].mxu0
        %v4291 = vadd.f32 %v4130, %v4290
        %v4292 = vpop.f32.mrb[0].mxu0
        %4293 = vmatprep.mubr.bf16.mxu0 0
        %4294 = vmatmul.mubr.bf16.gmra.mrb[0].mxu0 %v3978
        %v4295 = vpop.f32.mrb[0].mxu0
        %v4296 = vadd.f32 %v4135, %v4295
        %v4297 = vpop.f32.mrb[0].mxu0
        %v4298 = vpop.f32.mrb[0].mxu0
        %v4299 = vadd.f32 %v4138, %v4298
        %v4300 = vpop.f32.mrb[0].mxu0
        %4301 = vdwg.mxu0
        %s4302 = scalar_lea.vmem [#allocation8], 2
        %v4303 = vld [vmem:[%s4302] sm:$0x1]
        %v4305 = vlaneseq
        %v4306 = vshrl.u32 %v4305, 7
        %v4307 = vsub.s32 0, %v4306
        %v4308 = vrot.slane %v4303, %v4307
        %v4310 = vmul.f32 %v4176, %v4308
        %v4311 = vmul.f32 %v4179, %v4308
        %v4312 = vmul.f32 %v4184, %v4308
        %v4313 = vmul.f32 %v4187, %v4308
        %v4314 = vmul.f32 %v4192, %v4308
        %v4315 = vmul.f32 %v4195, %v4308
        %v4316 = vmul.f32 %v4200, %v4308
        %v4317 = vmul.f32 %v4203, %v4308
        %v4318 = vmul.f32 %v4208, %v4308
        %v4319 = vmul.f32 %v4211, %v4308
        %v4320 = vmul.f32 %v4216, %v4308
        %v4321 = vmul.f32 %v4219, %v4308
        %v4322 = vmul.f32 %v4224, %v4308
        %v4323 = vmul.f32 %v4227, %v4308
        %v4324 = vmul.f32 %v4232, %v4308
        %v4325 = vmul.f32 %v4235, %v4308
        %v4326 = vmul.f32 %v4240, %v4308
        %v4327 = vmul.f32 %v4243, %v4308
        %v4328 = vmul.f32 %v4248, %v4308
        %v4329 = vmul.f32 %v4251, %v4308
        %v4330 = vmul.f32 %v4256, %v4308
        %v4331 = vmul.f32 %v4259, %v4308
        %v4332 = vmul.f32 %v4264, %v4308
        %v4333 = vmul.f32 %v4267, %v4308
        %v4334 = vmul.f32 %v4272, %v4308
        %v4335 = vmul.f32 %v4275, %v4308
        %v4336 = vmul.f32 %v4280, %v4308
        %v4337 = vmul.f32 %v4283, %v4308
        %v4338 = vmul.f32 %v4288, %v4308
        %v4339 = vmul.f32 %v4291, %v4308
        %v4340 = vmul.f32 %v4296, %v4308
        %v4341 = vmul.f32 %v4299, %v4308
        %s4342 = scalar_lea.vmem [#allocation10], 2
        %v4343 = vld [vmem:[%s4342] sm:$0x1]
        %v4345 = vlaneseq
        %v4346 = vshrl.u32 %v4345, 7
        %v4347 = vsub.s32 0, %v4346
        %v4348 = vrot.slane %v4343, %v4347
        %v4350 = vadd.f32 %v4310, %v4348
        %v4351 = vadd.f32 %v4311, %v4348
        %v4352 = vadd.f32 %v4312, %v4348
        %v4353 = vadd.f32 %v4313, %v4348
        %v4354 = vadd.f32 %v4314, %v4348
        %v4355 = vadd.f32 %v4315, %v4348
        %v4356 = vadd.f32 %v4316, %v4348
        %v4357 = vadd.f32 %v4317, %v4348
        %v4358 = vadd.f32 %v4318, %v4348
        %v4359 = vadd.f32 %v4319, %v4348
        %v4360 = vadd.f32 %v4320, %v4348
        %v4361 = vadd.f32 %v4321, %v4348
        %v4362 = vadd.f32 %v4322, %v4348
        %v4363 = vadd.f32 %v4323, %v4348
        %v4364 = vadd.f32 %v4324, %v4348
        %v4365 = vadd.f32 %v4325, %v4348
        %v4366 = vadd.f32 %v4326, %v4348
        %v4367 = vadd.f32 %v4327, %v4348
        %v4368 = vadd.f32 %v4328, %v4348
        %v4369 = vadd.f32 %v4329, %v4348
        %v4370 = vadd.f32 %v4330, %v4348
        %v4371 = vadd.f32 %v4331, %v4348
        %v4372 = vadd.f32 %v4332, %v4348
        %v4373 = vadd.f32 %v4333, %v4348
        %v4374 = vadd.f32 %v4334, %v4348
        %v4375 = vadd.f32 %v4335, %v4348
        %v4376 = vadd.f32 %v4336, %v4348
        %v4377 = vadd.f32 %v4337, %v4348
        %v4378 = vadd.f32 %v4338, %v4348
        %v4379 = vadd.f32 %v4339, %v4348
        %v4380 = vadd.f32 %v4340, %v4348
        %v4381 = vadd.f32 %v4341, %v4348
        %v4382 = vmax.f32 %v4350, 0.0
        %v4383 = vmax.f32 %v4351, 0.0
        %v4384 = vmax.f32 %v4352, 0.0
        %v4385 = vmax.f32 %v4353, 0.0
        %v4386 = vmax.f32 %v4354, 0.0
        %v4387 = vmax.f32 %v4355, 0.0
        %v4388 = vmax.f32 %v4356, 0.0
        %v4389 = vmax.f32 %v4357, 0.0
        %v4390 = vmax.f32 %v4358, 0.0
        %v4391 = vmax.f32 %v4359, 0.0
        %v4392 = vmax.f32 %v4360, 0.0
        %v4393 = vmax.f32 %v4361, 0.0
        %v4394 = vmax.f32 %v4362, 0.0
        %v4395 = vmax.f32 %v4363, 0.0
        %v4396 = vmax.f32 %v4364, 0.0
        %v4397 = vmax.f32 %v4365, 0.0
        %v4398 = vmax.f32 %v4366, 0.0
        %v4399 = vmax.f32 %v4367, 0.0
        %v4400 = vmax.f32 %v4368, 0.0
        %v4401 = vmax.f32 %v4369, 0.0
        %v4402 = vmax.f32 %v4370, 0.0
        %v4403 = vmax.f32 %v4371, 0.0
        %v4404 = vmax.f32 %v4372, 0.0
        %v4405 = vmax.f32 %v4373, 0.0
        %v4406 = vmax.f32 %v4374, 0.0
        %v4407 = vmax.f32 %v4375, 0.0
        %v4408 = vmax.f32 %v4376, 0.0
        %v4409 = vmax.f32 %v4377, 0.0
        %v4410 = vmax.f32 %v4378, 0.0
        %v4411 = vmax.f32 %v4379, 0.0
        %v4412 = vmax.f32 %v4380, 0.0
        %v4413 = vmax.f32 %v4381, 0.0
        %v4415 = vshrl.u32 %v420, 16
        %v4417 = vrot.slane %v4415, 7
        %v4418 = vrot.slane %v4417, 4
        %v4420 = vshrl.u32 %v421, 16
        %v4422 = vrot.slane %v4420, 7
        %v4423 = vshll.u32 %v421, 16
        %v4425 = vor.u32 %v4422, %v4423
        %v4426 = vsel %vm542, %v4418, %v4425
        %v4427 = vrot.slane %v4422, 4
        %v4429 = vshrl.u32 %v422, 16
        %v4431 = vrot.slane %v4429, 7
        %v4432 = vshll.u32 %v422, 16
        %v4434 = vor.u32 %v4431, %v4432
        %v4435 = vsel %vm542, %v4427, %v4434
        %v4437 = vshrl.u32 %v424, 16
        %v4439 = vrot.slane %v4437, 7
        %v4440 = vrot.slane %v4439, 4
        %v4442 = vshrl.u32 %v425, 16
        %v4444 = vrot.slane %v4442, 7
        %v4445 = vshll.u32 %v425, 16
        %v4447 = vor.u32 %v4444, %v4445
        %v4448 = vsel %vm542, %v4440, %v4447
        %v4449 = vrot.slane %v4444, 4
        %v4451 = vshrl.u32 %v426, 16
        %v4453 = vrot.slane %v4451, 7
        %v4454 = vshll.u32 %v426, 16
        %v4456 = vor.u32 %v4453, %v4454
        %v4457 = vsel %vm542, %v4449, %v4456
        %vm4464 = vcmask 1040384
        %vm4465 = vcmask 1044484
        %vm4466 = vmor %vm4464, %vm4465
        %v4467 = vrot.slane %v421, 7
        %v4468 = vrot.slane %v4467, 4
        %v4469 = vrot.slane %v422, 7
        %v4470 = vsel %vm4466, %v4468, %v4469
        %v4471 = vrot.slane %v4469, 4
        %v4472 = vrot.slane %v423, 7
        %v4473 = vsel %vm4466, %v4471, %v4472
        %v4474 = vrot.slane %v425, 7
        %v4475 = vrot.slane %v4474, 4
        %v4476 = vrot.slane %v426, 7
        %v4477 = vsel %vm4466, %v4475, %v4476
        %v4478 = vrot.slane %v4476, 4
        %v4479 = vrot.slane %v427, 7
        %v4480 = vsel %vm4466, %v4478, %v4479
        %v4481 = vrot.slane %v429, 7
        %v4482 = vrot.slane %v4481, 4
        %v4483 = vrot.slane %v430, 7
        %v4484 = vsel %vm4466, %v4482, %v4483
        %v4485 = vrot.slane %v4483, 4
        %v4486 = vrot.slane %v431, 7
        %v4487 = vsel %vm4466, %v4485, %v4486
        %v4488 = vrot.slane %v433, 7
        %v4489 = vrot.slane %v4488, 4
        %v4490 = vrot.slane %v434, 7
        %v4491 = vsel %vm4466, %v4489, %v4490
        %v4492 = vrot.slane %v4490, 4
        %v4493 = vrot.slane %v435, 7
        %v4494 = vsel %vm4466, %v4492, %v4493
        %v4495 = vrot.slane %v437, 7
        %v4496 = vrot.slane %v4495, 4
        %v4497 = vrot.slane %v438, 7
        %v4498 = vsel %vm4466, %v4496, %v4497
        %v4499 = vrot.slane %v4497, 4
        %v4500 = vrot.slane %v439, 7
        %v4501 = vsel %vm4466, %v4499, %v4500
        %v4502 = vrot.slane %v441, 7
        %v4503 = vrot.slane %v4502, 4
        %v4504 = vrot.slane %v442, 7
        %v4505 = vsel %vm4466, %v4503, %v4504
        %v4506 = vrot.slane %v4504, 4
        %v4507 = vrot.slane %v443, 7
        %v4508 = vsel %vm4466, %v4506, %v4507
        %v4509 = vrot.slane %v445, 7
        %v4510 = vrot.slane %v4509, 4
        %v4511 = vrot.slane %v446, 7
        %v4512 = vsel %vm4466, %v4510, %v4511
        %v4513 = vrot.slane %v4511, 4
        %v4514 = vrot.slane %v447, 7
        %v4515 = vsel %vm4466, %v4513, %v4514
        %v4516 = vrot.slane %v449, 7
        %v4517 = vrot.slane %v4516, 4
        %v4518 = vrot.slane %v450, 7
        %v4519 = vsel %vm4466, %v4517, %v4518
        %v4520 = vrot.slane %v4518, 4
        %v4521 = vrot.slane %v451, 7
        %v4522 = vsel %vm4466, %v4520, %v4521
        %v4523 = vrot.slane %v453, 7
        %v4524 = vrot.slane %v4523, 4
        %v4525 = vrot.slane %v454, 7
        %v4526 = vsel %vm4466, %v4524, %v4525
        %v4527 = vrot.slane %v4525, 4
        %v4528 = vrot.slane %v455, 7
        %v4529 = vsel %vm4466, %v4527, %v4528
        %v4530 = vrot.slane %v457, 7
        %v4531 = vrot.slane %v4530, 4
        %v4532 = vrot.slane %v458, 7
        %v4533 = vsel %vm4466, %v4531, %v4532
        %v4534 = vrot.slane %v4532, 4
        %v4535 = vrot.slane %v459, 7
        %v4536 = vsel %vm4466, %v4534, %v4535
        %v4537 = vrot.slane %v461, 7
        %v4538 = vrot.slane %v4537, 4
        %v4539 = vrot.slane %v462, 7
        %v4540 = vsel %vm4466, %v4538, %v4539
        %v4541 = vrot.slane %v4539, 4
        %v4542 = vrot.slane %v463, 7
        %v4543 = vsel %vm4466, %v4541, %v4542
        %v4544 = vrot.slane %v465, 7
        %v4545 = vrot.slane %v4544, 4
        %v4546 = vrot.slane %v466, 7
        %v4547 = vsel %vm4466, %v4545, %v4546
        %v4548 = vrot.slane %v4546, 4
        %v4549 = vrot.slane %v467, 7
        %v4550 = vsel %vm4466, %v4548, %v4549
        %v4551 = vrot.slane %v469, 7
        %v4552 = vrot.slane %v4551, 4
        %v4553 = vrot.slane %v470, 7
        %v4554 = vsel %vm4466, %v4552, %v4553
        %v4555 = vrot.slane %v4553, 4
        %v4556 = vrot.slane %v471, 7
        %v4557 = vsel %vm4466, %v4555, %v4556
        %v4558 = vrot.slane %v473, 7
        %v4559 = vrot.slane %v4558, 4
        %v4560 = vrot.slane %v474, 7
        %v4561 = vsel %vm4466, %v4559, %v4560
        %v4562 = vrot.slane %v4560, 4
        %v4563 = vrot.slane %v475, 7
        %v4564 = vsel %vm4466, %v4562, %v4563
        %v4565 = vrot.slane %v477, 7
        %v4566 = vrot.slane %v4565, 4
        %v4567 = vrot.slane %v478, 7
        %v4568 = vsel %vm4466, %v4566, %v4567
        %v4569 = vrot.slane %v4567, 4
        %v4570 = vrot.slane %v479, 7
        %v4571 = vsel %vm4466, %v4569, %v4570
        %v4572 = vrot.slane %v481, 7
        %v4573 = vrot.slane %v4572, 4
        %v4574 = vrot.slane %v482, 7
        %v4575 = vsel %vm4466, %v4573, %v4574
        %v4576 = vrot.slane %v4574, 4
        %v4577 = vrot.slane %v483, 7
        %v4578 = vsel %vm4466, %v4576, %v4577
        %v4579 = vrot.slane %v485, 7
        %v4580 = vrot.slane %v4579, 4
        %v4581 = vrot.slane %v486, 7
        %v4582 = vsel %vm4466, %v4580, %v4581
        %v4583 = vrot.slane %v4581, 4
        %v4584 = vrot.slane %v487, 7
        %v4585 = vsel %vm4466, %v4583, %v4584
        %v4586 = vrot.slane %v489, 7
        %v4587 = vrot.slane %v4586, 4
        %v4588 = vrot.slane %v490, 7
        %v4589 = vsel %vm4466, %v4587, %v4588
        %v4590 = vrot.slane %v4588, 4
        %v4591 = vrot.slane %v491, 7
        %v4592 = vsel %vm4466, %v4590, %v4591
        %v4593 = vrot.slane %v493, 7
        %v4594 = vrot.slane %v4593, 4
        %v4595 = vrot.slane %v494, 7
        %v4596 = vsel %vm4466, %v4594, %v4595
        %v4597 = vrot.slane %v4595, 4
        %v4598 = vrot.slane %v495, 7
        %v4599 = vsel %vm4466, %v4597, %v4598
        %v4600 = vrot.slane %v497, 7
        %v4601 = vrot.slane %v4600, 4
        %v4602 = vrot.slane %v498, 7
        %v4603 = vsel %vm4466, %v4601, %v4602
        %v4604 = vrot.slane %v4602, 4
        %v4605 = vrot.slane %v499, 7
        %v4606 = vsel %vm4466, %v4604, %v4605
        %v4607 = vrot.slane %v501, 7
        %v4608 = vrot.slane %v4607, 4
        %v4609 = vrot.slane %v502, 7
        %v4610 = vsel %vm4466, %v4608, %v4609
        %v4611 = vrot.slane %v4609, 4
        %v4612 = vrot.slane %v503, 7
        %v4613 = vsel %vm4466, %v4611, %v4612
        %v4614 = vrot.slane %v505, 7
        %v4615 = vrot.slane %v4614, 4
        %v4616 = vrot.slane %v506, 7
        %v4617 = vsel %vm4466, %v4615, %v4616
        %v4618 = vrot.slane %v4616, 4
        %v4619 = vrot.slane %v507, 7
        %v4620 = vsel %vm4466, %v4618, %v4619
        %v4621 = vrot.slane %v509, 7
        %v4622 = vrot.slane %v4621, 4
        %v4623 = vrot.slane %v510, 7
        %v4624 = vsel %vm4466, %v4622, %v4623
        %v4625 = vrot.slane %v4623, 4
        %v4626 = vrot.slane %v511, 7
        %v4627 = vsel %vm4466, %v4625, %v4626
        %v4629 = vshrl.u32 %v532, 16
        %v4631 = vrot.slane %v4629, 7
        %v4632 = vrot.slane %v4631, 4
        %v4634 = vshrl.u32 %v533, 16
        %v4636 = vrot.slane %v4634, 7
        %v4637 = vshll.u32 %v533, 16
        %v4639 = vor.u32 %v4636, %v4637
        %v4640 = vsel %vm542, %v4632, %v4639
        %v4641 = vrot.slane %v4636, 4
        %v4643 = vshrl.u32 %v534, 16
        %v4645 = vrot.slane %v4643, 7
        %v4646 = vshll.u32 %v534, 16
        %v4648 = vor.u32 %v4645, %v4646
        %v4649 = vsel %vm542, %v4641, %v4648
        %v4651 = vshrl.u32 %v536, 16
        %v4653 = vrot.slane %v4651, 7
        %v4654 = vrot.slane %v4653, 4
        %v4656 = vshrl.u32 %v537, 16
        %v4658 = vrot.slane %v4656, 7
        %v4659 = vshll.u32 %v537, 16
        %v4661 = vor.u32 %v4658, %v4659
        %v4662 = vsel %vm542, %v4654, %v4661
        %v4663 = vrot.slane %v4658, 4
        %v4665 = vshrl.u32 %v538, 16
        %v4667 = vrot.slane %v4665, 7
        %v4668 = vshll.u32 %v538, 16
        %v4670 = vor.u32 %v4667, %v4668
        %v4671 = vsel %vm542, %v4663, %v4670
        %v4678 = vrot.slane %v513, 7
        %v4679 = vrot.slane %v4678, 4
        %v4680 = vrot.slane %v514, 7
        %v4681 = vsel %vm4466, %v4679, %v4680
        %v4682 = vrot.slane %v4680, 4
        %v4683 = vrot.slane %v515, 7
        %v4684 = vsel %vm4466, %v4682, %v4683
        %v4685 = vrot.slane %v517, 7
        %v4686 = vrot.slane %v4685, 4
        %v4687 = vrot.slane %v518, 7
        %v4688 = vsel %vm4466, %v4686, %v4687
        %v4689 = vrot.slane %v4687, 4
        %v4690 = vrot.slane %v519, 7
        %v4691 = vsel %vm4466, %v4689, %v4690
        %v4692 = vrot.slane %v521, 7
        %v4693 = vrot.slane %v4692, 4
        %v4694 = vrot.slane %v522, 7
        %v4695 = vsel %vm4466, %v4693, %v4694
        %v4696 = vrot.slane %v4694, 4
        %v4697 = vrot.slane %v523, 7
        %v4698 = vsel %vm4466, %v4696, %v4697
        %v4699 = vrot.slane %v525, 7
        %v4700 = vrot.slane %v4699, 4
        %v4701 = vrot.slane %v526, 7
        %v4702 = vsel %vm4466, %v4700, %v4701
        %v4703 = vrot.slane %v4701, 4
        %v4704 = vrot.slane %v527, 7
        %v4705 = vsel %vm4466, %v4703, %v4704
        %v4706 = vrot.slane %v529, 7
        %v4707 = vrot.slane %v4706, 4
        %v4708 = vrot.slane %v530, 7
        %v4709 = vsel %vm4466, %v4707, %v4708
        %v4710 = vrot.slane %v4708, 4
        %v4711 = vrot.slane %v531, 7
        %v4712 = vsel %vm4466, %v4710, %v4711
        %v4713 = vrot.slane %v533, 7
        %v4714 = vrot.slane %v4713, 4
        %v4715 = vrot.slane %v534, 7
        %v4716 = vsel %vm4466, %v4714, %v4715
        %v4717 = vrot.slane %v4715, 4
        %v4718 = vrot.slane %v535, 7
        %v4719 = vsel %vm4466, %v4717, %v4718
        %v4720 = vrot.slane %v537, 7
        %v4721 = vrot.slane %v4720, 4
        %v4722 = vrot.slane %v538, 7
        %v4723 = vsel %vm4466, %v4721, %v4722
        %v4724 = vrot.slane %v4722, 4
        %v4725 = vrot.slane %v539, 7
        %v4726 = vsel %vm4466, %v4724, %v4725
        %v4729 = vunpack.c.l.b16 %v420
        %v4730 = vunpack.c.l.b16 %v421
        %v4731 = vunpack.c.l.b16 %v424
        %v4732 = vunpack.c.l.b16 %v425
        %v4733 = vunpack.c.l.b16 %v428
        %v4734 = vunpack.c.l.b16 %v429
        %v4735 = vunpack.c.l.b16 %v432
        %v4736 = vunpack.c.l.b16 %v433
        %v4737 = vunpack.c.l.b16 %v436
        %v4738 = vunpack.c.l.b16 %v437
        %v4739 = vunpack.c.l.b16 %v440
        %v4740 = vunpack.c.l.b16 %v441
        %v4741 = vunpack.c.l.b16 %v444
        %v4742 = vunpack.c.l.b16 %v445
        %v4743 = vunpack.c.l.b16 %v448
        %v4744 = vunpack.c.l.b16 %v449
        %v4745 = vunpack.c.l.b16 %v452
        %v4746 = vunpack.c.l.b16 %v453
        %v4747 = vunpack.c.l.b16 %v456
        %v4748 = vunpack.c.l.b16 %v457
        %v4749 = vunpack.c.l.b16 %v460
        %v4750 = vunpack.c.l.b16 %v461
        %v4751 = vunpack.c.l.b16 %v464
        %v4752 = vunpack.c.l.b16 %v465
        %v4753 = vunpack.c.l.b16 %v468
        %v4754 = vunpack.c.l.b16 %v469
        %v4755 = vunpack.c.l.b16 %v472
        %v4756 = vunpack.c.l.b16 %v473
        %v4757 = vunpack.c.l.b16 %v476
        %v4758 = vunpack.c.l.b16 %v477
        %v4759 = vunpack.c.l.b16 %v480
        %v4760 = vunpack.c.l.b16 %v481
        %v4761 = vpack.c.b16 %v4730, %v4729
        %v4762 = vpack.c.b16 %v4732, %v4731
        %v4763 = vpack.c.b16 %v4734, %v4733
        %v4764 = vpack.c.b16 %v4736, %v4735
        %v4765 = vpack.c.b16 %v4738, %v4737
        %v4766 = vpack.c.b16 %v4740, %v4739
        %v4767 = vpack.c.b16 %v4742, %v4741
        %v4768 = vpack.c.b16 %v4744, %v4743
        %v4769 = vpack.c.b16 %v4746, %v4745
        %v4770 = vpack.c.b16 %v4748, %v4747
        %v4771 = vpack.c.b16 %v4750, %v4749
        %v4772 = vpack.c.b16 %v4752, %v4751
        %v4773 = vpack.c.b16 %v4754, %v4753
        %v4774 = vpack.c.b16 %v4756, %v4755
        %v4775 = vpack.c.b16 %v4758, %v4757
        %v4776 = vpack.c.b16 %v4760, %v4759
        %v4777 = vunpack.c.l.b16 %v4426
        %v4778 = vunpack.c.l.b16 %v4435
        %v4779 = vunpack.c.l.b16 %v4448
        %v4780 = vunpack.c.l.b16 %v4457
        %v4781 = vpack.c.b16 %v4778, %v4777
        %v4782 = vpack.c.b16 %v4780, %v4779
        %4783 = vrot.lane.b32.xlu0 %v4781, 32
        %v4784 = vpop.permute.xlu0 %4783
        %4785 = vrot.lane.b32.xlu0 %v4782, 32
        %v4786 = vpop.permute.xlu0 %4785
        %v4787 = vunpack.c.l.b16 %v4470
        %v4788 = vunpack.c.l.b16 %v4473
        %v4789 = vunpack.c.l.b16 %v4477
        %v4790 = vunpack.c.l.b16 %v4480
        %v4791 = vunpack.c.l.b16 %v4484
        %v4792 = vunpack.c.l.b16 %v4487
        %v4793 = vunpack.c.l.b16 %v4491
        %v4794 = vunpack.c.l.b16 %v4494
        %v4795 = vunpack.c.l.b16 %v4498
        %v4796 = vunpack.c.l.b16 %v4501
        %v4797 = vunpack.c.l.b16 %v4505
        %v4798 = vunpack.c.l.b16 %v4508
        %v4799 = vunpack.c.l.b16 %v4512
        %v4800 = vunpack.c.l.b16 %v4515
        %v4801 = vunpack.c.l.b16 %v4519
        %v4802 = vunpack.c.l.b16 %v4522
        %v4803 = vunpack.c.l.b16 %v4526
        %v4804 = vunpack.c.l.b16 %v4529
        %v4805 = vunpack.c.l.b16 %v4533
        %v4806 = vunpack.c.l.b16 %v4536
        %v4807 = vunpack.c.l.b16 %v4540
        %v4808 = vunpack.c.l.b16 %v4543
        %v4809 = vunpack.c.l.b16 %v4547
        %v4810 = vunpack.c.l.b16 %v4550
        %v4811 = vunpack.c.l.b16 %v4554
        %v4812 = vunpack.c.l.b16 %v4557
        %v4813 = vunpack.c.l.b16 %v4561
        %v4814 = vunpack.c.l.b16 %v4564
        %v4815 = vunpack.c.l.b16 %v4568
        %v4816 = vunpack.c.l.b16 %v4571
        %v4817 = vunpack.c.l.b16 %v4575
        %v4818 = vunpack.c.l.b16 %v4578
        %v4819 = vpack.c.b16 %v4788, %v4787
        %v4820 = vpack.c.b16 %v4790, %v4789
        %v4821 = vpack.c.b16 %v4792, %v4791
        %v4822 = vpack.c.b16 %v4794, %v4793
        %v4823 = vpack.c.b16 %v4796, %v4795
        %v4824 = vpack.c.b16 %v4798, %v4797
        %v4825 = vpack.c.b16 %v4800, %v4799
        %v4826 = vpack.c.b16 %v4802, %v4801
        %v4827 = vpack.c.b16 %v4804, %v4803
        %v4828 = vpack.c.b16 %v4806, %v4805
        %v4829 = vpack.c.b16 %v4808, %v4807
        %v4830 = vpack.c.b16 %v4810, %v4809
        %v4831 = vpack.c.b16 %v4812, %v4811
        %v4832 = vpack.c.b16 %v4814, %v4813
        %v4833 = vpack.c.b16 %v4816, %v4815
        %v4834 = vpack.c.b16 %v4818, %v4817
        %4835 = vrot.lane.b32.xlu0 %v4819, 64
        %v4836 = vpop.permute.xlu0 %4835
        %4837 = vrot.lane.b32.xlu0 %v4820, 64
        %v4838 = vpop.permute.xlu0 %4837
        %4839 = vrot.lane.b32.xlu0 %v4821, 64
        %v4840 = vpop.permute.xlu0 %4839
        %4841 = vrot.lane.b32.xlu0 %v4822, 64
        %v4842 = vpop.permute.xlu0 %4841
        %4843 = vrot.lane.b32.xlu0 %v4823, 64
        %v4844 = vpop.permute.xlu0 %4843
        %4845 = vrot.lane.b32.xlu0 %v4824, 64
        %v4846 = vpop.permute.xlu0 %4845
        %4847 = vrot.lane.b32.xlu0 %v4825, 64
        %v4848 = vpop.permute.xlu0 %4847
        %4849 = vrot.lane.b32.xlu0 %v4826, 64
        %v4850 = vpop.permute.xlu0 %4849
        %4851 = vrot.lane.b32.xlu0 %v4827, 64
        %v4852 = vpop.permute.xlu0 %4851
        %4853 = vrot.lane.b32.xlu0 %v4828, 64
        %v4854 = vpop.permute.xlu0 %4853
        %4855 = vrot.lane.b32.xlu0 %v4829, 64
        %v4856 = vpop.permute.xlu0 %4855
        %4857 = vrot.lane.b32.xlu0 %v4830, 64
        %v4858 = vpop.permute.xlu0 %4857
        %4859 = vrot.lane.b32.xlu0 %v4831, 64
        %v4860 = vpop.permute.xlu0 %4859
        %4861 = vrot.lane.b32.xlu0 %v4832, 64
        %v4862 = vpop.permute.xlu0 %4861
        %4863 = vrot.lane.b32.xlu0 %v4833, 64
        %v4864 = vpop.permute.xlu0 %4863
        %4865 = vrot.lane.b32.xlu0 %v4834, 64
        %v4866 = vpop.permute.xlu0 %4865
        %v4867 = vunpack.c.l.b16 %v484
        %v4868 = vunpack.c.l.b16 %v485
        %v4869 = vunpack.c.l.b16 %v488
        %v4870 = vunpack.c.l.b16 %v489
        %v4871 = vunpack.c.l.b16 %v492
        %v4872 = vunpack.c.l.b16 %v493
        %v4873 = vunpack.c.l.b16 %v496
        %v4874 = vunpack.c.l.b16 %v497
        %v4875 = vunpack.c.l.b16 %v500
        %v4876 = vunpack.c.l.b16 %v501
        %v4877 = vunpack.c.l.b16 %v504
        %v4878 = vunpack.c.l.b16 %v505
        %v4879 = vunpack.c.l.b16 %v508
        %v4880 = vunpack.c.l.b16 %v509
        %v4881 = vpack.c.b16 %v4868, %v4867
        %v4882 = vpack.c.b16 %v4870, %v4869
        %v4883 = vpack.c.b16 %v4872, %v4871
        %v4884 = vpack.c.b16 %v4874, %v4873
        %v4885 = vpack.c.b16 %v4876, %v4875
        %v4886 = vpack.c.b16 %v4878, %v4877
        %v4887 = vpack.c.b16 %v4880, %v4879
        %4888 = vrot.lane.b32.xlu0 %v4768, 96
        %v4889 = vpop.permute.xlu0 %4888
        %4890 = vrot.lane.b32.xlu0 %v4769, 96
        %v4891 = vpop.permute.xlu0 %4890
        %4892 = vrot.lane.b32.xlu0 %v4770, 96
        %v4893 = vpop.permute.xlu0 %4892
        %4894 = vrot.lane.b32.xlu0 %v4771, 96
        %v4895 = vpop.permute.xlu0 %4894
        %4896 = vrot.lane.b32.xlu0 %v4772, 96
        %v4897 = vpop.permute.xlu0 %4896
        %4898 = vrot.lane.b32.xlu0 %v4773, 96
        %v4899 = vpop.permute.xlu0 %4898
        %4900 = vrot.lane.b32.xlu0 %v4774, 96
        %v4901 = vpop.permute.xlu0 %4900
        %4902 = vrot.lane.b32.xlu0 %v4775, 96
        %v4903 = vpop.permute.xlu0 %4902
        %4904 = vrot.lane.b32.xlu0 %v4776, 96
        %v4905 = vpop.permute.xlu0 %4904
        %4906 = vrot.lane.b32.xlu0 %v4881, 96
        %v4907 = vpop.permute.xlu0 %4906
        %4908 = vrot.lane.b32.xlu0 %v4882, 96
        %v4909 = vpop.permute.xlu0 %4908
        %4910 = vrot.lane.b32.xlu0 %v4883, 96
        %v4911 = vpop.permute.xlu0 %4910
        %4912 = vrot.lane.b32.xlu0 %v4884, 96
        %v4913 = vpop.permute.xlu0 %4912
        %4914 = vrot.lane.b32.xlu0 %v4885, 96
        %v4915 = vpop.permute.xlu0 %4914
        %4916 = vrot.lane.b32.xlu0 %v4886, 96
        %v4917 = vpop.permute.xlu0 %4916
        %4918 = vrot.lane.b32.xlu0 %v4887, 96
        %v4919 = vpop.permute.xlu0 %4918
        %v4920 = vunpack.c.l.b16 %v4582
        %v4921 = vunpack.c.l.b16 %v4585
        %v4922 = vunpack.c.l.b16 %v4589
        %v4923 = vunpack.c.l.b16 %v4592
        %v4924 = vunpack.c.l.b16 %v4596
        %v4925 = vunpack.c.l.b16 %v4599
        %v4926 = vunpack.c.l.b16 %v4603
        %v4927 = vunpack.c.l.b16 %v4606
        %v4928 = vunpack.c.l.b16 %v4610
        %v4929 = vunpack.c.l.b16 %v4613
        %v4930 = vunpack.c.l.b16 %v4617
        %v4931 = vunpack.c.l.b16 %v4620
        %v4932 = vunpack.c.l.b16 %v4624
        %v4933 = vunpack.c.l.b16 %v4627
        %v4934 = vpack.c.b16 %v4921, %v4920
        %v4935 = vpack.c.b16 %v4923, %v4922
        %v4936 = vpack.c.b16 %v4925, %v4924
        %v4937 = vpack.c.b16 %v4927, %v4926
        %v4938 = vpack.c.b16 %v4929, %v4928
        %v4939 = vpack.c.b16 %v4931, %v4930
        %v4940 = vpack.c.b16 %v4933, %v4932
        %4941 = vrot.lane.b32.xlu0 %v4826, 32
        %v4942 = vpop.permute.xlu0 %4941
        %4943 = vrot.lane.b32.xlu0 %v4827, 32
        %v4944 = vpop.permute.xlu0 %4943
        %4945 = vrot.lane.b32.xlu0 %v4828, 32
        %v4946 = vpop.permute.xlu0 %4945
        %4947 = vrot.lane.b32.xlu0 %v4829, 32
        %v4948 = vpop.permute.xlu0 %4947
        %4949 = vrot.lane.b32.xlu0 %v4830, 32
        %v4950 = vpop.permute.xlu0 %4949
        %4951 = vrot.lane.b32.xlu0 %v4831, 32
        %v4952 = vpop.permute.xlu0 %4951
        %4953 = vrot.lane.b32.xlu0 %v4832, 32
        %v4954 = vpop.permute.xlu0 %4953
        %4955 = vrot.lane.b32.xlu0 %v4833, 32
        %v4956 = vpop.permute.xlu0 %4955
        %4957 = vrot.lane.b32.xlu0 %v4834, 32
        %v4958 = vpop.permute.xlu0 %4957
        %4959 = vrot.lane.b32.xlu0 %v4934, 32
        %v4960 = vpop.permute.xlu0 %4959
        %4961 = vrot.lane.b32.xlu0 %v4935, 32
        %v4962 = vpop.permute.xlu0 %4961
        %4963 = vrot.lane.b32.xlu0 %v4936, 32
        %v4964 = vpop.permute.xlu0 %4963
        %4965 = vrot.lane.b32.xlu0 %v4937, 32
        %v4966 = vpop.permute.xlu0 %4965
        %4967 = vrot.lane.b32.xlu0 %v4938, 32
        %v4968 = vpop.permute.xlu0 %4967
        %4969 = vrot.lane.b32.xlu0 %v4939, 32
        %v4970 = vpop.permute.xlu0 %4969
        %4971 = vrot.lane.b32.xlu0 %v4940, 32
        %v4972 = vpop.permute.xlu0 %4971
        %v4975 = vunpack.c.l.b16 %v512
        %v4976 = vunpack.c.l.b16 %v513
        %v4977 = vunpack.c.l.b16 %v516
        %v4978 = vunpack.c.l.b16 %v517
        %v4979 = vunpack.c.l.b16 %v520
        %v4980 = vunpack.c.l.b16 %v521
        %v4981 = vunpack.c.l.b16 %v524
        %v4982 = vunpack.c.l.b16 %v525
        %v4983 = vunpack.c.l.b16 %v528
        %v4984 = vunpack.c.l.b16 %v529
        %v4985 = vunpack.c.l.b16 %v532
        %v4986 = vunpack.c.l.b16 %v533
        %v4987 = vunpack.c.l.b16 %v536
        %v4988 = vunpack.c.l.b16 %v537
        %v4989 = vpack.c.b16 %v4976, %v4975
        %v4990 = vpack.c.b16 %v4978, %v4977
        %v4991 = vpack.c.b16 %v4980, %v4979
        %v4992 = vpack.c.b16 %v4982, %v4981
        %v4993 = vpack.c.b16 %v4984, %v4983
        %v4994 = vpack.c.b16 %v4986, %v4985
        %v4995 = vpack.c.b16 %v4988, %v4987
        %4996 = vrot.lane.b32.xlu0 %v4775, 64
        %v4997 = vpop.permute.xlu0 %4996
        %4998 = vrot.lane.b32.xlu0 %v4776, 64
        %v4999 = vpop.permute.xlu0 %4998
        %5000 = vrot.lane.b32.xlu0 %v4881, 64
        %v5001 = vpop.permute.xlu0 %5000
        %5002 = vrot.lane.b32.xlu0 %v4882, 64
        %v5003 = vpop.permute.xlu0 %5002
        %5004 = vrot.lane.b32.xlu0 %v4883, 64
        %v5005 = vpop.permute.xlu0 %5004
        %5006 = vrot.lane.b32.xlu0 %v4884, 64
        %v5007 = vpop.permute.xlu0 %5006
        %5008 = vrot.lane.b32.xlu0 %v4885, 64
        %v5009 = vpop.permute.xlu0 %5008
        %5010 = vrot.lane.b32.xlu0 %v4886, 64
        %v5011 = vpop.permute.xlu0 %5010
        %5012 = vrot.lane.b32.xlu0 %v4887, 64
        %v5013 = vpop.permute.xlu0 %5012
        %5014 = vrot.lane.b32.xlu0 %v4989, 64
        %v5015 = vpop.permute.xlu0 %5014
        %5016 = vrot.lane.b32.xlu0 %v4990, 64
        %v5017 = vpop.permute.xlu0 %5016
        %5018 = vrot.lane.b32.xlu0 %v4991, 64
        %v5019 = vpop.permute.xlu0 %5018
        %5020 = vrot.lane.b32.xlu0 %v4992, 64
        %v5021 = vpop.permute.xlu0 %5020
        %5022 = vrot.lane.b32.xlu0 %v4993, 64
        %v5023 = vpop.permute.xlu0 %5022
        %5024 = vrot.lane.b32.xlu0 %v4994, 64
        %v5025 = vpop.permute.xlu0 %5024
        %5026 = vrot.lane.b32.xlu0 %v4995, 64
        %v5027 = vpop.permute.xlu0 %5026
        %v5028 = vunpack.c.l.b16 %v4640
        %v5029 = vunpack.c.l.b16 %v4649
        %v5030 = vunpack.c.l.b16 %v4662
        %v5031 = vunpack.c.l.b16 %v4671
        %v5032 = vpack.c.b16 %v5029, %v5028
        %v5033 = vpack.c.b16 %v5031, %v5030
        %5034 = vrot.lane.b32.xlu0 %v5032, 96
        %v5035 = vpop.permute.xlu0 %5034
        %5036 = vrot.lane.b32.xlu0 %v5033, 96
        %v5037 = vpop.permute.xlu0 %5036
        %v5038 = vunpack.c.l.b16 %v4681
        %v5039 = vunpack.c.l.b16 %v4684
        %v5040 = vunpack.c.l.b16 %v4688
        %v5041 = vunpack.c.l.b16 %v4691
        %v5042 = vunpack.c.l.b16 %v4695
        %v5043 = vunpack.c.l.b16 %v4698
        %v5044 = vunpack.c.l.b16 %v4702
        %v5045 = vunpack.c.l.b16 %v4705
        %v5046 = vunpack.c.l.b16 %v4709
        %v5047 = vunpack.c.l.b16 %v4712
        %v5048 = vunpack.c.l.b16 %v4716
        %v5049 = vunpack.c.l.b16 %v4719
        %v5050 = vunpack.c.l.b16 %v4723
        %v5051 = vunpack.c.l.b16 %v4726
        %v5052 = vpack.c.b16 %v5039, %v5038
        %v5053 = vpack.c.b16 %v5041, %v5040
        %v5054 = vpack.c.b16 %v5043, %v5042
        %v5055 = vpack.c.b16 %v5045, %v5044
        %v5056 = vpack.c.b16 %v5047, %v5046
        %v5057 = vpack.c.b16 %v5049, %v5048
        %v5058 = vpack.c.b16 %v5051, %v5050
        %v5061 = vsel %vm959, %v4761, %v4784
        %v5064 = vsel %vm959, %v4762, %v4786
        %v5066 = vsel %vm959, %v4763, %v3356
        %v5068 = vsel %vm959, %v4764, %v3358
        %v5070 = vsel %vm959, %v4765, %v1871
        %v5072 = vsel %vm959, %v4766, %v1873
        %v5074 = vsel %vm959, %v4767, %v1875
        %v5076 = vsel %vm959, %v4768, %v1877
        %v5078 = vsel %vm959, %v4769, %v1879
        %v5080 = vsel %vm959, %v4770, %v1881
        %v5082 = vsel %vm959, %v4771, %v1883
        %v5084 = vsel %vm959, %v4772, %v1885
        %v5086 = vsel %vm959, %v4773, %v1887
        %v5088 = vsel %vm959, %v4774, %v1889
        %v5090 = vsel %vm959, %v4775, %v1891
        %v5092 = vsel %vm959, %v4776, %v1893
        %v5094 = vsel %vm2203, %v5061, %v4836
        %v5096 = vsel %vm2203, %v5064, %v4838
        %v5098 = vsel %vm2203, %v5066, %v4840
        %v5100 = vsel %vm2203, %v5068, %v4842
        %v5102 = vsel %vm2203, %v5070, %v4844
        %v5104 = vsel %vm2203, %v5072, %v4846
        %v5106 = vsel %vm2203, %v5074, %v4848
        %v5108 = vsel %vm2203, %v5076, %v4850
        %v5110 = vsel %vm2203, %v5078, %v4852
        %v5112 = vsel %vm2203, %v5080, %v4854
        %v5114 = vsel %vm2203, %v5082, %v4856
        %v5116 = vsel %vm2203, %v5084, %v4858
        %v5118 = vsel %vm2203, %v5086, %v4860
        %v5120 = vsel %vm2203, %v5088, %v4862
        %v5122 = vsel %vm2203, %v5090, %v4864
        %v5124 = vsel %vm2203, %v5092, %v4866
        %v5126 = vsel %vm2236, %v5094, %v4889
        %v5129 = vsel %vm2236, %v5096, %v4891
        %v5132 = vsel %vm2236, %v5098, %v4893
        %v5135 = vsel %vm2236, %v5100, %v4895
        %v5138 = vsel %vm2236, %v5102, %v4897
        %v5141 = vsel %vm2236, %v5104, %v4899
        %v5144 = vsel %vm2236, %v5106, %v4901
        %v5147 = vsel %vm2236, %v5108, %v4903
        %v5150 = vsel %vm2236, %v5110, %v4905
        %v5153 = vsel %vm2236, %v5112, %v4907
        %v5156 = vsel %vm2236, %v5114, %v4909
        %v5159 = vsel %vm2236, %v5116, %v4911
        %v5162 = vsel %vm2236, %v5118, %v4913
        %v5165 = vsel %vm2236, %v5120, %v4915
        %v5168 = vsel %vm2236, %v5122, %v4917
        %v5171 = vsel %vm2236, %v5124, %v4919
        %v5174 = vsel %vm959, %v931, %v4942
        %v5176 = vsel %vm959, %v932, %v4944
        %v5178 = vsel %vm959, %v933, %v4946
        %v5180 = vsel %vm959, %v934, %v4948
        %v5182 = vsel %vm959, %v935, %v4950
        %v5184 = vsel %vm959, %v936, %v4952
        %v5186 = vsel %vm959, %v937, %v4954
        %v5188 = vsel %vm959, %v938, %v4956
        %v5190 = vsel %vm959, %v939, %v4958
        %v5192 = vsel %vm959, %v940, %v4960
        %v5194 = vsel %vm959, %v941, %v4962
        %v5196 = vsel %vm959, %v942, %v4964
        %v5198 = vsel %vm959, %v943, %v4966
        %v5200 = vsel %vm959, %v944, %v4968
        %v5202 = vsel %vm959, %v945, %v4970
        %v5204 = vsel %vm959, %v946, %v4972
        %v5206 = vsel %vm2203, %v5174, %v4997
        %v5208 = vsel %vm2203, %v5176, %v4999
        %v5210 = vsel %vm2203, %v5178, %v5001
        %v5212 = vsel %vm2203, %v5180, %v5003
        %v5214 = vsel %vm2203, %v5182, %v5005
        %v5216 = vsel %vm2203, %v5184, %v5007
        %v5218 = vsel %vm2203, %v5186, %v5009
        %v5220 = vsel %vm2203, %v5188, %v5011
        %v5222 = vsel %vm2203, %v5190, %v5013
        %v5224 = vsel %vm2203, %v5192, %v5015
        %v5226 = vsel %vm2203, %v5194, %v5017
        %v5228 = vsel %vm2203, %v5196, %v5019
        %v5230 = vsel %vm2203, %v5198, %v5021
        %v5232 = vsel %vm2203, %v5200, %v5023
        %v5234 = vsel %vm2203, %v5202, %v5025
        %v5236 = vsel %vm2203, %v5204, %v5027
        %v5237 = vsel %vm2236, %v5206, %v2123
        %v5239 = vsel %vm2236, %v5208, %v2125
        %v5241 = vsel %vm2236, %v5210, %v2127
        %v5243 = vsel %vm2236, %v5212, %v2129
        %v5245 = vsel %vm2236, %v5214, %v2131
        %v5247 = vsel %vm2236, %v5216, %v2133
        %v5249 = vsel %vm2236, %v5218, %v2135
        %v5251 = vsel %vm2236, %v5220, %v2137
        %v5253 = vsel %vm2236, %v5222, %v2139
        %v5255 = vsel %vm2236, %v5224, %v2141
        %v5257 = vsel %vm2236, %v5226, %v2143
        %v5259 = vsel %vm2236, %v5228, %v2145
        %v5261 = vsel %vm2236, %v5230, %v3560
        %v5263 = vsel %vm2236, %v5232, %v3562
        %v5266 = vsel %vm2236, %v5234, %v5035
        %v5269 = vsel %vm2236, %v5236, %v5037
        %s5271 = scalar_lea.vmem [#allocation7], 288
        %v5272 = vld [vmem:[%s5271] sm:$0xf]
        %v5273 = vld [vmem:[%s5271 + $0x4] sm:$0xf]
        %v5274 = vld [vmem:[%s5271 + $0x8] sm:$0xf]
        %v5275 = vld [vmem:[%s5271 + $0xc] sm:$0xf]
        %v5276 = vld [vmem:[%s5271 + $0x10] sm:$0xf]
        %v5277 = vld [vmem:[%s5271 + $0x14] sm:$0xf]
        %v5278 = vld [vmem:[%s5271 + $0x18] sm:$0xf]
        %v5279 = vld [vmem:[%s5271 + $0x1c] sm:$0xf]
        %v5280 = vld [vmem:[%s5271 + $0x20] sm:$0xf]
        %v5281 = vld [vmem:[%s5271 + $0x24] sm:$0xf]
        %v5282 = vld [vmem:[%s5271 + $0x28] sm:$0xf]
        %v5283 = vld [vmem:[%s5271 + $0x2c] sm:$0xf]
        %v5284 = vld [vmem:[%s5271 + $0x30] sm:$0xf]
        %v5285 = vld [vmem:[%s5271 + $0x34] sm:$0xf]
        %v5286 = vld [vmem:[%s5271 + $0x38] sm:$0xf]
        %v5287 = vld [vmem:[%s5271 + $0x3c] sm:$0xf]
        %v5288 = vld [vmem:[%s5271 + $0x40] sm:$0xf]
        %v5289 = vld [vmem:[%s5271 + $0x44] sm:$0xf]
        %v5290 = vld [vmem:[%s5271 + $0x48] sm:$0xf]
        %v5291 = vld [vmem:[%s5271 + $0x4c] sm:$0xf]
        %v5292 = vld [vmem:[%s5271 + $0x50] sm:$0xf]
        %v5293 = vld [vmem:[%s5271 + $0x54] sm:$0xf]
        %v5294 = vld [vmem:[%s5271 + $0x58] sm:$0xf]
        %v5295 = vld [vmem:[%s5271 + $0x5c] sm:$0xf]
        %v5296 = vld [vmem:[%s5271 + $0x60] sm:$0xf]
        %v5297 = vld [vmem:[%s5271 + $0x64] sm:$0xf]
        %v5298 = vld [vmem:[%s5271 + $0x68] sm:$0xf]
        %v5299 = vld [vmem:[%s5271 + $0x6c] sm:$0xf]
        %v5300 = vld [vmem:[%s5271 + $0x70] sm:$0xf]
        %v5301 = vld [vmem:[%s5271 + $0x74] sm:$0xf]
        %v5302 = vld [vmem:[%s5271 + $0x78] sm:$0xf]
        %v5303 = vld [vmem:[%s5271 + $0x7c] sm:$0xf]
        %v5304 = vld [vmem:[%s5271 + $0x80] sm:$0xf]
        %v5305 = vld [vmem:[%s5271 + $0x84] sm:$0xf]
        %v5306 = vld [vmem:[%s5271 + $0x88] sm:$0xf]
        %v5307 = vld [vmem:[%s5271 + $0x8c] sm:$0xf]
        %v5344 = vunpack.c.l.b16 %v5272
        %v5345 = vunpack.c.l.b16 %v5273
        %v5346 = vunpack.c.l.b16 %v5274
        %v5347 = vunpack.c.l.b16 %v5275
        %v5348 = vunpack.c.l.b16 %v5276
        %v5349 = vunpack.c.l.b16 %v5277
        %v5350 = vunpack.c.l.b16 %v5278
        %v5351 = vunpack.c.l.b16 %v5279
        %v5352 = vunpack.c.l.b16 %v5280
        %v5353 = vunpack.c.l.b16 %v5281
        %v5354 = vunpack.c.l.b16 %v5282
        %v5355 = vunpack.c.l.b16 %v5283
        %v5356 = vunpack.c.l.b16 %v5284
        %v5357 = vunpack.c.l.b16 %v5285
        %v5358 = vunpack.c.l.b16 %v5286
        %v5359 = vunpack.c.l.b16 %v5287
        %v5360 = vunpack.c.l.b16 %v5288
        %v5361 = vunpack.c.l.b16 %v5289
        %v5362 = vunpack.c.l.b16 %v5290
        %v5363 = vunpack.c.l.b16 %v5291
        %v5364 = vunpack.c.l.b16 %v5292
        %v5365 = vunpack.c.l.b16 %v5293
        %v5366 = vunpack.c.l.b16 %v5294
        %v5367 = vunpack.c.l.b16 %v5295
        %v5368 = vunpack.c.l.b16 %v5296
        %v5369 = vunpack.c.l.b16 %v5297
        %v5370 = vunpack.c.l.b16 %v5298
        %v5371 = vunpack.c.l.b16 %v5299
        %v5372 = vunpack.c.l.b16 %v5300
        %v5373 = vunpack.c.l.b16 %v5301
        %v5374 = vunpack.c.l.b16 %v5302
        %v5375 = vunpack.c.l.b16 %v5303
        %v5376 = vunpack.c.l.b16 %v5304
        %v5377 = vunpack.c.l.b16 %v5305
        %v5378 = vunpack.c.l.b16 %v5306
        %v5379 = vunpack.c.l.b16 %v5307
        %v5380 = vpack.c.b16 %v5345, %v5344
        %v5381 = vpack.c.b16 %v5347, %v5346
        %v5382 = vpack.c.b16 %v5349, %v5348
        %v5383 = vpack.c.b16 %v5351, %v5350
        %v5384 = vpack.c.b16 %v5353, %v5352
        %v5385 = vpack.c.b16 %v5355, %v5354
        %v5386 = vpack.c.b16 %v5357, %v5356
        %v5387 = vpack.c.b16 %v5359, %v5358
        %v5388 = vpack.c.b16 %v5361, %v5360
        %v5389 = vpack.c.b16 %v5363, %v5362
        %v5390 = vpack.c.b16 %v5365, %v5364
        %v5391 = vpack.c.b16 %v5367, %v5366
        %v5392 = vpack.c.b16 %v5369, %v5368
        %v5393 = vpack.c.b16 %v5371, %v5370
        %v5394 = vpack.c.b16 %v5373, %v5372
        %v5395 = vpack.c.b16 %v5375, %v5374
        %v5396 = vpack.c.b16 %v5377, %v5376
        %v5397 = vpack.c.b16 %v5379, %v5378
        %v5417 = vsel %vm959, %v4833, 0
        %v5420 = vsel %vm959, %v4834, 0
        %v5423 = vsel %vm959, %v4934, 0
        %v5426 = vsel %vm959, %v4935, 0
        %v5429 = vsel %vm959, %v4936, 0
        %v5432 = vsel %vm959, %v4937, 0
        %v5435 = vsel %vm959, %v4938, 0
        %v5438 = vsel %vm959, %v4939, 0
        %v5441 = vsel %vm959, %v4940, 0
        %v5444 = vsel %vm959, %v5052, 0
        %v5447 = vsel %vm959, %v5053, 0
        %v5450 = vsel %vm959, %v5054, 0
        %v5453 = vsel %vm959, %v5055, 0
        %v5456 = vsel %vm959, %v5056, 0
        %v5459 = vsel %vm959, %v5057, 0
        %v5462 = vsel %vm959, %v5058, 0
        %5464 = vmatprep.subr.bf16.mxu0 0
        %5465 = vmatpush1.bf16.msra.mxu0 %v5380
        %5466 = vmatprep.subr.bf16.mxu0 0
        %5467 = vmatpush1.bf16.msra.mxu0 %v5381
        %5468 = vmatprep.subr.bf16.mxu0 0
        %5469 = vmatpush1.bf16.msra.mxu0 %v5382
        %5470 = vmatprep.subr.bf16.mxu0 0
        %5471 = vmatpush1.bf16.msra.mxu0 %v5383
        %5472 = vmatprep.subr.bf16.mxu0 0
        %5473 = vmatpush1.bf16.msra.mxu0 %v5384
        %5474 = vmatprep.subr.bf16.mxu0 0
        %5475 = vmatpush1.bf16.msra.mxu0 %v5385
        %5476 = vmatprep.subr.bf16.mxu0 0
        %5477 = vmatpush1.bf16.msra.mxu0 %v5386
        %5478 = vmatprep.subr.bf16.mxu0 0
        %5479 = vmatpush1.bf16.msra.mxu0 %v5387
        %5480 = vmatprep.subr.bf16.mxu0 0
        %5481 = vmatpush1.bf16.msra.mxu0 %v5388
        %5482 = vmatprep.subr.bf16.mxu0 0
        %5483 = vmatpush1.bf16.msra.mxu0 %v5389
        %5484 = vmatprep.subr.bf16.mxu0 0
        %5485 = vmatpush1.bf16.msra.mxu0 %v5390
        %5486 = vmatprep.subr.bf16.mxu0 0
        %5487 = vmatpush1.bf16.msra.mxu0 %v5391
        %5488 = vmatprep.subr.bf16.mxu0 0
        %5489 = vmatpush1.bf16.msra.mxu0 %v5392
        %5490 = vmatprep.subr.bf16.mxu0 0
        %5491 = vmatpush1.bf16.msra.mxu0 %v5393
        %5492 = vmatprep.subr.bf16.mxu0 0
        %5493 = vmatpush1.bf16.msra.mxu0 %v5394
        %5494 = vmatprep.subr.bf16.mxu0 0
        %5495 = vmatpush1.bf16.msra.mxu0 %v5395
        %5496 = vmatprep.mubr.bf16.mxu0 %v5237
        %5497 = vmatmul.mubr.bf16.gmra.mrb[0].mxu0 %v5126
        %v5498 = vpop.f32.mrb[0].mxu0
        %v5499 = vadd.f32 0.0, %v5498
        %v5500 = vpop.f32.mrb[0].mxu0
        %v5501 = vpop.f32.mrb[0].mxu0
        %v5502 = vadd.f32 0.0, %v5501
        %v5503 = vpop.f32.mrb[0].mxu0
        %5504 = vmatprep.mubr.bf16.mxu0 %v5239
        %5505 = vmatmul.mubr.bf16.gmra.mrb[0].mxu0 %v5129
        %v5506 = vpop.f32.mrb[0].mxu0
        %v5507 = vadd.f32 0.0, %v5506
        %v5508 = vpop.f32.mrb[0].mxu0
        %v5509 = vpop.f32.mrb[0].mxu0
        %v5510 = vadd.f32 0.0, %v5509
        %v5511 = vpop.f32.mrb[0].mxu0
        %5512 = vmatprep.mubr.bf16.mxu0 %v5241
        %5513 = vmatmul.mubr.bf16.gmra.mrb[0].mxu0 %v5132
        %v5514 = vpop.f32.mrb[0].mxu0
        %v5515 = vadd.f32 0.0, %v5514
        %v5516 = vpop.f32.mrb[0].mxu0
        %v5517 = vpop.f32.mrb[0].mxu0
        %v5518 = vadd.f32 0.0, %v5517
        %v5519 = vpop.f32.mrb[0].mxu0
        %5520 = vmatprep.mubr.bf16.mxu0 %v5243
        %5521 = vmatmul.mubr.bf16.gmra.mrb[0].mxu0 %v5135
        %v5522 = vpop.f32.mrb[0].mxu0
        %v5523 = vadd.f32 0.0, %v5522
        %v5524 = vpop.f32.mrb[0].mxu0
        %v5525 = vpop.f32.mrb[0].mxu0
        %v5526 = vadd.f32 0.0, %v5525
        %v5527 = vpop.f32.mrb[0].mxu0
        %5528 = vmatprep.mubr.bf16.mxu0 %v5245
        %5529 = vmatmul.mubr.bf16.gmra.mrb[0].mxu0 %v5138
        %v5530 = vpop.f32.mrb[0].mxu0
        %v5531 = vadd.f32 0.0, %v5530
        %v5532 = vpop.f32.mrb[0].mxu0
        %v5533 = vpop.f32.mrb[0].mxu0
        %v5534 = vadd.f32 0.0, %v5533
        %v5535 = vpop.f32.mrb[0].mxu0
        %5536 = vmatprep.mubr.bf16.mxu0 %v5247
        %5537 = vmatmul.mubr.bf16.gmra.mrb[0].mxu0 %v5141
        %v5538 = vpop.f32.mrb[0].mxu0
        %v5539 = vadd.f32 0.0, %v5538
        %v5540 = vpop.f32.mrb[0].mxu0
        %v5541 = vpop.f32.mrb[0].mxu0
        %v5542 = vadd.f32 0.0, %v5541
        %v5543 = vpop.f32.mrb[0].mxu0
        %5544 = vmatprep.mubr.bf16.mxu0 %v5249
        %5545 = vmatmul.mubr.bf16.gmra.mrb[0].mxu0 %v5144
        %v5546 = vpop.f32.mrb[0].mxu0
        %v5547 = vadd.f32 0.0, %v5546
        %v5548 = vpop.f32.mrb[0].mxu0
        %v5549 = vpop.f32.mrb[0].mxu0
        %v5550 = vadd.f32 0.0, %v5549
        %v5551 = vpop.f32.mrb[0].mxu0
        %5552 = vmatprep.mubr.bf16.mxu0 %v5251
        %5553 = vmatmul.mubr.bf16.gmra.mrb[0].mxu0 %v5147
        %v5554 = vpop.f32.mrb[0].mxu0
        %v5555 = vadd.f32 0.0, %v5554
        %v5556 = vpop.f32.mrb[0].mxu0
        %v5557 = vpop.f32.mrb[0].mxu0
        %v5558 = vadd.f32 0.0, %v5557
        %v5559 = vpop.f32.mrb[0].mxu0
        %5560 = vmatprep.mubr.bf16.mxu0 %v5253
        %5561 = vmatmul.mubr.bf16.gmra.mrb[0].mxu0 %v5150
        %v5562 = vpop.f32.mrb[0].mxu0
        %v5563 = vadd.f32 0.0, %v5562
        %v5564 = vpop.f32.mrb[0].mxu0
        %v5565 = vpop.f32.mrb[0].mxu0
        %v5566 = vadd.f32 0.0, %v5565
        %v5567 = vpop.f32.mrb[0].mxu0
        %5568 = vmatprep.mubr.bf16.mxu0 %v5255
        %5569 = vmatmul.mubr.bf16.gmra.mrb[0].mxu0 %v5153
        %v5570 = vpop.f32.mrb[0].mxu0
        %v5571 = vadd.f32 0.0, %v5570
        %v5572 = vpop.f32.mrb[0].mxu0
        %v5573 = vpop.f32.mrb[0].mxu0
        %v5574 = vadd.f32 0.0, %v5573
        %v5575 = vpop.f32.mrb[0].mxu0
        %5576 = vmatprep.mubr.bf16.mxu0 %v5257
        %5577 = vmatmul.mubr.bf16.gmra.mrb[0].mxu0 %v5156
        %v5578 = vpop.f32.mrb[0].mxu0
        %v5579 = vadd.f32 0.0, %v5578
        %v5580 = vpop.f32.mrb[0].mxu0
        %v5581 = vpop.f32.mrb[0].mxu0
        %v5582 = vadd.f32 0.0, %v5581
        %v5583 = vpop.f32.mrb[0].mxu0
        %5584 = vmatprep.mubr.bf16.mxu0 %v5259
        %5585 = vmatmul.mubr.bf16.gmra.mrb[0].mxu0 %v5159
        %v5586 = vpop.f32.mrb[0].mxu0
        %v5587 = vadd.f32 0.0, %v5586
        %v5588 = vpop.f32.mrb[0].mxu0
        %v5589 = vpop.f32.mrb[0].mxu0
        %v5590 = vadd.f32 0.0, %v5589
        %v5591 = vpop.f32.mrb[0].mxu0
        %5592 = vmatprep.mubr.bf16.mxu0 %v5261
        %5593 = vmatmul.mubr.bf16.gmra.mrb[0].mxu0 %v5162
        %v5594 = vpop.f32.mrb[0].mxu0
        %v5595 = vadd.f32 0.0, %v5594
        %v5596 = vpop.f32.mrb[0].mxu0
        %v5597 = vpop.f32.mrb[0].mxu0
        %v5598 = vadd.f32 0.0, %v5597
        %v5599 = vpop.f32.mrb[0].mxu0
        %5600 = vmatprep.mubr.bf16.mxu0 %v5263
        %5601 = vmatmul.mubr.bf16.gmra.mrb[0].mxu0 %v5165
        %v5602 = vpop.f32.mrb[0].mxu0
        %v5603 = vadd.f32 0.0, %v5602
        %v5604 = vpop.f32.mrb[0].mxu0
        %v5605 = vpop.f32.mrb[0].mxu0
        %v5606 = vadd.f32 0.0, %v5605
        %v5607 = vpop.f32.mrb[0].mxu0
        %5608 = vmatprep.mubr.bf16.mxu0 %v5266
        %5609 = vmatmul.mubr.bf16.gmra.mrb[0].mxu0 %v5168
        %v5610 = vpop.f32.mrb[0].mxu0
        %v5611 = vadd.f32 0.0, %v5610
        %v5612 = vpop.f32.mrb[0].mxu0
        %v5613 = vpop.f32.mrb[0].mxu0
        %v5614 = vadd.f32 0.0, %v5613
        %v5615 = vpop.f32.mrb[0].mxu0
        %5616 = vmatprep.mubr.bf16.mxu0 %v5269
        %5617 = vmatmul.mubr.bf16.gmra.mrb[0].mxu0 %v5171
        %v5618 = vpop.f32.mrb[0].mxu0
        %v5619 = vadd.f32 0.0, %v5618
        %v5620 = vpop.f32.mrb[0].mxu0
        %v5621 = vpop.f32.mrb[0].mxu0
        %v5622 = vadd.f32 0.0, %v5621
        %v5623 = vpop.f32.mrb[0].mxu0
        %5624 = vdwg.mxu0
        %5625 = vmatprep.subr.bf16.mxu0 0
        %5626 = vmatpush1.bf16.msra.mxu0 %v5396
        %5627 = vmatprep.subr.bf16.mxu0 0
        %5628 = vmatpush1.bf16.msra.mxu0 %v5397
        %5629 = vmatprep.subr.bf16.mxu0 0
        %5630 = vmatpush1.bf16.msra.mxu0 0
        %5631 = vmatprep.subr.bf16.mxu0 0
        %5632 = vmatpush1.bf16.msra.mxu0 0
        %5633 = vmatprep.subr.bf16.mxu0 0
        %5634 = vmatpush1.bf16.msra.mxu0 0
        %5635 = vmatprep.subr.bf16.mxu0 0
        %5636 = vmatpush1.bf16.msra.mxu0 0
        %5637 = vmatprep.subr.bf16.mxu0 0
        %5638 = vmatpush1.bf16.msra.mxu0 0
        %5639 = vmatprep.subr.bf16.mxu0 0
        %5640 = vmatpush1.bf16.msra.mxu0 0
        %5641 = vmatprep.subr.bf16.mxu0 0
        %5642 = vmatpush1.bf16.msra.mxu0 0
        %5643 = vmatprep.subr.bf16.mxu0 0
        %5644 = vmatpush1.bf16.msra.mxu0 0
        %5645 = vmatprep.subr.bf16.mxu0 0
        %5646 = vmatpush1.bf16.msra.mxu0 0
        %5647 = vmatprep.subr.bf16.mxu0 0
        %5648 = vmatpush1.bf16.msra.mxu0 0
        %5649 = vmatprep.subr.bf16.mxu0 0
        %5650 = vmatpush1.bf16.msra.mxu0 0
        %5651 = vmatprep.subr.bf16.mxu0 0
        %5652 = vmatpush1.bf16.msra.mxu0 0
        %5653 = vmatprep.subr.bf16.mxu0 0
        %5654 = vmatpush1.bf16.msra.mxu0 0
        %5655 = vmatprep.subr.bf16.mxu0 0
        %5656 = vmatpush1.bf16.msra.mxu0 0
        %5657 = vmatprep.mubr.bf16.mxu0 0
        %5658 = vmatmul.mubr.bf16.gmra.mrb[0].mxu0 %v5417
        %v5659 = vpop.f32.mrb[0].mxu0
        %v5660 = vadd.f32 %v5499, %v5659
        %v5661 = vpop.f32.mrb[0].mxu0
        %v5662 = vpop.f32.mrb[0].mxu0
        %v5663 = vadd.f32 %v5502, %v5662
        %v5664 = vpop.f32.mrb[0].mxu0
        %5665 = vmatprep.mubr.bf16.mxu0 0
        %5666 = vmatmul.mubr.bf16.gmra.mrb[0].mxu0 %v5420
        %v5667 = vpop.f32.mrb[0].mxu0
        %v5668 = vadd.f32 %v5507, %v5667
        %v5669 = vpop.f32.mrb[0].mxu0
        %v5670 = vpop.f32.mrb[0].mxu0
        %v5671 = vadd.f32 %v5510, %v5670
        %v5672 = vpop.f32.mrb[0].mxu0
        %5673 = vmatprep.mubr.bf16.mxu0 0
        %5674 = vmatmul.mubr.bf16.gmra.mrb[0].mxu0 %v5423
        %v5675 = vpop.f32.mrb[0].mxu0
        %v5676 = vadd.f32 %v5515, %v5675
        %v5677 = vpop.f32.mrb[0].mxu0
        %v5678 = vpop.f32.mrb[0].mxu0
        %v5679 = vadd.f32 %v5518, %v5678
        %v5680 = vpop.f32.mrb[0].mxu0
        %5681 = vmatprep.mubr.bf16.mxu0 0
        %5682 = vmatmul.mubr.bf16.gmra.mrb[0].mxu0 %v5426
        %v5683 = vpop.f32.mrb[0].mxu0
        %v5684 = vadd.f32 %v5523, %v5683
        %v5685 = vpop.f32.mrb[0].mxu0
        %v5686 = vpop.f32.mrb[0].mxu0
        %v5687 = vadd.f32 %v5526, %v5686
        %v5688 = vpop.f32.mrb[0].mxu0
        %5689 = vmatprep.mubr.bf16.mxu0 0
        %5690 = vmatmul.mubr.bf16.gmra.mrb[0].mxu0 %v5429
        %v5691 = vpop.f32.mrb[0].mxu0
        %v5692 = vadd.f32 %v5531, %v5691
        %v5693 = vpop.f32.mrb[0].mxu0
        %v5694 = vpop.f32.mrb[0].mxu0
        %v5695 = vadd.f32 %v5534, %v5694
        %v5696 = vpop.f32.mrb[0].mxu0
        %5697 = vmatprep.mubr.bf16.mxu0 0
        %5698 = vmatmul.mubr.bf16.gmra.mrb[0].mxu0 %v5432
        %v5699 = vpop.f32.mrb[0].mxu0
        %v5700 = vadd.f32 %v5539, %v5699
        %v5701 = vpop.f32.mrb[0].mxu0
        %v5702 = vpop.f32.mrb[0].mxu0
        %v5703 = vadd.f32 %v5542, %v5702
        %v5704 = vpop.f32.mrb[0].mxu0
        %5705 = vmatprep.mubr.bf16.mxu0 0
        %5706 = vmatmul.mubr.bf16.gmra.mrb[0].mxu0 %v5435
        %v5707 = vpop.f32.mrb[0].mxu0
        %v5708 = vadd.f32 %v5547, %v5707
        %v5709 = vpop.f32.mrb[0].mxu0
        %v5710 = vpop.f32.mrb[0].mxu0
        %v5711 = vadd.f32 %v5550, %v5710
        %v5712 = vpop.f32.mrb[0].mxu0
        %5713 = vmatprep.mubr.bf16.mxu0 0
        %5714 = vmatmul.mubr.bf16.gmra.mrb[0].mxu0 %v5438
        %v5715 = vpop.f32.mrb[0].mxu0
        %v5716 = vadd.f32 %v5555, %v5715
        %v5717 = vpop.f32.mrb[0].mxu0
        %v5718 = vpop.f32.mrb[0].mxu0
        %v5719 = vadd.f32 %v5558, %v5718
        %v5720 = vpop.f32.mrb[0].mxu0
        %5721 = vmatprep.mubr.bf16.mxu0 0
        %5722 = vmatmul.mubr.bf16.gmra.mrb[0].mxu0 %v5441
        %v5723 = vpop.f32.mrb[0].mxu0
        %v5724 = vadd.f32 %v5563, %v5723
        %v5725 = vpop.f32.mrb[0].mxu0
        %v5726 = vpop.f32.mrb[0].mxu0
        %v5727 = vadd.f32 %v5566, %v5726
        %v5728 = vpop.f32.mrb[0].mxu0
        %5729 = vmatprep.mubr.bf16.mxu0 0
        %5730 = vmatmul.mubr.bf16.gmra.mrb[0].mxu0 %v5444
        %v5731 = vpop.f32.mrb[0].mxu0
        %v5732 = vadd.f32 %v5571, %v5731
        %v5733 = vpop.f32.mrb[0].mxu0
        %v5734 = vpop.f32.mrb[0].mxu0
        %v5735 = vadd.f32 %v5574, %v5734
        %v5736 = vpop.f32.mrb[0].mxu0
        %5737 = vmatprep.mubr.bf16.mxu0 0
        %5738 = vmatmul.mubr.bf16.gmra.mrb[0].mxu0 %v5447
        %v5739 = vpop.f32.mrb[0].mxu0
        %v5740 = vadd.f32 %v5579, %v5739
        %v5741 = vpop.f32.mrb[0].mxu0
        %v5742 = vpop.f32.mrb[0].mxu0
        %v5743 = vadd.f32 %v5582, %v5742
        %v5744 = vpop.f32.mrb[0].mxu0
        %5745 = vmatprep.mubr.bf16.mxu0 0
        %5746 = vmatmul.mubr.bf16.gmra.mrb[0].mxu0 %v5450
        %v5747 = vpop.f32.mrb[0].mxu0
        %v5748 = vadd.f32 %v5587, %v5747
        %v5749 = vpop.f32.mrb[0].mxu0
        %v5750 = vpop.f32.mrb[0].mxu0
        %v5751 = vadd.f32 %v5590, %v5750
        %v5752 = vpop.f32.mrb[0].mxu0
        %5753 = vmatprep.mubr.bf16.mxu0 0
        %5754 = vmatmul.mubr.bf16.gmra.mrb[0].mxu0 %v5453
        %v5755 = vpop.f32.mrb[0].mxu0
        %v5756 = vadd.f32 %v5595, %v5755
        %v5757 = vpop.f32.mrb[0].mxu0
        %v5758 = vpop.f32.mrb[0].mxu0
        %v5759 = vadd.f32 %v5598, %v5758
        %v5760 = vpop.f32.mrb[0].mxu0
        %5761 = vmatprep.mubr.bf16.mxu0 0
        %5762 = vmatmul.mubr.bf16.gmra.mrb[0].mxu0 %v5456
        %v5763 = vpop.f32.mrb[0].mxu0
        %v5764 = vadd.f32 %v5603, %v5763
        %v5765 = vpop.f32.mrb[0].mxu0
        %v5766 = vpop.f32.mrb[0].mxu0
        %v5767 = vadd.f32 %v5606, %v5766
        %v5768 = vpop.f32.mrb[0].mxu0
        %5769 = vmatprep.mubr.bf16.mxu0 0
        %5770 = vmatmul.mubr.bf16.gmra.mrb[0].mxu0 %v5459
        %v5771 = vpop.f32.mrb[0].mxu0
        %v5772 = vadd.f32 %v5611, %v5771
        %v5773 = vpop.f32.mrb[0].mxu0
        %v5774 = vpop.f32.mrb[0].mxu0
        %v5775 = vadd.f32 %v5614, %v5774
        %v5776 = vpop.f32.mrb[0].mxu0
        %5777 = vmatprep.mubr.bf16.mxu0 0
        %5778 = vmatmul.mubr.bf16.gmra.mrb[0].mxu0 %v5462
        %v5779 = vpop.f32.mrb[0].mxu0
        %v5780 = vadd.f32 %v5619, %v5779
        %v5781 = vpop.f32.mrb[0].mxu0
        %v5782 = vpop.f32.mrb[0].mxu0
        %v5783 = vadd.f32 %v5622, %v5782
        %v5784 = vpop.f32.mrb[0].mxu0
        %5785 = vdwg.mxu0
        %s5786 = scalar_lea.vmem [#allocation8], 3
        %v5787 = vld [vmem:[%s5786] sm:$0x1]
        %v5789 = vlaneseq
        %v5790 = vshrl.u32 %v5789, 7
        %v5791 = vsub.s32 0, %v5790
        %v5792 = vrot.slane %v5787, %v5791
        %v5794 = vmul.f32 %v5660, %v5792
        %v5795 = vmul.f32 %v5663, %v5792
        %v5796 = vmul.f32 %v5668, %v5792
        %v5797 = vmul.f32 %v5671, %v5792
        %v5798 = vmul.f32 %v5676, %v5792
        %v5799 = vmul.f32 %v5679, %v5792
        %v5800 = vmul.f32 %v5684, %v5792
        %v5801 = vmul.f32 %v5687, %v5792
        %v5802 = vmul.f32 %v5692, %v5792
        %v5803 = vmul.f32 %v5695, %v5792
        %v5804 = vmul.f32 %v5700, %v5792
        %v5805 = vmul.f32 %v5703, %v5792
        %v5806 = vmul.f32 %v5708, %v5792
        %v5807 = vmul.f32 %v5711, %v5792
        %v5808 = vmul.f32 %v5716, %v5792
        %v5809 = vmul.f32 %v5719, %v5792
        %v5810 = vmul.f32 %v5724, %v5792
        %v5811 = vmul.f32 %v5727, %v5792
        %v5812 = vmul.f32 %v5732, %v5792
        %v5813 = vmul.f32 %v5735, %v5792
        %v5814 = vmul.f32 %v5740, %v5792
        %v5815 = vmul.f32 %v5743, %v5792
        %v5816 = vmul.f32 %v5748, %v5792
        %v5817 = vmul.f32 %v5751, %v5792
        %v5818 = vmul.f32 %v5756, %v5792
        %v5819 = vmul.f32 %v5759, %v5792
        %v5820 = vmul.f32 %v5764, %v5792
        %v5821 = vmul.f32 %v5767, %v5792
        %v5822 = vmul.f32 %v5772, %v5792
        %v5823 = vmul.f32 %v5775, %v5792
        %v5824 = vmul.f32 %v5780, %v5792
        %v5825 = vmul.f32 %v5783, %v5792
        %s5826 = scalar_lea.vmem [#allocation10], 3
        %v5827 = vld [vmem:[%s5826] sm:$0x1]
        %v5829 = vlaneseq
        %v5830 = vshrl.u32 %v5829, 7
        %v5831 = vsub.s32 0, %v5830
        %v5832 = vrot.slane %v5827, %v5831
        %v5834 = vadd.f32 %v5794, %v5832
        %v5835 = vadd.f32 %v5795, %v5832
        %v5836 = vadd.f32 %v5796, %v5832
        %v5837 = vadd.f32 %v5797, %v5832
        %v5838 = vadd.f32 %v5798, %v5832
        %v5839 = vadd.f32 %v5799, %v5832
        %v5840 = vadd.f32 %v5800, %v5832
        %v5841 = vadd.f32 %v5801, %v5832
        %v5842 = vadd.f32 %v5802, %v5832
        %v5843 = vadd.f32 %v5803, %v5832
        %v5844 = vadd.f32 %v5804, %v5832
        %v5845 = vadd.f32 %v5805, %v5832
        %v5846 = vadd.f32 %v5806, %v5832
        %v5847 = vadd.f32 %v5807, %v5832
        %v5848 = vadd.f32 %v5808, %v5832
        %v5849 = vadd.f32 %v5809, %v5832
        %v5850 = vadd.f32 %v5810, %v5832
        %v5851 = vadd.f32 %v5811, %v5832
        %v5852 = vadd.f32 %v5812, %v5832
        %v5853 = vadd.f32 %v5813, %v5832
        %v5854 = vadd.f32 %v5814, %v5832
        %v5855 = vadd.f32 %v5815, %v5832
        %v5856 = vadd.f32 %v5816, %v5832
        %v5857 = vadd.f32 %v5817, %v5832
        %v5858 = vadd.f32 %v5818, %v5832
        %v5859 = vadd.f32 %v5819, %v5832
        %v5860 = vadd.f32 %v5820, %v5832
        %v5861 = vadd.f32 %v5821, %v5832
        %v5862 = vadd.f32 %v5822, %v5832
        %v5863 = vadd.f32 %v5823, %v5832
        %v5864 = vadd.f32 %v5824, %v5832
        %v5865 = vadd.f32 %v5825, %v5832
        %v5866 = vmax.f32 %v5834, 0.0
        %v5867 = vmax.f32 %v5835, 0.0
        %v5868 = vmax.f32 %v5836, 0.0
        %v5869 = vmax.f32 %v5837, 0.0
        %v5870 = vmax.f32 %v5838, 0.0
        %v5871 = vmax.f32 %v5839, 0.0
        %v5872 = vmax.f32 %v5840, 0.0
        %v5873 = vmax.f32 %v5841, 0.0
        %v5874 = vmax.f32 %v5842, 0.0
        %v5875 = vmax.f32 %v5843, 0.0
        %v5876 = vmax.f32 %v5844, 0.0
        %v5877 = vmax.f32 %v5845, 0.0
        %v5878 = vmax.f32 %v5846, 0.0
        %v5879 = vmax.f32 %v5847, 0.0
        %v5880 = vmax.f32 %v5848, 0.0
        %v5881 = vmax.f32 %v5849, 0.0
        %v5882 = vmax.f32 %v5850, 0.0
        %v5883 = vmax.f32 %v5851, 0.0
        %v5884 = vmax.f32 %v5852, 0.0
        %v5885 = vmax.f32 %v5853, 0.0
        %v5886 = vmax.f32 %v5854, 0.0
        %v5887 = vmax.f32 %v5855, 0.0
        %v5888 = vmax.f32 %v5856, 0.0
        %v5889 = vmax.f32 %v5857, 0.0
        %v5890 = vmax.f32 %v5858, 0.0
        %v5891 = vmax.f32 %v5859, 0.0
        %v5892 = vmax.f32 %v5860, 0.0
        %v5893 = vmax.f32 %v5861, 0.0
        %v5894 = vmax.f32 %v5862, 0.0
        %v5895 = vmax.f32 %v5863, 0.0
        %v5896 = vmax.f32 %v5864, 0.0
        %v5897 = vmax.f32 %v5865, 0.0
        %5930 = vrot.lane.b32.xlu0 %v2991, 32
        %v5931 = vpop.permute.xlu0 %5930
        %5932 = vrot.lane.b32.xlu0 %v2992, 32
        %v5933 = vpop.permute.xlu0 %5932
        %5934 = vrot.lane.b32.xlu0 %v2993, 32
        %v5935 = vpop.permute.xlu0 %5934
        %5936 = vrot.lane.b32.xlu0 %v2994, 32
        %v5937 = vpop.permute.xlu0 %5936
        %5938 = vrot.lane.b32.xlu0 %v2995, 32
        %v5939 = vpop.permute.xlu0 %5938
        %5940 = vrot.lane.b32.xlu0 %v2996, 32
        %v5941 = vpop.permute.xlu0 %5940
        %5942 = vrot.lane.b32.xlu0 %v2997, 32
        %v5943 = vpop.permute.xlu0 %5942
        %5944 = vrot.lane.b32.xlu0 %v2998, 32
        %v5945 = vpop.permute.xlu0 %5944
        %5946 = vrot.lane.b32.xlu0 %v2999, 32
        %v5947 = vpop.permute.xlu0 %5946
        %5948 = vrot.lane.b32.xlu0 %v3000, 32
        %v5949 = vpop.permute.xlu0 %5948
        %5950 = vrot.lane.b32.xlu0 %v3001, 32
        %v5951 = vpop.permute.xlu0 %5950
        %5952 = vrot.lane.b32.xlu0 %v3002, 32
        %v5953 = vpop.permute.xlu0 %5952
        %5954 = vrot.lane.b32.xlu0 %v3003, 32
        %v5955 = vpop.permute.xlu0 %5954
        %5956 = vrot.lane.b32.xlu0 %v3004, 32
        %v5957 = vpop.permute.xlu0 %5956
        %5958 = vrot.lane.b32.xlu0 %v3005, 32
        %v5959 = vpop.permute.xlu0 %5958
        %5960 = vrot.lane.b32.xlu0 %v3006, 32
        %v5961 = vpop.permute.xlu0 %5960
        %5962 = vrot.lane.b32.xlu0 %v3007, 32
        %v5963 = vpop.permute.xlu0 %5962
        %5964 = vrot.lane.b32.xlu0 %v3008, 32
        %v5965 = vpop.permute.xlu0 %5964
        %5966 = vrot.lane.b32.xlu0 %v3009, 32
        %v5967 = vpop.permute.xlu0 %5966
        %5968 = vrot.lane.b32.xlu0 %v3010, 32
        %v5969 = vpop.permute.xlu0 %5968
        %5970 = vrot.lane.b32.xlu0 %v3011, 32
        %v5971 = vpop.permute.xlu0 %5970
        %5972 = vrot.lane.b32.xlu0 %v3012, 32
        %v5973 = vpop.permute.xlu0 %5972
        %5974 = vrot.lane.b32.xlu0 %v3013, 32
        %v5975 = vpop.permute.xlu0 %5974
        %5976 = vrot.lane.b32.xlu0 %v3014, 32
        %v5977 = vpop.permute.xlu0 %5976
        %5978 = vrot.lane.b32.xlu0 %v3015, 32
        %v5979 = vpop.permute.xlu0 %5978
        %5980 = vrot.lane.b32.xlu0 %v3016, 32
        %v5981 = vpop.permute.xlu0 %5980
        %5982 = vrot.lane.b32.xlu0 %v3017, 32
        %v5983 = vpop.permute.xlu0 %5982
        %5984 = vrot.lane.b32.xlu0 %v3018, 32
        %v5985 = vpop.permute.xlu0 %5984
        %5986 = vrot.lane.b32.xlu0 %v3019, 32
        %v5987 = vpop.permute.xlu0 %5986
        %5988 = vrot.lane.b32.xlu0 %v3020, 32
        %v5989 = vpop.permute.xlu0 %5988
        %5990 = vrot.lane.b32.xlu0 %v3021, 32
        %v5991 = vpop.permute.xlu0 %5990
        %5992 = vrot.lane.b32.xlu0 %v3022, 32
        %v5993 = vpop.permute.xlu0 %5992
        %6058 = vrot.lane.b32.xlu0 %v4382, 64
        %v6059 = vpop.permute.xlu0 %6058
        %6060 = vrot.lane.b32.xlu0 %v4383, 64
        %v6061 = vpop.permute.xlu0 %6060
        %6062 = vrot.lane.b32.xlu0 %v4384, 64
        %v6063 = vpop.permute.xlu0 %6062
        %6064 = vrot.lane.b32.xlu0 %v4385, 64
        %v6065 = vpop.permute.xlu0 %6064
        %6066 = vrot.lane.b32.xlu0 %v4386, 64
        %v6067 = vpop.permute.xlu0 %6066
        %6068 = vrot.lane.b32.xlu0 %v4387, 64
        %v6069 = vpop.permute.xlu0 %6068
        %6070 = vrot.lane.b32.xlu0 %v4388, 64
        %v6071 = vpop.permute.xlu0 %6070
        %6072 = vrot.lane.b32.xlu0 %v4389, 64
        %v6073 = vpop.permute.xlu0 %6072
        %6074 = vrot.lane.b32.xlu0 %v4390, 64
        %v6075 = vpop.permute.xlu0 %6074
        %6076 = vrot.lane.b32.xlu0 %v4391, 64
        %v6077 = vpop.permute.xlu0 %6076
        %6078 = vrot.lane.b32.xlu0 %v4392, 64
        %v6079 = vpop.permute.xlu0 %6078
        %6080 = vrot.lane.b32.xlu0 %v4393, 64
        %v6081 = vpop.permute.xlu0 %6080
        %6082 = vrot.lane.b32.xlu0 %v4394, 64
        %v6083 = vpop.permute.xlu0 %6082
        %6084 = vrot.lane.b32.xlu0 %v4395, 64
        %v6085 = vpop.permute.xlu0 %6084
        %6086 = vrot.lane.b32.xlu0 %v4396, 64
        %v6087 = vpop.permute.xlu0 %6086
        %6088 = vrot.lane.b32.xlu0 %v4397, 64
        %v6089 = vpop.permute.xlu0 %6088
        %6090 = vrot.lane.b32.xlu0 %v4398, 64
        %v6091 = vpop.permute.xlu0 %6090
        %6092 = vrot.lane.b32.xlu0 %v4399, 64
        %v6093 = vpop.permute.xlu0 %6092
        %6094 = vrot.lane.b32.xlu0 %v4400, 64
        %v6095 = vpop.permute.xlu0 %6094
        %6096 = vrot.lane.b32.xlu0 %v4401, 64
        %v6097 = vpop.permute.xlu0 %6096
        %6098 = vrot.lane.b32.xlu0 %v4402, 64
        %v6099 = vpop.permute.xlu0 %6098
        %6100 = vrot.lane.b32.xlu0 %v4403, 64
        %v6101 = vpop.permute.xlu0 %6100
        %6102 = vrot.lane.b32.xlu0 %v4404, 64
        %v6103 = vpop.permute.xlu0 %6102
        %6104 = vrot.lane.b32.xlu0 %v4405, 64
        %v6105 = vpop.permute.xlu0 %6104
        %6106 = vrot.lane.b32.xlu0 %v4406, 64
        %v6107 = vpop.permute.xlu0 %6106
        %6108 = vrot.lane.b32.xlu0 %v4407, 64
        %v6109 = vpop.permute.xlu0 %6108
        %6110 = vrot.lane.b32.xlu0 %v4408, 64
        %v6111 = vpop.permute.xlu0 %6110
        %6112 = vrot.lane.b32.xlu0 %v4409, 64
        %v6113 = vpop.permute.xlu0 %6112
        %6114 = vrot.lane.b32.xlu0 %v4410, 64
        %v6115 = vpop.permute.xlu0 %6114
        %6116 = vrot.lane.b32.xlu0 %v4411, 64
        %v6117 = vpop.permute.xlu0 %6116
        %6118 = vrot.lane.b32.xlu0 %v4412, 64
        %v6119 = vpop.permute.xlu0 %6118
        %6120 = vrot.lane.b32.xlu0 %v4413, 64
        %v6121 = vpop.permute.xlu0 %6120
        %6186 = vrot.lane.b32.xlu0 %v5866, 96
        %v6187 = vpop.permute.xlu0 %6186
        %6188 = vrot.lane.b32.xlu0 %v5867, 96
        %v6189 = vpop.permute.xlu0 %6188
        %6190 = vrot.lane.b32.xlu0 %v5868, 96
        %v6191 = vpop.permute.xlu0 %6190
        %6192 = vrot.lane.b32.xlu0 %v5869, 96
        %v6193 = vpop.permute.xlu0 %6192
        %6194 = vrot.lane.b32.xlu0 %v5870, 96
        %v6195 = vpop.permute.xlu0 %6194
        %6196 = vrot.lane.b32.xlu0 %v5871, 96
        %v6197 = vpop.permute.xlu0 %6196
        %6198 = vrot.lane.b32.xlu0 %v5872, 96
        %v6199 = vpop.permute.xlu0 %6198
        %6200 = vrot.lane.b32.xlu0 %v5873, 96
        %v6201 = vpop.permute.xlu0 %6200
        %6202 = vrot.lane.b32.xlu0 %v5874, 96
        %v6203 = vpop.permute.xlu0 %6202
        %6204 = vrot.lane.b32.xlu0 %v5875, 96
        %v6205 = vpop.permute.xlu0 %6204
        %6206 = vrot.lane.b32.xlu0 %v5876, 96
        %v6207 = vpop.permute.xlu0 %6206
        %6208 = vrot.lane.b32.xlu0 %v5877, 96
        %v6209 = vpop.permute.xlu0 %6208
        %6210 = vrot.lane.b32.xlu0 %v5878, 96
        %v6211 = vpop.permute.xlu0 %6210
        %6212 = vrot.lane.b32.xlu0 %v5879, 96
        %v6213 = vpop.permute.xlu0 %6212
        %6214 = vrot.lane.b32.xlu0 %v5880, 96
        %v6215 = vpop.permute.xlu0 %6214
        %6216 = vrot.lane.b32.xlu0 %v5881, 96
        %v6217 = vpop.permute.xlu0 %6216
        %6218 = vrot.lane.b32.xlu0 %v5882, 96
        %v6219 = vpop.permute.xlu0 %6218
        %6220 = vrot.lane.b32.xlu0 %v5883, 96
        %v6221 = vpop.permute.xlu0 %6220
        %6222 = vrot.lane.b32.xlu0 %v5884, 96
        %v6223 = vpop.permute.xlu0 %6222
        %6224 = vrot.lane.b32.xlu0 %v5885, 96
        %v6225 = vpop.permute.xlu0 %6224
        %6226 = vrot.lane.b32.xlu0 %v5886, 96
        %v6227 = vpop.permute.xlu0 %6226
        %6228 = vrot.lane.b32.xlu0 %v5887, 96
        %v6229 = vpop.permute.xlu0 %6228
        %6230 = vrot.lane.b32.xlu0 %v5888, 96
        %v6231 = vpop.permute.xlu0 %6230
        %6232 = vrot.lane.b32.xlu0 %v5889, 96
        %v6233 = vpop.permute.xlu0 %6232
        %6234 = vrot.lane.b32.xlu0 %v5890, 96
        %v6235 = vpop.permute.xlu0 %6234
        %6236 = vrot.lane.b32.xlu0 %v5891, 96
        %v6237 = vpop.permute.xlu0 %6236
        %6238 = vrot.lane.b32.xlu0 %v5892, 96
        %v6239 = vpop.permute.xlu0 %6238
        %6240 = vrot.lane.b32.xlu0 %v5893, 96
        %v6241 = vpop.permute.xlu0 %6240
        %6242 = vrot.lane.b32.xlu0 %v5894, 96
        %v6243 = vpop.permute.xlu0 %6242
        %6244 = vrot.lane.b32.xlu0 %v5895, 96
        %v6245 = vpop.permute.xlu0 %6244
        %6246 = vrot.lane.b32.xlu0 %v5896, 96
        %v6247 = vpop.permute.xlu0 %6246
        %6248 = vrot.lane.b32.xlu0 %v5897, 96
        %v6249 = vpop.permute.xlu0 %6248
        %v6282 = vsel %vm959, %v1247, %v5931
        %v6283 = vsel %vm959, %v1248, %v5933
        %v6284 = vsel %vm959, %v1249, %v5935
        %v6285 = vsel %vm959, %v1250, %v5937
        %v6286 = vsel %vm959, %v1251, %v5939
        %v6287 = vsel %vm959, %v1252, %v5941
        %v6288 = vsel %vm959, %v1253, %v5943
        %v6289 = vsel %vm959, %v1254, %v5945
        %v6290 = vsel %vm959, %v1255, %v5947
        %v6291 = vsel %vm959, %v1256, %v5949
        %v6292 = vsel %vm959, %v1257, %v5951
        %v6293 = vsel %vm959, %v1258, %v5953
        %v6294 = vsel %vm959, %v1259, %v5955
        %v6295 = vsel %vm959, %v1260, %v5957
        %v6296 = vsel %vm959, %v1261, %v5959
        %v6297 = vsel %vm959, %v1262, %v5961
        %v6298 = vsel %vm959, %v1263, %v5963
        %v6299 = vsel %vm959, %v1264, %v5965
        %v6300 = vsel %vm959, %v1265, %v5967
        %v6301 = vsel %vm959, %v1266, %v5969
        %v6302 = vsel %vm959, %v1267, %v5971
        %v6303 = vsel %vm959, %v1268, %v5973
        %v6304 = vsel %vm959, %v1269, %v5975
        %v6305 = vsel %vm959, %v1270, %v5977
        %v6306 = vsel %vm959, %v1271, %v5979
        %v6307 = vsel %vm959, %v1272, %v5981
        %v6308 = vsel %vm959, %v1273, %v5983
        %v6309 = vsel %vm959, %v1274, %v5985
        %v6310 = vsel %vm959, %v1275, %v5987
        %v6311 = vsel %vm959, %v1276, %v5989
        %v6312 = vsel %vm959, %v1277, %v5991
        %v6313 = vsel %vm959, %v1278, %v5993
        %v6314 = vsel %vm2203, %v6282, %v6059
        %v6315 = vsel %vm2203, %v6283, %v6061
        %v6316 = vsel %vm2203, %v6284, %v6063
        %v6317 = vsel %vm2203, %v6285, %v6065
        %v6318 = vsel %vm2203, %v6286, %v6067
        %v6319 = vsel %vm2203, %v6287, %v6069
        %v6320 = vsel %vm2203, %v6288, %v6071
        %v6321 = vsel %vm2203, %v6289, %v6073
        %v6322 = vsel %vm2203, %v6290, %v6075
        %v6323 = vsel %vm2203, %v6291, %v6077
        %v6324 = vsel %vm2203, %v6292, %v6079
        %v6325 = vsel %vm2203, %v6293, %v6081
        %v6326 = vsel %vm2203, %v6294, %v6083
        %v6327 = vsel %vm2203, %v6295, %v6085
        %v6328 = vsel %vm2203, %v6296, %v6087
        %v6329 = vsel %vm2203, %v6297, %v6089
        %v6330 = vsel %vm2203, %v6298, %v6091
        %v6331 = vsel %vm2203, %v6299, %v6093
        %v6332 = vsel %vm2203, %v6300, %v6095
        %v6333 = vsel %vm2203, %v6301, %v6097
        %v6334 = vsel %vm2203, %v6302, %v6099
        %v6335 = vsel %vm2203, %v6303, %v6101
        %v6336 = vsel %vm2203, %v6304, %v6103
        %v6337 = vsel %vm2203, %v6305, %v6105
        %v6338 = vsel %vm2203, %v6306, %v6107
        %v6339 = vsel %vm2203, %v6307, %v6109
        %v6340 = vsel %vm2203, %v6308, %v6111
        %v6341 = vsel %vm2203, %v6309, %v6113
        %v6342 = vsel %vm2203, %v6310, %v6115
        %v6343 = vsel %vm2203, %v6311, %v6117
        %v6344 = vsel %vm2203, %v6312, %v6119
        %v6345 = vsel %vm2203, %v6313, %v6121
        %v6346 = vsel %vm2236, %v6314, %v6187
        %v6347 = vsel %vm2236, %v6315, %v6189
        %v6348 = vsel %vm2236, %v6316, %v6191
        %v6349 = vsel %vm2236, %v6317, %v6193
        %v6350 = vsel %vm2236, %v6318, %v6195
        %v6351 = vsel %vm2236, %v6319, %v6197
        %v6352 = vsel %vm2236, %v6320, %v6199
        %v6353 = vsel %vm2236, %v6321, %v6201
        %v6354 = vsel %vm2236, %v6322, %v6203
        %v6355 = vsel %vm2236, %v6323, %v6205
        %v6356 = vsel %vm2236, %v6324, %v6207
        %v6357 = vsel %vm2236, %v6325, %v6209
        %v6358 = vsel %vm2236, %v6326, %v6211
        %v6359 = vsel %vm2236, %v6327, %v6213
        %v6360 = vsel %vm2236, %v6328, %v6215
        %v6361 = vsel %vm2236, %v6329, %v6217
        %v6362 = vsel %vm2236, %v6330, %v6219
        %v6363 = vsel %vm2236, %v6331, %v6221
        %v6364 = vsel %vm2236, %v6332, %v6223
        %v6365 = vsel %vm2236, %v6333, %v6225
        %v6366 = vsel %vm2236, %v6334, %v6227
        %v6367 = vsel %vm2236, %v6335, %v6229
        %v6368 = vsel %vm2236, %v6336, %v6231
        %v6369 = vsel %vm2236, %v6337, %v6233
        %v6370 = vsel %vm2236, %v6338, %v6235
        %v6371 = vsel %vm2236, %v6339, %v6237
        %v6372 = vsel %vm2236, %v6340, %v6239
        %v6373 = vsel %vm2236, %v6341, %v6241
        %v6374 = vsel %vm2236, %v6342, %v6243
        %v6375 = vsel %vm2236, %v6343, %v6245
        %v6376 = vsel %vm2236, %v6344, %v6247
        %v6377 = vsel %vm2236, %v6345, %v6249
        %v6378 = vpack.c.bf16 %v6347, %v6346
        %v6379 = vpack.c.bf16 %v6349, %v6348
        %v6380 = vpack.c.bf16 %v6351, %v6350
        %v6381 = vpack.c.bf16 %v6353, %v6352
        %v6382 = vpack.c.bf16 %v6355, %v6354
        %v6383 = vpack.c.bf16 %v6357, %v6356
        %v6384 = vpack.c.bf16 %v6359, %v6358
        %v6385 = vpack.c.bf16 %v6361, %v6360
        %v6386 = vpack.c.bf16 %v6363, %v6362
        %v6387 = vpack.c.bf16 %v6365, %v6364
        %v6388 = vpack.c.bf16 %v6367, %v6366
        %v6389 = vpack.c.bf16 %v6369, %v6368
        %v6390 = vpack.c.bf16 %v6371, %v6370
        %v6391 = vpack.c.bf16 %v6373, %v6372
        %v6392 = vpack.c.bf16 %v6375, %v6374
        %v6393 = vpack.c.bf16 %v6377, %v6376
        %v6394 = vld [vmem:[#allocation11] sm:$0xf]
        %v6395 = vld [vmem:[#allocation11 + $0x4] sm:$0xf]
        %v6396 = vld [vmem:[#allocation11 + $0x8] sm:$0xf]
        %v6397 = vld [vmem:[#allocation11 + $0xc] sm:$0xf]
        %v6398 = vld [vmem:[#allocation11 + $0x10] sm:$0xf]
        %v6399 = vld [vmem:[#allocation11 + $0x14] sm:$0xf]
        %v6400 = vld [vmem:[#allocation11 + $0x18] sm:$0xf]
        %v6401 = vld [vmem:[#allocation11 + $0x1c] sm:$0xf]
        %v6402 = vld [vmem:[#allocation11 + $0x20] sm:$0xf]
        %v6403 = vld [vmem:[#allocation11 + $0x24] sm:$0xf]
        %v6404 = vld [vmem:[#allocation11 + $0x28] sm:$0xf]
        %v6405 = vld [vmem:[#allocation11 + $0x2c] sm:$0xf]
        %v6406 = vld [vmem:[#allocation11 + $0x30] sm:$0xf]
        %v6407 = vld [vmem:[#allocation11 + $0x34] sm:$0xf]
        %v6408 = vld [vmem:[#allocation11 + $0x38] sm:$0xf]
        %v6409 = vld [vmem:[#allocation11 + $0x3c] sm:$0xf]
        %v6410 = vld [vmem:[%s384] sm:$0x1]
        %v6412 = vlaneseq
        %v6413 = vshrl.u32 %v6412, 7
        %v6414 = vsub.s32 0, %v6413
        %v6415 = vrot.slane %v6410, %v6414
        %v6433 = vunpack.c.l.b16 %v6394
        %v6434 = vunpack.c.l.b16 %v6395
        %v6435 = vunpack.c.l.b16 %v6396
        %v6436 = vunpack.c.l.b16 %v6397
        %v6437 = vunpack.c.l.b16 %v6398
        %v6438 = vunpack.c.l.b16 %v6399
        %v6439 = vunpack.c.l.b16 %v6400
        %v6440 = vunpack.c.l.b16 %v6401
        %v6441 = vunpack.c.l.b16 %v6402
        %v6442 = vunpack.c.l.b16 %v6403
        %v6443 = vunpack.c.l.b16 %v6404
        %v6444 = vunpack.c.l.b16 %v6405
        %v6445 = vunpack.c.l.b16 %v6406
        %v6446 = vunpack.c.l.b16 %v6407
        %v6447 = vunpack.c.l.b16 %v6408
        %v6448 = vunpack.c.l.b16 %v6409
        %v6449 = vpack.c.b16 %v6434, %v6433
        %v6450 = vpack.c.b16 %v6436, %v6435
        %v6451 = vpack.c.b16 %v6438, %v6437
        %v6452 = vpack.c.b16 %v6440, %v6439
        %v6453 = vpack.c.b16 %v6442, %v6441
        %v6454 = vpack.c.b16 %v6444, %v6443
        %v6455 = vpack.c.b16 %v6446, %v6445
        %v6456 = vpack.c.b16 %v6448, %v6447
        %6465 = vmatprep.subr.bf16.mxu0 0
        %6466 = vmatpush1.bf16.msra.mxu0 %v6449
        %6467 = vmatprep.subr.bf16.mxu0 0
        %6468 = vmatpush1.bf16.msra.mxu0 %v6450
        %6469 = vmatprep.subr.bf16.mxu0 0
        %6470 = vmatpush1.bf16.msra.mxu0 %v6451
        %6471 = vmatprep.subr.bf16.mxu0 0
        %6472 = vmatpush1.bf16.msra.mxu0 %v6452
        %6473 = vmatprep.subr.bf16.mxu0 0
        %6474 = vmatpush1.bf16.msra.mxu0 %v6453
        %6475 = vmatprep.subr.bf16.mxu0 0
        %6476 = vmatpush1.bf16.msra.mxu0 %v6454
        %6477 = vmatprep.subr.bf16.mxu0 0
        %6478 = vmatpush1.bf16.msra.mxu0 %v6455
        %6479 = vmatprep.subr.bf16.mxu0 0
        %6480 = vmatpush1.bf16.msra.mxu0 %v6456
        %6481 = vmatprep.subr.bf16.mxu0 0
        %6482 = vmatpush1.bf16.msra.mxu0 0
        %6483 = vmatprep.subr.bf16.mxu0 0
        %6484 = vmatpush1.bf16.msra.mxu0 0
        %6485 = vmatprep.subr.bf16.mxu0 0
        %6486 = vmatpush1.bf16.msra.mxu0 0
        %6487 = vmatprep.subr.bf16.mxu0 0
        %6488 = vmatpush1.bf16.msra.mxu0 0
        %6489 = vmatprep.subr.bf16.mxu0 0
        %6490 = vmatpush1.bf16.msra.mxu0 0
        %6491 = vmatprep.subr.bf16.mxu0 0
        %6492 = vmatpush1.bf16.msra.mxu0 0
        %6493 = vmatprep.subr.bf16.mxu0 0
        %6494 = vmatpush1.bf16.msra.mxu0 0
        %6495 = vmatprep.subr.bf16.mxu0 0
        %6496 = vmatpush1.bf16.msra.mxu0 0
        %6497 = vmatprep.mubr.bf16.mxu0 0
        %6498 = vmatmul.mubr.bf16.gmra.mrb[0].mxu0 %v6378
        %v6499 = vpop.f32.mrb[0].mxu0
        %v6500 = vadd.f32 %v6415, %v6499
        %v6501 = vpop.f32.mrb[0].mxu0
        %v6502 = vpop.f32.mrb[0].mxu0
        %v6503 = vadd.f32 %v6415, %v6502
        %v6504 = vpop.f32.mrb[0].mxu0
        %6505 = vmatprep.mubr.bf16.mxu0 0
        %6506 = vmatmul.mubr.bf16.gmra.mrb[0].mxu0 %v6379
        %v6507 = vpop.f32.mrb[0].mxu0
        %v6508 = vadd.f32 %v6415, %v6507
        %v6509 = vpop.f32.mrb[0].mxu0
        %v6510 = vpop.f32.mrb[0].mxu0
        %v6511 = vadd.f32 %v6415, %v6510
        %v6512 = vpop.f32.mrb[0].mxu0
        %6513 = vmatprep.mubr.bf16.mxu0 0
        %6514 = vmatmul.mubr.bf16.gmra.mrb[0].mxu0 %v6380
        %v6515 = vpop.f32.mrb[0].mxu0
        %v6516 = vadd.f32 %v6415, %v6515
        %v6517 = vpop.f32.mrb[0].mxu0
        %v6518 = vpop.f32.mrb[0].mxu0
        %v6519 = vadd.f32 %v6415, %v6518
        %v6520 = vpop.f32.mrb[0].mxu0
        %6521 = vmatprep.mubr.bf16.mxu0 0
        %6522 = vmatmul.mubr.bf16.gmra.mrb[0].mxu0 %v6381
        %v6523 = vpop.f32.mrb[0].mxu0
        %v6524 = vadd.f32 %v6415, %v6523
        %v6525 = vpop.f32.mrb[0].mxu0
        %v6526 = vpop.f32.mrb[0].mxu0
        %v6527 = vadd.f32 %v6415, %v6526
        %v6528 = vpop.f32.mrb[0].mxu0
        %6529 = vmatprep.mubr.bf16.mxu0 0
        %6530 = vmatmul.mubr.bf16.gmra.mrb[0].mxu0 %v6382
        %v6531 = vpop.f32.mrb[0].mxu0
        %v6532 = vadd.f32 %v6415, %v6531
        %v6533 = vpop.f32.mrb[0].mxu0
        %v6534 = vpop.f32.mrb[0].mxu0
        %v6535 = vadd.f32 %v6415, %v6534
        %v6536 = vpop.f32.mrb[0].mxu0
        %6537 = vmatprep.mubr.bf16.mxu0 0
        %6538 = vmatmul.mubr.bf16.gmra.mrb[0].mxu0 %v6383
        %v6539 = vpop.f32.mrb[0].mxu0
        %v6540 = vadd.f32 %v6415, %v6539
        %v6541 = vpop.f32.mrb[0].mxu0
        %v6542 = vpop.f32.mrb[0].mxu0
        %v6543 = vadd.f32 %v6415, %v6542
        %v6544 = vpop.f32.mrb[0].mxu0
        %6545 = vmatprep.mubr.bf16.mxu0 0
        %6546 = vmatmul.mubr.bf16.gmra.mrb[0].mxu0 %v6384
        %v6547 = vpop.f32.mrb[0].mxu0
        %v6548 = vadd.f32 %v6415, %v6547
        %v6549 = vpop.f32.mrb[0].mxu0
        %v6550 = vpop.f32.mrb[0].mxu0
        %v6551 = vadd.f32 %v6415, %v6550
        %v6552 = vpop.f32.mrb[0].mxu0
        %6553 = vmatprep.mubr.bf16.mxu0 0
        %6554 = vmatmul.mubr.bf16.gmra.mrb[0].mxu0 %v6385
        %v6555 = vpop.f32.mrb[0].mxu0
        %v6556 = vadd.f32 %v6415, %v6555
        %v6557 = vpop.f32.mrb[0].mxu0
        %v6558 = vpop.f32.mrb[0].mxu0
        %v6559 = vadd.f32 %v6415, %v6558
        %v6560 = vpop.f32.mrb[0].mxu0
        %6561 = vmatprep.mubr.bf16.mxu0 0
        %6562 = vmatmul.mubr.bf16.gmra.mrb[0].mxu0 %v6386
        %v6563 = vpop.f32.mrb[0].mxu0
        %v6564 = vadd.f32 %v6415, %v6563
        %v6565 = vpop.f32.mrb[0].mxu0
        %v6566 = vpop.f32.mrb[0].mxu0
        %v6567 = vadd.f32 %v6415, %v6566
        %v6568 = vpop.f32.mrb[0].mxu0
        %6569 = vmatprep.mubr.bf16.mxu0 0
        %6570 = vmatmul.mubr.bf16.gmra.mrb[0].mxu0 %v6387
        %v6571 = vpop.f32.mrb[0].mxu0
        %v6572 = vadd.f32 %v6415, %v6571
        %v6573 = vpop.f32.mrb[0].mxu0
        %v6574 = vpop.f32.mrb[0].mxu0
        %v6575 = vadd.f32 %v6415, %v6574
        %v6576 = vpop.f32.mrb[0].mxu0
        %6577 = vmatprep.mubr.bf16.mxu0 0
        %6578 = vmatmul.mubr.bf16.gmra.mrb[0].mxu0 %v6388
        %v6579 = vpop.f32.mrb[0].mxu0
        %v6580 = vadd.f32 %v6415, %v6579
        %v6581 = vpop.f32.mrb[0].mxu0
        %v6582 = vpop.f32.mrb[0].mxu0
        %v6583 = vadd.f32 %v6415, %v6582
        %v6584 = vpop.f32.mrb[0].mxu0
        %6585 = vmatprep.mubr.bf16.mxu0 0
        %6586 = vmatmul.mubr.bf16.gmra.mrb[0].mxu0 %v6389
        %v6587 = vpop.f32.mrb[0].mxu0
        %v6588 = vadd.f32 %v6415, %v6587
        %v6589 = vpop.f32.mrb[0].mxu0
        %v6590 = vpop.f32.mrb[0].mxu0
        %v6591 = vadd.f32 %v6415, %v6590
        %v6592 = vpop.f32.mrb[0].mxu0
        %6593 = vmatprep.mubr.bf16.mxu0 0
        %6594 = vmatmul.mubr.bf16.gmra.mrb[0].mxu0 %v6390
        %v6595 = vpop.f32.mrb[0].mxu0
        %v6596 = vadd.f32 %v6415, %v6595
        %v6597 = vpop.f32.mrb[0].mxu0
        %v6598 = vpop.f32.mrb[0].mxu0
        %v6599 = vadd.f32 %v6415, %v6598
        %v6600 = vpop.f32.mrb[0].mxu0
        %6601 = vmatprep.mubr.bf16.mxu0 0
        %6602 = vmatmul.mubr.bf16.gmra.mrb[0].mxu0 %v6391
        %v6603 = vpop.f32.mrb[0].mxu0
        %v6604 = vadd.f32 %v6415, %v6603
        %v6605 = vpop.f32.mrb[0].mxu0
        %v6606 = vpop.f32.mrb[0].mxu0
        %v6607 = vadd.f32 %v6415, %v6606
        %v6608 = vpop.f32.mrb[0].mxu0
        %6609 = vmatprep.mubr.bf16.mxu0 0
        %6610 = vmatmul.mubr.bf16.gmra.mrb[0].mxu0 %v6392
        %v6611 = vpop.f32.mrb[0].mxu0
        %v6612 = vadd.f32 %v6415, %v6611
        %v6613 = vpop.f32.mrb[0].mxu0
        %v6614 = vpop.f32.mrb[0].mxu0
        %v6615 = vadd.f32 %v6415, %v6614
        %v6616 = vpop.f32.mrb[0].mxu0
        %6617 = vmatprep.mubr.bf16.mxu0 0
        %6618 = vmatmul.mubr.bf16.gmra.mrb[0].mxu0 %v6393
        %v6619 = vpop.f32.mrb[0].mxu0
        %v6620 = vadd.f32 %v6415, %v6619
        %v6621 = vpop.f32.mrb[0].mxu0
        %v6622 = vpop.f32.mrb[0].mxu0
        %v6623 = vadd.f32 %v6415, %v6622
        %v6624 = vpop.f32.mrb[0].mxu0
        %6625 = vdwg.mxu0
        %6626 = vst.msk [vmem:[%s418] sm:$0xff] %vm959, %v6500
        %6627 = vst.msk [vmem:[%s418 + $0x8] sm:$0xff] %vm959, %v6503
        %6628 = vst.msk [vmem:[%s418 + $0x10] sm:$0xff] %vm959, %v6508
        %6629 = vst.msk [vmem:[%s418 + $0x18] sm:$0xff] %vm959, %v6511
        %6630 = vst.msk [vmem:[%s418 + $0x20] sm:$0xff] %vm959, %v6516
        %6631 = vst.msk [vmem:[%s418 + $0x28] sm:$0xff] %vm959, %v6519
        %6632 = vst.msk [vmem:[%s418 + $0x30] sm:$0xff] %vm959, %v6524
        %6633 = vst.msk [vmem:[%s418 + $0x38] sm:$0xff] %vm959, %v6527
        %6634 = vst.msk [vmem:[%s418 + $0x40] sm:$0xff] %vm959, %v6532
        %6635 = vst.msk [vmem:[%s418 + $0x48] sm:$0xff] %vm959, %v6535
        %6636 = vst.msk [vmem:[%s418 + $0x50] sm:$0xff] %vm959, %v6540
        %6637 = vst.msk [vmem:[%s418 + $0x58] sm:$0xff] %vm959, %v6543
        %6638 = vst.msk [vmem:[%s418 + $0x60] sm:$0xff] %vm959, %v6548
        %6639 = vst.msk [vmem:[%s418 + $0x68] sm:$0xff] %vm959, %v6551
        %6640 = vst.msk [vmem:[%s418 + $0x70] sm:$0xff] %vm959, %v6556
        %6641 = vst.msk [vmem:[%s418 + $0x78] sm:$0xff] %vm959, %v6559
        %6642 = vst.msk [vmem:[%s418 + $0x80] sm:$0xff] %vm959, %v6564
        %6643 = vst.msk [vmem:[%s418 + $0x88] sm:$0xff] %vm959, %v6567
        %6644 = vst.msk [vmem:[%s418 + $0x90] sm:$0xff] %vm959, %v6572
        %6645 = vst.msk [vmem:[%s418 + $0x98] sm:$0xff] %vm959, %v6575
        %6646 = vst.msk [vmem:[%s418 + $0xa0] sm:$0xff] %vm959, %v6580
        %6647 = vst.msk [vmem:[%s418 + $0xa8] sm:$0xff] %vm959, %v6583
        %6648 = vst.msk [vmem:[%s418 + $0xb0] sm:$0xff] %vm959, %v6588
        %6649 = vst.msk [vmem:[%s418 + $0xb8] sm:$0xff] %vm959, %v6591
        %6650 = vst.msk [vmem:[%s418 + $0xc0] sm:$0xff] %vm959, %v6596
        %6651 = vst.msk [vmem:[%s418 + $0xc8] sm:$0xff] %vm959, %v6599
        %6652 = vst.msk [vmem:[%s418 + $0xd0] sm:$0xff] %vm959, %v6604
        %6653 = vst.msk [vmem:[%s418 + $0xd8] sm:$0xff] %vm959, %v6607
        %6654 = vst.msk [vmem:[%s418 + $0xe0] sm:$0xff] %vm959, %v6612
        %6655 = vst.msk [vmem:[%s418 + $0xe8] sm:$0xff] %vm959, %v6615
        %6656 = vst.msk [vmem:[%s418 + $0xf0] sm:$0xff] %vm959, %v6620
        %6657 = vst.msk [vmem:[%s418 + $0xf8] sm:$0xff] %vm959, %v6623
        %s6658 = sand.u32 %s208, 1
        %s6659 = scalar_lea.sflag [#allocation4], %s6658
        %s6660 = sand.u32 %s208, 1
        %s6661 = smul.addr %s6660, 256
        %s6662 = scalar_lea.vmem [#allocation14], %s6661
        // Predicated region
        $region77: #{tpu_custom_call.1} parent=47 // pred_check
          %p6663 = pneg %p218
        $region78: #{tpu_custom_call.1} parent=47 // pred_check_branch
          %6665 = sbr.rel (%p6663) target = $region80
        $region79: #{tpu_custom_call.1} parent=47 // pred_region
          %s6667 = ssub.s32 4096, 4096
          %6668 = vsyncadd %s6659, %s6667
          %s6669 = smul.addr %s32, 32
          %s6670 = smul.addr %s31, 32
          %s6671 = sadd.s32 %s6669, %s6670
          %s6672 = smul.addr %s6671, 128
          %s6673 = scalar_lea.hbm %s7, %s6672
          %s6674 = sshll.u32 %s6662, 4
          %s6675 = int_to_ptr.vmem [resolvable:$true] %s6674
          %6680 = dma.vmem_to_hbm [thread:$0]  %s6675, 4096, %s6673, %s6659, 128, 128, 8
        $region80: #{tpu_custom_call.1} parent=47 // pred_fallthru
          _
      $region48: #{tpu_custom_call.1} parent=5 // pred_fallthru
        _
      %p6681 = scmp.le.s32.totalorder 2, %s22
      // Predicated region
      $region81: #{tpu_custom_call.1} parent=5 // pred_check
        %p6682 = pneg %p6681
      $region82: #{tpu_custom_call.1} parent=5 // pred_check_branch
        %6684 = sbr.rel (%p6682) target = $region84
      $region83: #{tpu_custom_call.1} parent=5 // pred_region
        %s6685 = ssub.s32 %s22, 2
        // Predicated region
        $region85: #{tpu_custom_call.1} parent=83 // pred_check
          %p6686 = pneg %p224
        $region86: #{tpu_custom_call.1} parent=83 // pred_check_branch
          %6688 = sbr.rel (%p6686) target = $region88
        $region87: #{tpu_custom_call.1} parent=83 // pred_region
          %s6689 = sand.u32 %s209, 1
          %s6690 = scalar_lea.sflag [#allocation4], %s6689
          %s6691 = sand.u32 %s209, 1
          %s6692 = smul.addr %s6691, 256
          %s6693 = scalar_lea.vmem [#allocation14], %s6692
          %6694 = dma.done %s6690, 4096
        $region88: #{tpu_custom_call.1} parent=83 // pred_fallthru
          _
      $region84: #{tpu_custom_call.1} parent=5 // pred_fallthru
        _
    $region6: #{tpu_custom_call.1} parent=1 // loop_footer
      %s26 = sadd.s32 1, %s22
    $region7: #{tpu_custom_call.1} parent=1 // loop_footer_branch
      %21 = sbr.rel target = $region3
    $region8: #{tpu_custom_call.1} parent=1 // loop_exit
      _
    %6695 = vsyncpa [#allocation3], 1
    %s6696 = scalar_lea.sflag [#allocation3], 1
    %6697 = vsyncpa %s6696, 1
    %6698 = vsyncpa [#allocation6], 1
    %6699 = vsyncpa [#allocation9], 1
    %6700 = vsyncpa [#allocation12], 1
    %6701 = vsyncpa [#allocation4], 1
    %s6702 = scalar_lea.sflag [#allocation4], 1
    %6703 = vsyncpa %s6702, 1

</llo_original>
